<compile_context>
chip_gen: v7x
topology: tpu7x:2x2x1
jax: 0.10.0
libtpu: 0.0.40
codegen_flags: <defaults>
</compile_context>

<pallas_src>
import jax
import jax.numpy as jnp
from jax.experimental import pallas as pl
from jax.experimental.pallas import tpu as pltpu

# ----------------------------- model / batching sizes -----------------------------
NODE_FEAT = 8
EDGE_FEAT = 4
HIDDEN = 32
HEADS = 4
TASK_OUT = 10
CYC_HID = HIDDEN // 2              # 16
HH = HEADS * HIDDEN                # 128

N_PER_GRAPH = 16
GRAPHS_PER_BATCH = 8
NUM_BATCHES = 2
N = N_PER_GRAPH * GRAPHS_PER_BATCH # 128 nodes per attention block (MXU-sized)

OUT_PAD = 128                      # lane-dense output width

# ----------------------------- packed f32 parameter slab --------------------------
ROW_WN = 0          # [ROW_WN : +NODE_FEAT, :HIDDEN]   norm_linear W
ROW_BN = 8          # norm_linear bias
ROW_B1 = 9          # GAT layer-1 bias (128 wide, concat of heads)
ROW_B2 = 10         # GAT layer-2 bias
ROW_WT = 16         # task head W (HIDDEN rows, padded to 128 lanes)
ROW_BT = 48         # task head bias
ROW_WC1 = 56        # cycle head W1 (HIDDEN rows, :CYC_HID lanes)
ROW_BC1 = 88        # cycle head b1
ROW_WC2 = 96        # cycle head W2 (CYC_HID rows, col 0)
ROW_BC2 = 112       # cycle head b2
P2D_ROWS = 120

# ----------------------------- packed bf16 GAT weight slabs -----------------------
W1_ROWS = 40                       # rows [0:32] projection, rows [32:36] src folds
W1_COLS = HH + HEADS               # 132: [0:128] per-head features, [128:132] dst folds
W2_ROWS = HH + 8                   # rows [0:128] projection(+dst fold), row 128 src fold
W2_COLS = 128                      # cols [0:32] features, col 32 dst fold, rest zero


# ---------------------------------------------------------------------------
# Kernel: one graph-batch (N=128 nodes, 8 graphs) per grid step.
# ---------------------------------------------------------------------------
def process_gnn_kernel(x_ref, ae1_ref, ae2_ref, pool_ref, p2d_ref, wb1_ref, wb2_ref,
                       task_ref, cyc_ref):
    f32 = jnp.float32
    bf16 = jnp.bfloat16

    x = x_ref[...]                                   # (N, NODE_FEAT) f32
    p2d = p2d_ref[...]                               # (P2D_ROWS, 128) f32
    wb1 = wb1_ref[...]                               # (40, 132) bf16

    # ---- node L2-norm + norm_linear (matches torch: x / (||x|| + 1e-6)) -------------
    nrm = jnp.sqrt(jnp.sum(x * x, axis=1, keepdims=True)) + 1e-6
    wn = p2d[ROW_WN:ROW_WN + NODE_FEAT, :HIDDEN]
    bn = p2d[ROW_BN:ROW_BN + 1, :HIDDEN]
    h0 = jnp.dot(x / nrm, wn, preferred_element_type=f32) + bn       # (N, HIDDEN)
    h0b = h0.astype(bf16)

    # ---- GAT layer 1: one lane-dense projection, per-head softmax tiles -------------
    # proj1 cols: [0:128] per-head features (head-major), [128:132] dst-attention folds
    proj1 = jnp.dot(h0b, wb1[:HIDDEN, :], preferred_element_type=f32)  # (N, 132)
    xp1 = proj1[:, :HH].astype(bf16)                                    # (N, 128)
    a_dst1 = proj1[:, HH:HH + HEADS]                                    # (N, 4)
    # src term as a (4, N) row block via one M=4 NT matmul (no XLU transpose)
    w1src = wb1[HIDDEN:HIDDEN + HEADS, :HIDDEN]                         # (4, 32) bf16
    a_src1 = jnp.einsum('hf,nf->hn', w1src, h0b,
                        preferred_element_type=f32)                     # (4, N)

    h1_parts = []
    for h in range(HEADS):                           # static 4-way unroll
        logits = (a_dst1[:, h:h + 1] + a_src1[h:h + 1, :]
                  + ae1_ref[h].astype(f32))          # (N, N); non-edges ~ -1e9
        logits = jnp.maximum(logits, 0.2 * logits)   # LeakyReLU(0.2)
        m = jnp.max(logits, axis=-1, keepdims=True)
        e = jnp.exp(logits - m)                      # masked entries underflow to 0
        attn = e * pl.reciprocal(jnp.sum(e, axis=-1, keepdims=True), approx=True)
        h1_parts.append(jnp.dot(attn.astype(bf16),
                                xp1[:, h * HIDDEN:(h + 1) * HIDDEN],
                                preferred_element_type=f32))            # (N, 32)
    b1 = p2d[ROW_B1:ROW_B1 + 1, :HH]
    h1 = jnp.maximum(jnp.concatenate(h1_parts, axis=-1) + b1, 0.0)      # (N, 128)
    h1b = h1.astype(bf16)

    # ---- GAT layer 2: single head, one K=128 contraction -----------------------------
    wb2 = wb2_ref[...]                               # (136, 128) bf16
    proj2 = jnp.dot(h1b, wb2[:HH, :], preferred_element_type=f32)       # (N, 128)
    xp2 = proj2[:, :HIDDEN].astype(bf16)             # (N, 32)
    a_dst2 = proj2[:, HIDDEN:HIDDEN + 1]             # (N, 1)
    w2src = wb2[HH:HH + 1, :]                        # (1, 128) bf16
    a_src2 = jnp.einsum('of,nf->on', w2src, h1b,
                        preferred_element_type=f32)  # (1, N)

    logits2 = a_dst2 + a_src2 + ae2_ref[...].astype(f32)                # (N, N)
    logits2 = jnp.maximum(logits2, 0.2 * logits2)
    m2 = jnp.max(logits2, axis=-1, keepdims=True)
    e2 = jnp.exp(logits2 - m2)
    attn2 = e2 * pl.reciprocal(jnp.sum(e2, axis=-1, keepdims=True), approx=True)
    b2 = p2d[ROW_B2:ROW_B2 + 1, :HIDDEN]
    h2 = jnp.maximum(jnp.dot(attn2.astype(bf16), xp2,
                             preferred_element_type=f32) + b2, 0.0)     # (N, HIDDEN)

    # ---- task head (lane-dense padded output; cols >= 10 are zero) -------------------
    wt = p2d[ROW_WT:ROW_WT + HIDDEN, :]
    bt = p2d[ROW_BT:ROW_BT + 1, :]
    task_ref[...] = jnp.dot(h2, wt, preferred_element_type=f32) + bt

    # ---- global mean pool + cycle-time head -------------------------------------------
    pool = pool_ref[...]                             # (G, N) averaging matrix
    gemb = jnp.dot(pool, h2, preferred_element_type=f32)                # (G, HIDDEN)
    wc1 = p2d[ROW_WC1:ROW_WC1 + HIDDEN, :CYC_HID]
    bc1 = p2d[ROW_BC1:ROW_BC1 + 1, :CYC_HID]
    c = jnp.maximum(jnp.dot(gemb, wc1, preferred_element_type=f32) + bc1, 0.0)
    wc2 = p2d[ROW_WC2:ROW_WC2 + CYC_HID, :]
    bc2 = p2d[ROW_BC2:ROW_BC2 + 1, :]
    cyc_ref[...] = jnp.dot(c, wc2, preferred_element_type=f32) + bc2


# ---------------------------------------------------------------------------
# Glue: parameters, weight folding / packing, dense graph construction (plain JAX).
# ---------------------------------------------------------------------------
def init_params(key):
    ks = jax.random.split(key, 20)
    s = 0.2
    p = {}
    p['wn'] = jax.random.normal(ks[0], (NODE_FEAT, HIDDEN)) * s
    p['bn'] = jax.random.normal(ks[1], (1, HIDDEN)) * s
    p['w1'] = jax.random.normal(ks[2], (HIDDEN, HH)) * s
    p['att_src1'] = jax.random.normal(ks[3], (HEADS, HIDDEN)) * s
    p['att_dst1'] = jax.random.normal(ks[4], (HEADS, HIDDEN)) * s
    p['att_edge1'] = jax.random.normal(ks[5], (HEADS, HIDDEN)) * s
    p['w_edge1'] = jax.random.normal(ks[6], (EDGE_FEAT, HH)) * s
    p['b1'] = jax.random.normal(ks[7], (1, HH)) * s
    p['w2'] = jax.random.normal(ks[8], (HH, HIDDEN)) * s
    p['att_src2'] = jax.random.normal(ks[9], (1, HIDDEN)) * s
    p['att_dst2'] = jax.random.normal(ks[10], (1, HIDDEN)) * s
    p['att_edge2'] = jax.random.normal(ks[11], (1, HIDDEN)) * s
    p['w_edge2'] = jax.random.normal(ks[12], (EDGE_FEAT, HIDDEN)) * s
    p['b2'] = jax.random.normal(ks[13], (1, HIDDEN)) * s
    p['wt'] = jax.random.normal(ks[14], (HIDDEN, TASK_OUT)) * s
    p['bt'] = jax.random.normal(ks[15], (1, TASK_OUT)) * s
    p['wc1'] = jax.random.normal(ks[16], (HIDDEN, CYC_HID)) * s
    p['bc1'] = jax.random.normal(ks[17], (1, CYC_HID)) * s
    p['wc2'] = jax.random.normal(ks[18], (CYC_HID, 1)) * s
    p['bc2'] = jax.random.normal(ks[19], (1, 1)) * s
    return p


def prepare_params(p):
    """Fold att_src/att_dst into the linear weights; pack into 1 f32 + 2 bf16 slabs."""
    f32 = jnp.float32

    # ---- f32 slab: norm linear, biases, task head, cycle head -----------------------
    p2d = jnp.zeros((P2D_ROWS, OUT_PAD), f32)
    p2d = p2d.at[ROW_WN:ROW_WN + NODE_FEAT, :HIDDEN].set(p['wn'])
    p2d = p2d.at[ROW_BN, :HIDDEN].set(p['bn'][0])
    p2d = p2d.at[ROW_B1, :HH].set(p['b1'][0])
    p2d = p2d.at[ROW_B2, :HIDDEN].set(p['b2'][0])
    p2d = p2d.at[ROW_WT:ROW_WT + HIDDEN, :TASK_OUT].set(p['wt'])
    p2d = p2d.at[ROW_BT, :TASK_OUT].set(p['bt'][0])
    p2d = p2d.at[ROW_WC1:ROW_WC1 + HIDDEN, :CYC_HID].set(p['wc1'])
    p2d = p2d.at[ROW_BC1, :CYC_HID].set(p['bc1'][0])
    p2d = p2d.at[ROW_WC2:ROW_WC2 + CYC_HID, :1].set(p['wc2'])
    p2d = p2d.at[ROW_BC2, :1].set(p['bc2'][0])

    # ---- layer-1 bf16 slab: [features | dst folds] as columns, src folds as rows -----
    w1h = p['w1'].reshape(HIDDEN, HEADS, HIDDEN)                 # [f, h, c]
    dst_fold1 = jnp.einsum('fhc,hc->fh', w1h, p['att_dst1'])     # (F, H)
    src_fold1 = jnp.einsum('fhc,hc->hf', w1h, p['att_src1'])     # (H, F)
    wb1 = jnp.zeros((W1_ROWS, W1_COLS), f32)
    wb1 = wb1.at[:HIDDEN, :HH].set(p['w1'])
    wb1 = wb1.at[:HIDDEN, HH:HH + HEADS].set(dst_fold1)
    wb1 = wb1.at[HIDDEN:HIDDEN + HEADS, :HIDDEN].set(src_fold1)
    wb1 = wb1.astype(jnp.bfloat16)

    # ---- layer-2 bf16 slab: K=128 projection (+dst fold col), src fold row -----------
    dst_fold2 = p['w2'] @ p['att_dst2'][0]                       # (128,)
    src_fold2 = p['w2'] @ p['att_src2'][0]                       # (128,)
    wb2 = jnp.zeros((W2_ROWS, W2_COLS), f32)
    wb2 = wb2.at[:HH, :HIDDEN].set(p['w2'])
    wb2 = wb2.at[:HH, HIDDEN].set(dst_fold2)
    wb2 = wb2.at[HH, :HH].set(src_fold2)
    wb2 = wb2.astype(jnp.bfloat16)
    return p2d, wb1, wb2


def process_gnn_forward(x_b, edge_index_local, edge_attr_b, params):
    """x_b: (B, N, F). edge_index_local: (2, E) node ids local to one graph-batch
    (same topology every batch). edge_attr_b: (B, E, EDGE_FEAT)."""
    B = x_b.shape[0]
    p2d, wb1, wb2 = prepare_params(params)

    # Fold lin_edge with att_edge (parameter-only): (EDGE_FEAT, HEADS+1)
    w_ea1 = jnp.einsum('dhc,hc->dh',
                       params['w_edge1'].reshape(EDGE_FEAT, HEADS, HIDDEN),
                       params['att_edge1'])
    w_ea2 = jnp.einsum('dm,m->d', params['w_edge2'], params['att_edge2'][0])
    w_ea = jnp.concatenate([w_ea1, w_ea2[:, None]], axis=1)

    src, dst = edge_index_local[0], edge_index_local[1]
    eye = jnp.arange(N)
    mask = jnp.zeros((N, N), jnp.float32).at[dst, src].set(1.0)
    mask = mask.at[eye, eye].set(1.0)                  # add_self_loops
    neg_bias = (mask - 1.0) * 1e9                      # 0 on edges, -1e9 elsewhere

    def densify(ea):                                   # (E, ED) -> (HEADS+1, N, N)
        # self-loop edge attr = mean of incoming edge attrs (PyG fill_value='mean')
        loop_sum = jnp.zeros((N, EDGE_FEAT), jnp.float32).at[dst].add(ea)
        loop_cnt = jnp.zeros((N,), jnp.float32).at[dst].add(1.0)
        loop_attr = loop_sum / jnp.maximum(loop_cnt, 1.0)[:, None]
        dense = jnp.zeros((N, N, EDGE_FEAT), jnp.float32).at[dst, src].set(ea)
        dense = dense.at[eye, eye].set(loop_attr)
        ae = jnp.einsum('ijd,dk->kij', dense, w_ea)    # edge-attention term per head
        return ae + neg_bias[None]                     # fold adjacency mask in

    ae_all = jax.vmap(densify)(edge_attr_b).astype(jnp.bfloat16)  # (B, H+1, N, N) bf16
    ae1 = ae_all[:, :HEADS]                                       # (B, H, N, N)
    ae2 = ae_all[:, HEADS]                                        # (B, N, N)

    # Mean-pool matrix (graphs are contiguous blocks of N_PER_GRAPH nodes).
    gid = jnp.repeat(jnp.arange(GRAPHS_PER_BATCH), N_PER_GRAPH)
    onehot = (gid[None, :] == jnp.arange(GRAPHS_PER_BATCH)[:, None]).astype(jnp.float32)
    pool = onehot / jnp.sum(onehot, axis=1, keepdims=True)        # (G, N)

    flops_per_step = 2 * (
        N * NODE_FEAT * HIDDEN + N * HIDDEN * W1_COLS + HEADS * HIDDEN * N
        + HEADS * N * N * HIDDEN + N * HH * W2_COLS + N * HH + N * N * HIDDEN
        + N * HIDDEN * OUT_PAD + GRAPHS_PER_BATCH * N * HIDDEN
        + GRAPHS_PER_BATCH * HIDDEN * CYC_HID + GRAPHS_PER_BATCH * CYC_HID * OUT_PAD)
    bytes_per_step = ((HEADS + 1) * N * N * 2 + N * NODE_FEAT * 4
                      + N * OUT_PAD * 4 + GRAPHS_PER_BATCH * OUT_PAD * 4)
    param_bytes = (P2D_ROWS * OUT_PAD * 4 + W1_ROWS * W1_COLS * 2
                   + W2_ROWS * W2_COLS * 2 + GRAPHS_PER_BATCH * N * 4)
    cost = pl.CostEstimate(flops=B * flops_per_step,
                           transcendentals=B * (HEADS + 1) * N * N,
                           bytes_accessed=B * bytes_per_step + param_bytes)

    task_pad, cyc_pad = pl.pallas_call(
        process_gnn_kernel,
        out_shape=(jax.ShapeDtypeStruct((B, N, OUT_PAD), jnp.float32),
                   jax.ShapeDtypeStruct((B, GRAPHS_PER_BATCH, OUT_PAD), jnp.float32)),
        grid=(B,),
        in_specs=[
            pl.BlockSpec((None, N, NODE_FEAT), lambda b: (b, 0, 0)),
            pl.BlockSpec((None, HEADS, N, N), lambda b: (b, 0, 0, 0)),
            pl.BlockSpec((None, N, N), lambda b: (b, 0, 0)),
            pl.BlockSpec((GRAPHS_PER_BATCH, N), lambda b: (0, 0)),
            pl.BlockSpec((P2D_ROWS, OUT_PAD), lambda b: (0, 0)),
            pl.BlockSpec((W1_ROWS, W1_COLS), lambda b: (0, 0)),
            pl.BlockSpec((W2_ROWS, W2_COLS), lambda b: (0, 0)),
        ],
        out_specs=(
            pl.BlockSpec((None, N, OUT_PAD), lambda b: (b, 0, 0)),
            pl.BlockSpec((None, GRAPHS_PER_BATCH, OUT_PAD), lambda b: (b, 0, 0)),
        ),
        compiler_params=pltpu.CompilerParams(dimension_semantics=("parallel",)),
        cost_estimate=cost,
    )(x_b, ae1, ae2, pool, p2d, wb1, wb2)

    task = task_pad[..., :TASK_OUT].reshape(B * N, TASK_OUT)
    cyc = cyc_pad[..., :1].reshape(B * GRAPHS_PER_BATCH, 1)
    return task, cyc


# ---------------------------------------------------------------------------
if __name__ == "__main__":
    key = jax.random.PRNGKey(0)
    kx, ke, kp = jax.random.split(key, 3)
    params = init_params(kp)

    total_nodes = NUM_BATCHES * N
    x = jax.random.normal(kx, (total_nodes, NODE_FEAT), jnp.float32)

    # Bidirectional chain edges inside every graph; node ids local to a graph-batch.
    srcs, dsts = [], []
    for g in range(GRAPHS_PER_BATCH):
        base = g * N_PER_GRAPH
        for i in range(N_PER_GRAPH - 1):
            srcs += [base + i, base + i + 1]
            dsts += [base + i + 1, base + i]
    edge_index_local = jnp.array([srcs, dsts], dtype=jnp.int32)
    edge_attr = jax.random.normal(ke, (NUM_BATCHES, len(srcs), EDGE_FEAT), jnp.float32)

    fwd = jax.jit(process_gnn_forward)
    task_preds, cycle_pred = fwd(
        x.reshape(NUM_BATCHES, N, NODE_FEAT), edge_index_local, edge_attr, params)
    jax.block_until_ready((task_preds, cycle_pred))

    assert task_preds.shape == (total_nodes, TASK_OUT)
    assert cycle_pred.shape == (NUM_BATCHES * GRAPHS_PER_BATCH, 1)
    assert bool(jnp.all(jnp.isfinite(task_preds)))
    assert bool(jnp.all(jnp.isfinite(cycle_pred)))
    print("KERNEL_OK")
</pallas_src>

<mosaic_0001>
module attributes {stable_mosaic.version = 11 : i64} {
  func.func private @main(%arg0: i32) attributes {dimension_semantics = [#tpu.dimension_semantics<core_parallel>], iteration_bounds = array<i64: 2>, tpu.core_type = #tpu.core_type<sc_scalar_subcore>, window_params = []} {
    return
  }
}

module attributes {stable_mosaic.version = 11 : i64} {
  func.func private @main(%arg0: i32) attributes {dimension_semantics = [#tpu.dimension_semantics<core_parallel>], iteration_bounds = array<i64: 2>, tpu.core_type = #tpu.core_type<sc_scalar_subcore>, window_params = []} {
    return
  }
}

module attributes {stable_mosaic.version = 11 : i64} {
  func.func @process_gnn_kernel(%arg0: i32, %arg1: memref<1x128x8xf32, #tpu.memory_space<vmem>>, %arg2: memref<1x4x128x128xbf16, #tpu.memory_space<vmem>>, %arg3: memref<1x128x128xbf16, #tpu.memory_space<vmem>>, %arg4: memref<8x128xf32, #tpu.memory_space<vmem>>, %arg5: memref<120x128xf32, #tpu.memory_space<vmem>>, %arg6: memref<40x132xbf16, #tpu.memory_space<vmem>>, %arg7: memref<136x128xbf16, #tpu.memory_space<vmem>>, %arg8: memref<1x128x128xf32, #tpu.memory_space<vmem>>, %arg9: memref<1x8x128xf32, #tpu.memory_space<vmem>>) attributes {dimension_semantics = [#tpu.dimension_semantics<parallel>], iteration_bounds = array<i64: 2>, scalar_prefetch = 0 : i64, scratch_operands = 0 : i64, tpu.core_type = #tpu.core_type<tc>, window_params = [{transform_indices = @transform_0, window_bounds = array<i64: 1, 128, 8>}, {transform_indices = @transform_1, window_bounds = array<i64: 1, 4, 128, 128>}, {transform_indices = @transform_2, window_bounds = array<i64: 1, 128, 128>}, {pipeline_mode = #tpu.pipeline_mode<synchronous>, transform_indices = @transform_3, window_bounds = array<i64: 8, 128>}, {pipeline_mode = #tpu.pipeline_mode<synchronous>, transform_indices = @transform_4, window_bounds = array<i64: 120, 128>}, {pipeline_mode = #tpu.pipeline_mode<synchronous>, transform_indices = @transform_5, window_bounds = array<i64: 40, 132>}, {pipeline_mode = #tpu.pipeline_mode<synchronous>, transform_indices = @transform_6, window_bounds = array<i64: 136, 128>}, {transform_indices = @transform_7, window_bounds = array<i64: 1, 128, 128>}, {transform_indices = @transform_8, window_bounds = array<i64: 1, 8, 128>}]} {
    %c0 = arith.constant 0 : index
    %c0_0 = arith.constant 0 : index
    %c0_1 = arith.constant 0 : index
    %0 = vector.load %arg1[%c0, %c0_0, %c0_1] : memref<1x128x8xf32, #tpu.memory_space<vmem>>, vector<1x128x8xf32>
    %1 = vector.shape_cast %0 : vector<1x128x8xf32> to vector<128x8xf32>
    %c0_2 = arith.constant 0 : index
    %c0_3 = arith.constant 0 : index
    %2 = vector.load %arg5[%c0_2, %c0_3] : memref<120x128xf32, #tpu.memory_space<vmem>>, vector<120x128xf32>
    %c0_4 = arith.constant 0 : index
    %c0_5 = arith.constant 0 : index
    %3 = vector.load %arg6[%c0_4, %c0_5] : memref<40x132xbf16, #tpu.memory_space<vmem>>, vector<40x132xbf16>
    %4 = arith.mulf %1, %1 : vector<128x8xf32>
    %cst = arith.constant dense<0.000000e+00> : vector<128xf32>
    %5 = vector.multi_reduction <add>, %4, %cst [1] : vector<128x8xf32> to vector<128xf32>
    %6 = vector.shape_cast %5 : vector<128xf32> to vector<128x1xf32>
    %7 = math.sqrt %6 : vector<128x1xf32>
    %cst_6 = arith.constant 9.99999997E-7 : f32
    %8 = vector.broadcast %cst_6 : f32 to vector<128x1xf32>
    %9 = arith.addf %7, %8 : vector<128x1xf32>
    %10 = vector.extract_strided_slice %2 {offsets = [0, 0], sizes = [8, 32], strides = [1, 1]} : vector<120x128xf32> to vector<8x32xf32>
    %11 = vector.extract_strided_slice %2 {offsets = [8, 0], sizes = [1, 32], strides = [1, 1]} : vector<120x128xf32> to vector<1x32xf32>
    %12 = vector.broadcast %9 : vector<128x1xf32> to vector<128x8xf32>
    %13 = arith.divf %1, %12 : vector<128x8xf32>
    %cst_7 = arith.constant dense<0.000000e+00> : vector<128x32xf32>
    %14 = tpu.matmul %13, %10, %cst_7 {dimension_numbers = #tpu.dot_dimension_numbers<[1], [0], [0], [1], [0, 0, 1, 1], [], []>} : vector<128x8xf32>, vector<8x32xf32>, vector<128x32xf32> -> vector<128x32xf32>
    %15 = vector.broadcast %11 : vector<1x32xf32> to vector<128x32xf32>
    %16 = arith.addf %14, %15 : vector<128x32xf32>
    %17 = arith.truncf %16 : vector<128x32xf32> to vector<128x32xbf16>
    %18 = vector.extract_strided_slice %3 {offsets = [0, 0], sizes = [32, 132], strides = [1, 1]} : vector<40x132xbf16> to vector<32x132xbf16>
    %cst_8 = arith.constant dense<0.000000e+00> : vector<128x132xf32>
    %19 = tpu.matmul %17, %18, %cst_8 {dimension_numbers = #tpu.dot_dimension_numbers<[1], [0], [0], [1], [0, 0, 1, 1], [], []>} : vector<128x32xbf16>, vector<32x132xbf16>, vector<128x132xf32> -> vector<128x132xf32>
    %20 = vector.extract_strided_slice %19 {offsets = [0, 0], sizes = [128, 128], strides = [1, 1]} : vector<128x132xf32> to vector<128x128xf32>
    %21 = arith.truncf %20 : vector<128x128xf32> to vector<128x128xbf16>
    %22 = vector.extract_strided_slice %19 {offsets = [0, 128], sizes = [128, 4], strides = [1, 1]} : vector<128x132xf32> to vector<128x4xf32>
    %23 = vector.extract_strided_slice %3 {offsets = [32, 0], sizes = [4, 32], strides = [1, 1]} : vector<40x132xbf16> to vector<4x32xbf16>
    "tpu.trace_start"() <{level = 10 : i32, message = "hf,nf->hn"}> : () -> ()
    %cst_9 = arith.constant dense<0.000000e+00> : vector<4x128xf32>
    %24 = tpu.matmul %23, %17, %cst_9 {dimension_numbers = #tpu.dot_dimension_numbers<[1], [1], [0], [0], [0, 0, 1, 0], [], []>} : vector<4x32xbf16>, vector<128x32xbf16>, vector<4x128xf32> -> vector<4x128xf32>
    "tpu.trace_stop"() : () -> ()
    %25 = vector.extract_strided_slice %22 {offsets = [0, 0], sizes = [128, 1], strides = [1, 1]} : vector<128x4xf32> to vector<128x1xf32>
    %26 = vector.extract_strided_slice %24 {offsets = [0, 0], sizes = [1, 128], strides = [1, 1]} : vector<4x128xf32> to vector<1x128xf32>
    %27 = vector.broadcast %25 : vector<128x1xf32> to vector<128x128xf32>
    %28 = vector.broadcast %26 : vector<1x128xf32> to vector<128x128xf32>
    %29 = arith.addf %27, %28 : vector<128x128xf32>
    %c0_10 = arith.constant 0 : index
    %c0_11 = arith.constant 0 : index
    %c0_12 = arith.constant 0 : index
    %c0_13 = arith.constant 0 : index
    %30 = vector.load %arg2[%c0_10, %c0_11, %c0_12, %c0_13] : memref<1x4x128x128xbf16, #tpu.memory_space<vmem>>, vector<1x1x128x128xbf16>
    %31 = vector.shape_cast %30 : vector<1x1x128x128xbf16> to vector<128x128xbf16>
    %32 = arith.extf %31 : vector<128x128xbf16> to vector<128x128xf32>
    %33 = arith.addf %29, %32 : vector<128x128xf32>
    %cst_14 = arith.constant 2.000000e-01 : f32
    %34 = vector.broadcast %cst_14 : f32 to vector<128x128xf32>
    %35 = arith.mulf %34, %33 : vector<128x128xf32>
    %36 = arith.maximumf %33, %35 : vector<128x128xf32>
    %cst_15 = arith.constant dense<0xFF800000> : vector<128xf32>
    %37 = vector.multi_reduction <maximumf>, %36, %cst_15 [1] : vector<128x128xf32> to vector<128xf32>
    %38 = vector.shape_cast %37 : vector<128xf32> to vector<128x1xf32>
    %39 = vector.broadcast %38 : vector<128x1xf32> to vector<128x128xf32>
    %40 = arith.subf %36, %39 : vector<128x128xf32>
    %41 = math.exp %40 : vector<128x128xf32>
    %cst_16 = arith.constant dense<0.000000e+00> : vector<128xf32>
    %42 = vector.multi_reduction <add>, %41, %cst_16 [1] : vector<128x128xf32> to vector<128xf32>
    %43 = vector.shape_cast %42 : vector<128xf32> to vector<128x1xf32>
    %44 = tpu.reciprocal %43 {approx = true} : vector<128x1xf32> -> vector<128x1xf32>
    %45 = vector.broadcast %44 : vector<128x1xf32> to vector<128x128xf32>
    %46 = arith.mulf %41, %45 : vector<128x128xf32>
    %47 = arith.truncf %46 : vector<128x128xf32> to vector<128x128xbf16>
    %48 = vector.extract_strided_slice %21 {offsets = [0, 0], sizes = [128, 32], strides = [1, 1]} : vector<128x128xbf16> to vector<128x32xbf16>
    %cst_17 = arith.constant dense<0.000000e+00> : vector<128x32xf32>
    %49 = tpu.matmul %47, %48, %cst_17 {dimension_numbers = #tpu.dot_dimension_numbers<[1], [0], [0], [1], [0, 0, 1, 1], [], []>} : vector<128x128xbf16>, vector<128x32xbf16>, vector<128x32xf32> -> vector<128x32xf32>
    %50 = vector.extract_strided_slice %22 {offsets = [0, 1], sizes = [128, 1], strides = [1, 1]} : vector<128x4xf32> to vector<128x1xf32>
    %51 = vector.extract_strided_slice %24 {offsets = [1, 0], sizes = [1, 128], strides = [1, 1]} : vector<4x128xf32> to vector<1x128xf32>
    %52 = vector.broadcast %50 : vector<128x1xf32> to vector<128x128xf32>
    %53 = vector.broadcast %51 : vector<1x128xf32> to vector<128x128xf32>
    %54 = arith.addf %52, %53 : vector<128x128xf32>
    %c0_18 = arith.constant 0 : index
    %c1 = arith.constant 1 : index
    %c0_19 = arith.constant 0 : index
    %c0_20 = arith.constant 0 : index
    %55 = vector.load %arg2[%c0_18, %c1, %c0_19, %c0_20] : memref<1x4x128x128xbf16, #tpu.memory_space<vmem>>, vector<1x1x128x128xbf16>
    %56 = vector.shape_cast %55 : vector<1x1x128x128xbf16> to vector<128x128xbf16>
    %57 = arith.extf %56 : vector<128x128xbf16> to vector<128x128xf32>
    %58 = arith.addf %54, %57 : vector<128x128xf32>
    %cst_21 = arith.constant 2.000000e-01 : f32
    %59 = vector.broadcast %cst_21 : f32 to vector<128x128xf32>
    %60 = arith.mulf %59, %58 : vector<128x128xf32>
    %61 = arith.maximumf %58, %60 : vector<128x128xf32>
    %cst_22 = arith.constant dense<0xFF800000> : vector<128xf32>
    %62 = vector.multi_reduction <maximumf>, %61, %cst_22 [1] : vector<128x128xf32> to vector<128xf32>
    %63 = vector.shape_cast %62 : vector<128xf32> to vector<128x1xf32>
    %64 = vector.broadcast %63 : vector<128x1xf32> to vector<128x128xf32>
    %65 = arith.subf %61, %64 : vector<128x128xf32>
    %66 = math.exp %65 : vector<128x128xf32>
    %cst_23 = arith.constant dense<0.000000e+00> : vector<128xf32>
    %67 = vector.multi_reduction <add>, %66, %cst_23 [1] : vector<128x128xf32> to vector<128xf32>
    %68 = vector.shape_cast %67 : vector<128xf32> to vector<128x1xf32>
    %69 = tpu.reciprocal %68 {approx = true} : vector<128x1xf32> -> vector<128x1xf32>
    %70 = vector.broadcast %69 : vector<128x1xf32> to vector<128x128xf32>
    %71 = arith.mulf %66, %70 : vector<128x128xf32>
    %72 = arith.truncf %71 : vector<128x128xf32> to vector<128x128xbf16>
    %73 = vector.extract_strided_slice %21 {offsets = [0, 32], sizes = [128, 32], strides = [1, 1]} : vector<128x128xbf16> to vector<128x32xbf16>
    %cst_24 = arith.constant dense<0.000000e+00> : vector<128x32xf32>
    %74 = tpu.matmul %72, %73, %cst_24 {dimension_numbers = #tpu.dot_dimension_numbers<[1], [0], [0], [1], [0, 0, 1, 1], [], []>} : vector<128x128xbf16>, vector<128x32xbf16>, vector<128x32xf32> -> vector<128x32xf32>
    %75 = vector.extract_strided_slice %22 {offsets = [0, 2], sizes = [128, 1], strides = [1, 1]} : vector<128x4xf32> to vector<128x1xf32>
    %76 = vector.extract_strided_slice %24 {offsets = [2, 0], sizes = [1, 128], strides = [1, 1]} : vector<4x128xf32> to vector<1x128xf32>
    %77 = vector.broadcast %75 : vector<128x1xf32> to vector<128x128xf32>
    %78 = vector.broadcast %76 : vector<1x128xf32> to vector<128x128xf32>
    %79 = arith.addf %77, %78 : vector<128x128xf32>
    %c0_25 = arith.constant 0 : index
    %c2 = arith.constant 2 : index
    %c0_26 = arith.constant 0 : index
    %c0_27 = arith.constant 0 : index
    %80 = vector.load %arg2[%c0_25, %c2, %c0_26, %c0_27] : memref<1x4x128x128xbf16, #tpu.memory_space<vmem>>, vector<1x1x128x128xbf16>
    %81 = vector.shape_cast %80 : vector<1x1x128x128xbf16> to vector<128x128xbf16>
    %82 = arith.extf %81 : vector<128x128xbf16> to vector<128x128xf32>
    %83 = arith.addf %79, %82 : vector<128x128xf32>
    %cst_28 = arith.constant 2.000000e-01 : f32
    %84 = vector.broadcast %cst_28 : f32 to vector<128x128xf32>
    %85 = arith.mulf %84, %83 : vector<128x128xf32>
    %86 = arith.maximumf %83, %85 : vector<128x128xf32>
    %cst_29 = arith.constant dense<0xFF800000> : vector<128xf32>
    %87 = vector.multi_reduction <maximumf>, %86, %cst_29 [1] : vector<128x128xf32> to vector<128xf32>
    %88 = vector.shape_cast %87 : vector<128xf32> to vector<128x1xf32>
    %89 = vector.broadcast %88 : vector<128x1xf32> to vector<128x128xf32>
    %90 = arith.subf %86, %89 : vector<128x128xf32>
    %91 = math.exp %90 : vector<128x128xf32>
    %cst_30 = arith.constant dense<0.000000e+00> : vector<128xf32>
    %92 = vector.multi_reduction <add>, %91, %cst_30 [1] : vector<128x128xf32> to vector<128xf32>
    %93 = vector.shape_cast %92 : vector<128xf32> to vector<128x1xf32>
    %94 = tpu.reciprocal %93 {approx = true} : vector<128x1xf32> -> vector<128x1xf32>
    %95 = vector.broadcast %94 : vector<128x1xf32> to vector<128x128xf32>
    %96 = arith.mulf %91, %95 : vector<128x128xf32>
    %97 = arith.truncf %96 : vector<128x128xf32> to vector<128x128xbf16>
    %98 = vector.extract_strided_slice %21 {offsets = [0, 64], sizes = [128, 32], strides = [1, 1]} : vector<128x128xbf16> to vector<128x32xbf16>
    %cst_31 = arith.constant dense<0.000000e+00> : vector<128x32xf32>
    %99 = tpu.matmul %97, %98, %cst_31 {dimension_numbers = #tpu.dot_dimension_numbers<[1], [0], [0], [1], [0, 0, 1, 1], [], []>} : vector<128x128xbf16>, vector<128x32xbf16>, vector<128x32xf32> -> vector<128x32xf32>
    %100 = vector.extract_strided_slice %22 {offsets = [0, 3], sizes = [128, 1], strides = [1, 1]} : vector<128x4xf32> to vector<128x1xf32>
    %101 = vector.extract_strided_slice %24 {offsets = [3, 0], sizes = [1, 128], strides = [1, 1]} : vector<4x128xf32> to vector<1x128xf32>
    %102 = vector.broadcast %100 : vector<128x1xf32> to vector<128x128xf32>
    %103 = vector.broadcast %101 : vector<1x128xf32> to vector<128x128xf32>
    %104 = arith.addf %102, %103 : vector<128x128xf32>
    %c0_32 = arith.constant 0 : index
    %c3 = arith.constant 3 : index
    %c0_33 = arith.constant 0 : index
    %c0_34 = arith.constant 0 : index
    %105 = vector.load %arg2[%c0_32, %c3, %c0_33, %c0_34] : memref<1x4x128x128xbf16, #tpu.memory_space<vmem>>, vector<1x1x128x128xbf16>
    %106 = vector.shape_cast %105 : vector<1x1x128x128xbf16> to vector<128x128xbf16>
    %107 = arith.extf %106 : vector<128x128xbf16> to vector<128x128xf32>
    %108 = arith.addf %104, %107 : vector<128x128xf32>
    %cst_35 = arith.constant 2.000000e-01 : f32
    %109 = vector.broadcast %cst_35 : f32 to vector<128x128xf32>
    %110 = arith.mulf %109, %108 : vector<128x128xf32>
    %111 = arith.maximumf %108, %110 : vector<128x128xf32>
    %cst_36 = arith.constant dense<0xFF800000> : vector<128xf32>
    %112 = vector.multi_reduction <maximumf>, %111, %cst_36 [1] : vector<128x128xf32> to vector<128xf32>
    %113 = vector.shape_cast %112 : vector<128xf32> to vector<128x1xf32>
    %114 = vector.broadcast %113 : vector<128x1xf32> to vector<128x128xf32>
    %115 = arith.subf %111, %114 : vector<128x128xf32>
    %116 = math.exp %115 : vector<128x128xf32>
    %cst_37 = arith.constant dense<0.000000e+00> : vector<128xf32>
    %117 = vector.multi_reduction <add>, %116, %cst_37 [1] : vector<128x128xf32> to vector<128xf32>
    %118 = vector.shape_cast %117 : vector<128xf32> to vector<128x1xf32>
    %119 = tpu.reciprocal %118 {approx = true} : vector<128x1xf32> -> vector<128x1xf32>
    %120 = vector.broadcast %119 : vector<128x1xf32> to vector<128x128xf32>
    %121 = arith.mulf %116, %120 : vector<128x128xf32>
    %122 = arith.truncf %121 : vector<128x128xf32> to vector<128x128xbf16>
    %123 = vector.extract_strided_slice %21 {offsets = [0, 96], sizes = [128, 32], strides = [1, 1]} : vector<128x128xbf16> to vector<128x32xbf16>
    %cst_38 = arith.constant dense<0.000000e+00> : vector<128x32xf32>
    %124 = tpu.matmul %122, %123, %cst_38 {dimension_numbers = #tpu.dot_dimension_numbers<[1], [0], [0], [1], [0, 0, 1, 1], [], []>} : vector<128x128xbf16>, vector<128x32xbf16>, vector<128x32xf32> -> vector<128x32xf32>
    %125 = vector.extract_strided_slice %2 {offsets = [9, 0], sizes = [1, 128], strides = [1, 1]} : vector<120x128xf32> to vector<1x128xf32>
    %126 = tpu.concatenate %49, %74, %99, %124 in 1 : vector<128x32xf32>, vector<128x32xf32>, vector<128x32xf32>, vector<128x32xf32> -> vector<128x128xf32>
    %127 = vector.broadcast %125 : vector<1x128xf32> to vector<128x128xf32>
    %128 = arith.addf %126, %127 : vector<128x128xf32>
    %cst_39 = arith.constant 0.000000e+00 : f32
    %129 = vector.broadcast %cst_39 : f32 to vector<128x128xf32>
    %130 = arith.maximumf %128, %129 : vector<128x128xf32>
    %131 = arith.truncf %130 : vector<128x128xf32> to vector<128x128xbf16>
    %c0_40 = arith.constant 0 : index
    %c0_41 = arith.constant 0 : index
    %132 = vector.load %arg7[%c0_40, %c0_41] : memref<136x128xbf16, #tpu.memory_space<vmem>>, vector<136x128xbf16>
    %133 = vector.extract_strided_slice %132 {offsets = [0, 0], sizes = [128, 128], strides = [1, 1]} : vector<136x128xbf16> to vector<128x128xbf16>
    %cst_42 = arith.constant dense<0.000000e+00> : vector<128x128xf32>
    %134 = tpu.matmul %131, %133, %cst_42 {dimension_numbers = #tpu.dot_dimension_numbers<[1], [0], [0], [1], [0, 0, 1, 1], [], []>} : vector<128x128xbf16>, vector<128x128xbf16>, vector<128x128xf32> -> vector<128x128xf32>
    %135 = vector.extract_strided_slice %134 {offsets = [0, 0], sizes = [128, 32], strides = [1, 1]} : vector<128x128xf32> to vector<128x32xf32>
    %136 = arith.truncf %135 : vector<128x32xf32> to vector<128x32xbf16>
    %137 = vector.extract_strided_slice %134 {offsets = [0, 32], sizes = [128, 1], strides = [1, 1]} : vector<128x128xf32> to vector<128x1xf32>
    %138 = vector.extract_strided_slice %132 {offsets = [128, 0], sizes = [1, 128], strides = [1, 1]} : vector<136x128xbf16> to vector<1x128xbf16>
    "tpu.trace_start"() <{level = 10 : i32, message = "of,nf->on"}> : () -> ()
    %cst_43 = arith.constant dense<0.000000e+00> : vector<1x128xf32>
    %139 = tpu.matmul %138, %131, %cst_43 {dimension_numbers = #tpu.dot_dimension_numbers<[1], [1], [0], [0], [0, 0, 1, 0], [], []>} : vector<1x128xbf16>, vector<128x128xbf16>, vector<1x128xf32> -> vector<1x128xf32>
    "tpu.trace_stop"() : () -> ()
    %140 = vector.broadcast %137 : vector<128x1xf32> to vector<128x128xf32>
    %141 = vector.broadcast %139 : vector<1x128xf32> to vector<128x128xf32>
    %142 = arith.addf %140, %141 : vector<128x128xf32>
    %c0_44 = arith.constant 0 : index
    %c0_45 = arith.constant 0 : index
    %c0_46 = arith.constant 0 : index
    %143 = vector.load %arg3[%c0_44, %c0_45, %c0_46] : memref<1x128x128xbf16, #tpu.memory_space<vmem>>, vector<1x128x128xbf16>
    %144 = vector.shape_cast %143 : vector<1x128x128xbf16> to vector<128x128xbf16>
    %145 = arith.extf %144 : vector<128x128xbf16> to vector<128x128xf32>
    %146 = arith.addf %142, %145 : vector<128x128xf32>
    %cst_47 = arith.constant 2.000000e-01 : f32
    %147 = vector.broadcast %cst_47 : f32 to vector<128x128xf32>
    %148 = arith.mulf %147, %146 : vector<128x128xf32>
    %149 = arith.maximumf %146, %148 : vector<128x128xf32>
    %cst_48 = arith.constant dense<0xFF800000> : vector<128xf32>
    %150 = vector.multi_reduction <maximumf>, %149, %cst_48 [1] : vector<128x128xf32> to vector<128xf32>
    %151 = vector.shape_cast %150 : vector<128xf32> to vector<128x1xf32>
    %152 = vector.broadcast %151 : vector<128x1xf32> to vector<128x128xf32>
    %153 = arith.subf %149, %152 : vector<128x128xf32>
    %154 = math.exp %153 : vector<128x128xf32>
    %cst_49 = arith.constant dense<0.000000e+00> : vector<128xf32>
    %155 = vector.multi_reduction <add>, %154, %cst_49 [1] : vector<128x128xf32> to vector<128xf32>
    %156 = vector.shape_cast %155 : vector<128xf32> to vector<128x1xf32>
    %157 = tpu.reciprocal %156 {approx = true} : vector<128x1xf32> -> vector<128x1xf32>
    %158 = vector.broadcast %157 : vector<128x1xf32> to vector<128x128xf32>
    %159 = arith.mulf %154, %158 : vector<128x128xf32>
    %160 = vector.extract_strided_slice %2 {offsets = [10, 0], sizes = [1, 32], strides = [1, 1]} : vector<120x128xf32> to vector<1x32xf32>
    %161 = arith.truncf %159 : vector<128x128xf32> to vector<128x128xbf16>
    %cst_50 = arith.constant dense<0.000000e+00> : vector<128x32xf32>
    %162 = tpu.matmul %161, %136, %cst_50 {dimension_numbers = #tpu.dot_dimension_numbers<[1], [0], [0], [1], [0, 0, 1, 1], [], []>} : vector<128x128xbf16>, vector<128x32xbf16>, vector<128x32xf32> -> vector<128x32xf32>
    %163 = vector.broadcast %160 : vector<1x32xf32> to vector<128x32xf32>
    %164 = arith.addf %162, %163 : vector<128x32xf32>
    %cst_51 = arith.constant 0.000000e+00 : f32
    %165 = vector.broadcast %cst_51 : f32 to vector<128x32xf32>
    %166 = arith.maximumf %164, %165 : vector<128x32xf32>
    %167 = vector.extract_strided_slice %2 {offsets = [16, 0], sizes = [32, 128], strides = [1, 1]} : vector<120x128xf32> to vector<32x128xf32>
    %168 = vector.extract_strided_slice %2 {offsets = [48, 0], sizes = [1, 128], strides = [1, 1]} : vector<120x128xf32> to vector<1x128xf32>
    %cst_52 = arith.constant dense<0.000000e+00> : vector<128x128xf32>
    %169 = tpu.matmul %166, %167, %cst_52 {dimension_numbers = #tpu.dot_dimension_numbers<[1], [0], [0], [1], [0, 0, 1, 1], [], []>} : vector<128x32xf32>, vector<32x128xf32>, vector<128x128xf32> -> vector<128x128xf32>
    %170 = vector.broadcast %168 : vector<1x128xf32> to vector<128x128xf32>
    %171 = arith.addf %169, %170 : vector<128x128xf32>
    %c0_53 = arith.constant 0 : index
    %c0_54 = arith.constant 0 : index
    %c0_55 = arith.constant 0 : index
    %172 = vector.load %arg8[%c0_53, %c0_54, %c0_55] : memref<1x128x128xf32, #tpu.memory_space<vmem>>, vector<1x128x128xf32>
    %173 = vector.shape_cast %172 : vector<1x128x128xf32> to vector<128x128xf32>
    %174 = vector.shape_cast %171 : vector<128x128xf32> to vector<1x128x128xf32>
    tpu.vector_store %arg8[%c0_53, %c0_54, %c0_55], %174 {strides = array<i32>} : memref<1x128x128xf32, #tpu.memory_space<vmem>>, vector<1x128x128xf32>,
    %c0_56 = arith.constant 0 : index
    %c0_57 = arith.constant 0 : index
    %175 = vector.load %arg4[%c0_56, %c0_57] : memref<8x128xf32, #tpu.memory_space<vmem>>, vector<8x128xf32>
    %cst_58 = arith.constant dense<0.000000e+00> : vector<8x32xf32>
    %176 = tpu.matmul %175, %166, %cst_58 {dimension_numbers = #tpu.dot_dimension_numbers<[1], [0], [0], [1], [0, 0, 1, 1], [], []>} : vector<8x128xf32>, vector<128x32xf32>, vector<8x32xf32> -> vector<8x32xf32>
    %177 = vector.extract_strided_slice %2 {offsets = [56, 0], sizes = [32, 16], strides = [1, 1]} : vector<120x128xf32> to vector<32x16xf32>
    %178 = vector.extract_strided_slice %2 {offsets = [88, 0], sizes = [1, 16], strides = [1, 1]} : vector<120x128xf32> to vector<1x16xf32>
    %cst_59 = arith.constant dense<0.000000e+00> : vector<8x16xf32>
    %179 = tpu.matmul %176, %177, %cst_59 {dimension_numbers = #tpu.dot_dimension_numbers<[1], [0], [0], [1], [0, 0, 1, 1], [], []>} : vector<8x32xf32>, vector<32x16xf32>, vector<8x16xf32> -> vector<8x16xf32>
    %180 = vector.broadcast %178 : vector<1x16xf32> to vector<8x16xf32>
    %181 = arith.addf %179, %180 : vector<8x16xf32>
    %cst_60 = arith.constant 0.000000e+00 : f32
    %182 = vector.broadcast %cst_60 : f32 to vector<8x16xf32>
    %183 = arith.maximumf %181, %182 : vector<8x16xf32>
    %184 = vector.extract_strided_slice %2 {offsets = [96, 0], sizes = [16, 128], strides = [1, 1]} : vector<120x128xf32> to vector<16x128xf32>
    %185 = vector.extract_strided_slice %2 {offsets = [112, 0], sizes = [1, 128], strides = [1, 1]} : vector<120x128xf32> to vector<1x128xf32>
    %cst_61 = arith.constant dense<0.000000e+00> : vector<8x128xf32>
    %186 = tpu.matmul %183, %184, %cst_61 {dimension_numbers = #tpu.dot_dimension_numbers<[1], [0], [0], [1], [0, 0, 1, 1], [], []>} : vector<8x16xf32>, vector<16x128xf32>, vector<8x128xf32> -> vector<8x128xf32>
    %187 = vector.broadcast %185 : vector<1x128xf32> to vector<8x128xf32>
    %188 = arith.addf %186, %187 : vector<8x128xf32>
    %c0_62 = arith.constant 0 : index
    %c0_63 = arith.constant 0 : index
    %c0_64 = arith.constant 0 : index
    %189 = vector.load %arg9[%c0_62, %c0_63, %c0_64] : memref<1x8x128xf32, #tpu.memory_space<vmem>>, vector<1x8x128xf32>
    %190 = vector.shape_cast %189 : vector<1x8x128xf32> to vector<8x128xf32>
    %191 = vector.shape_cast %188 : vector<8x128xf32> to vector<1x8x128xf32>
    tpu.vector_store %arg9[%c0_62, %c0_63, %c0_64], %191 {strides = array<i32>} : memref<1x8x128xf32, #tpu.memory_space<vmem>>, vector<1x8x128xf32>,
    return
  }
  func.func @transform_0(%arg0: i32) -> (i32, i32, i32) {
    %c0_i32 = arith.constant 0 : i32
    %c0_i32_0 = arith.constant 0 : i32
    %c0_i32_1 = arith.constant 0 : i32
    return %arg0, %c0_i32, %c0_i32_0 : i32, i32, i32
  }
  func.func @transform_1(%arg0: i32) -> (i32, i32, i32, i32) {
    %c0_i32 = arith.constant 0 : i32
    %c0_i32_0 = arith.constant 0 : i32
    %c0_i32_1 = arith.constant 0 : i32
    %c0_i32_2 = arith.constant 0 : i32
    return %arg0, %c0_i32, %c0_i32_0, %c0_i32_1 : i32, i32, i32, i32
  }
  func.func @transform_2(%arg0: i32) -> (i32, i32, i32) {
    %c0_i32 = arith.constant 0 : i32
    %c0_i32_0 = arith.constant 0 : i32
    %c0_i32_1 = arith.constant 0 : i32
    return %arg0, %c0_i32, %c0_i32_0 : i32, i32, i32
  }
  func.func @transform_3(%arg0: i32) -> (i32, i32) {
    %c0_i32 = arith.constant 0 : i32
    %c0_i32_0 = arith.constant 0 : i32
    %c0_i32_1 = arith.constant 0 : i32
    return %c0_i32, %c0_i32_0 : i32, i32
  }
  func.func @transform_4(%arg0: i32) -> (i32, i32) {
    %c0_i32 = arith.constant 0 : i32
    %c0_i32_0 = arith.constant 0 : i32
    %c0_i32_1 = arith.constant 0 : i32
    return %c0_i32, %c0_i32_0 : i32, i32
  }
  func.func @transform_5(%arg0: i32) -> (i32, i32) {
    %c0_i32 = arith.constant 0 : i32
    %c0_i32_0 = arith.constant 0 : i32
    %c0_i32_1 = arith.constant 0 : i32
    return %c0_i32, %c0_i32_0 : i32, i32
  }
  func.func @transform_6(%arg0: i32) -> (i32, i32) {
    %c0_i32 = arith.constant 0 : i32
    %c0_i32_0 = arith.constant 0 : i32
    %c0_i32_1 = arith.constant 0 : i32
    return %c0_i32, %c0_i32_0 : i32, i32
  }
  func.func @transform_7(%arg0: i32) -> (i32, i32, i32) {
    %c0_i32 = arith.constant 0 : i32
    %c0_i32_0 = arith.constant 0 : i32
    %c0_i32_1 = arith.constant 0 : i32
    return %arg0, %c0_i32, %c0_i32_0 : i32, i32, i32
  }
  func.func @transform_8(%arg0: i32) -> (i32, i32, i32) {
    %c0_i32 = arith.constant 0 : i32
    %c0_i32_0 = arith.constant 0 : i32
    %c0_i32_1 = arith.constant 0 : i32
    return %arg0, %c0_i32, %c0_i32_0 : i32, i32, i32
  }
}

</mosaic_0001>

<llo_original>
// kernel: eq.8
$region0: #{eq.8}
  %s0 = inlined_call_operand.vmem [shape: s32[8,16], index: 0, kind: input, shape index: {}]
  %s1 = inlined_call_operand.vmem [shape: s32[128], index: 1, kind: output, shape index: {}]
  $region1: #{eq.8} parent=0
    #allocation0 [shape = 'u8[4096]{0}', space=vmem, size = 0x1000, scoped, tag = 'scoped mem for output reshape']
    %v2 = vld [vmem:[%s0] sm:$0x1]
    %vm3 = vcmask 130048
    %4 = vst.msk [vmem:[#allocation0] sm:$0x1] %vm3, %v2
    %s5 = scalar_lea.vmem %s0, 7
    %v6 = vld [vmem:[%s5] sm:$0x1]
    %7 = vrot.lane.b32.xlu0 %v6, 112
    %v8 = vpop.permute.xlu0 %7
    %vm9 = vcmask 1048448
    %10 = vst.msk [vmem:[#allocation0] sm:$0x1] %vm9, %v8
    %s11 = scalar_lea.vmem %s0, 6
    %v12 = vld [vmem:[%s11] sm:$0x1]
    %13 = vrot.lane.b32.xlu0 %v12, 96
    %v14 = vpop.permute.xlu0 %13
    %vm15 = vcmask 917248
    %16 = vst.msk [vmem:[#allocation0] sm:$0x1] %vm15, %v14
    %s17 = scalar_lea.vmem %s0, 5
    %v18 = vld [vmem:[%s17] sm:$0x1]
    %19 = vrot.lane.b32.xlu0 %v18, 80
    %v20 = vpop.permute.xlu0 %19
    %vm21 = vcmask 786048
    %22 = vst.msk [vmem:[#allocation0] sm:$0x1] %vm21, %v20
    %s23 = scalar_lea.vmem %s0, 4
    %v24 = vld [vmem:[%s23] sm:$0x1]
    %25 = vrot.lane.b32.xlu0 %v24, 64
    %v26 = vpop.permute.xlu0 %25
    %vm27 = vcmask 654848
    %28 = vst.msk [vmem:[#allocation0] sm:$0x1] %vm27, %v26
    %s29 = scalar_lea.vmem %s0, 3
    %v30 = vld [vmem:[%s29] sm:$0x1]
    %31 = vrot.lane.b32.xlu0 %v30, 48
    %v32 = vpop.permute.xlu0 %31
    %vm33 = vcmask 523648
    %34 = vst.msk [vmem:[#allocation0] sm:$0x1] %vm33, %v32
    %s35 = scalar_lea.vmem %s0, 2
    %v36 = vld [vmem:[%s35] sm:$0x1]
    %37 = vrot.lane.b32.xlu0 %v36, 32
    %v38 = vpop.permute.xlu0 %37
    %vm39 = vcmask 392448
    %40 = vst.msk [vmem:[#allocation0] sm:$0x1] %vm39, %v38
    %s41 = scalar_lea.vmem %s0, 1
    %v42 = vld [vmem:[%s41] sm:$0x1]
    %43 = vrot.lane.b32.xlu0 %v42, 16
    %v44 = vpop.permute.xlu0 %43
    %vm45 = vcmask 261248
    %46 = vst.msk [vmem:[#allocation0] sm:$0x1] %vm45, %v44
    %s48 = sshllo.u32 0, 1
    %v50 = vld [vmem:[#allocation0] sm:%s48]
    %s51 = sshllo.u32 0, 1
    %52 = vst [vmem:[%s1] sm:%s51] %v50

// kernel: process_gnn_forward.1
$region0: #{process_gnn_forward.1}
  #allocation0 [shape = 'u32[]', space=smem, size = 0x4, offset = 0x4, fixed_abs, tag = 'smem constant byte address 0x4 - core index']
  #allocation1 [shape = 'u32[144,128]{1,0:T(1,128)}', space=vmem, size = 0x12000, scoped, tag = 'internal scratch']
  %s0 = inlined_call_operand.vmem [shape: f32[2,128,8], index: 0, kind: input, shape index: {}]
  %s1 = inlined_call_operand.vmem [shape: bf16[2,4,128,128], index: 1, kind: input, shape index: {}]
  %s2 = inlined_call_operand.vmem [shape: bf16[2,128,128], index: 2, kind: input, shape index: {}]
  %s3 = inlined_call_operand.vmem [shape: f32[8,128], index: 3, kind: input, shape index: {}]
  %s4 = inlined_call_operand.vmem [shape: f32[120,128], index: 4, kind: input, shape index: {}]
  %s5 = inlined_call_operand.vmem [shape: bf16[40,132], index: 5, kind: input, shape index: {}]
  %s6 = inlined_call_operand.vmem [shape: bf16[136,128], index: 6, kind: input, shape index: {}]
  %s7 = inlined_call_operand.vmem [shape: f32[2,128,128], index: 7, kind: output, shape index: {0}]
  %s8 = inlined_call_operand.vmem [shape: f32[2,8,128], index: 8, kind: output, shape index: {1}]
  %9 = xla_tuple %s7, %s8
  %s10 = sld [smem:[#allocation0]]
  $region69: #{process_gnn_forward.1} parent=0
    _
  %s12 = ssub.s32 1, %s10
  %s13 = scalar_select 0, %s12, %s10
  loop: start=0, step=1, limit=4
  $region2: #{process_gnn_forward.1} parent=0 // loop_pre_header
    _
  $region3: #{process_gnn_forward.1} parent=0 // loop_header
    %s15 = sphi 0, %s19
    %p16 = scmp.ge.s32.totalorder %s15, 4
    %s25 = sphi 0, %s27
    %s28 = sphi 0, %s25
    %s29 = sphi 0, %s28
    %s45 = sphi 0, %s29
    %s51 = sphi 0, %s53
    %s54 = sphi 0, %s51
    %s55 = sphi 0, %s54
    %s71 = sphi 0, %s55
    %s77 = sphi 0, %s79
    %s80 = sphi 0, %s77
    %s81 = sphi 0, %s80
    %s97 = sphi 0, %s81
    %s101 = sphi 0, %s101
    %s103 = sphi 0, %s101
    %s104 = sphi 0, %s103
    %s118 = sphi 0, %s104
    %s122 = sphi 0, %s122
    %s124 = sphi 0, %s122
    %s125 = sphi 0, %s124
    %s139 = sphi 0, %s125
    %s143 = sphi 0, %s143
    %s145 = sphi 0, %s143
    %s146 = sphi 0, %s145
    %s160 = sphi 0, %s146
    %s164 = sphi 0, %s164
    %s166 = sphi 0, %s164
    %s167 = sphi 0, %s166
    %s181 = sphi 0, %s167
    %s187 = sphi 0, %s189
    %s190 = sphi 0, %s187
    %s191 = sphi 0, %s190
    %s207 = sphi 0, %s191
    %s213 = sphi 0, %s215
    %s216 = sphi 0, %s213
    %s217 = sphi 0, %s216
    %s233 = sphi 0, %s217
  $region4: #{process_gnn_forward.1} parent=0 // loop_header_branch
    %18 = sbr.rel (%p16) target = $region8
  $region5: #{process_gnn_forward.1} parent=0 // loop_body
    %s20 = ssub.s32 %s15, 1
    %s21 = ssub.s32 %s15, 2
    %s22 = sadd.s32 %s15, 1
    %s23 = ssub.s32 %s15, %s22
    %p24 = scmp.eq.s32.totalorder %s23, 0
    %s26 = sadd.s32 %s25, 1
    %s27 = scalar_select %p24, %s25, %s26
    %p30 = pneg %p24
    %p31 = scmp.eq.s32.totalorder %s15, 1
    %p32 = por %p30, %p31
    %p33 = scmp.ne.s32.totalorder %s25, %s28
    %p34 = scmp.eq.s32.totalorder %s15, 0
    %p35 = por %p33, %p34
    %p36 = scmp.ne.s32.totalorder %s25, %s28
    %p37 = scmp.eq.s32.totalorder %s20, 1
    %p38 = por %p36, %p37
    %p39 = scmp.ne.s32.totalorder %s28, %s29
    %p40 = scmp.eq.s32.totalorder %s20, 0
    %p41 = por %p39, %p40
    %p42 = scmp.ne.s32.totalorder %s28, %s29
    %p43 = scmp.eq.s32.totalorder %s21, 1
    %p44 = por %p42, %p43
    %p46 = scmp.ne.s32.totalorder %s29, %s45
    %p47 = scmp.eq.s32.totalorder %s21, 0
    %p48 = por %p46, %p47
    %s49 = ssub.s32 %s15, %s22
    %p50 = scmp.eq.s32.totalorder %s49, 0
    %s52 = sadd.s32 %s51, 1
    %s53 = scalar_select %p50, %s51, %s52
    %p56 = pneg %p50
    %p57 = scmp.eq.s32.totalorder %s15, 1
    %p58 = por %p56, %p57
    %p59 = scmp.ne.s32.totalorder %s51, %s54
    %p60 = scmp.eq.s32.totalorder %s15, 0
    %p61 = por %p59, %p60
    %p62 = scmp.ne.s32.totalorder %s51, %s54
    %p63 = scmp.eq.s32.totalorder %s20, 1
    %p64 = por %p62, %p63
    %p65 = scmp.ne.s32.totalorder %s54, %s55
    %p66 = scmp.eq.s32.totalorder %s20, 0
    %p67 = por %p65, %p66
    %p68 = scmp.ne.s32.totalorder %s54, %s55
    %p69 = scmp.eq.s32.totalorder %s21, 1
    %p70 = por %p68, %p69
    %p72 = scmp.ne.s32.totalorder %s55, %s71
    %p73 = scmp.eq.s32.totalorder %s21, 0
    %p74 = por %p72, %p73
    %s75 = ssub.s32 %s15, %s22
    %p76 = scmp.eq.s32.totalorder %s75, 0
    %s78 = sadd.s32 %s77, 1
    %s79 = scalar_select %p76, %s77, %s78
    %p82 = pneg %p76
    %p83 = scmp.eq.s32.totalorder %s15, 1
    %p84 = por %p82, %p83
    %p85 = scmp.ne.s32.totalorder %s77, %s80
    %p86 = scmp.eq.s32.totalorder %s15, 0
    %p87 = por %p85, %p86
    %p88 = scmp.ne.s32.totalorder %s77, %s80
    %p89 = scmp.eq.s32.totalorder %s20, 1
    %p90 = por %p88, %p89
    %p91 = scmp.ne.s32.totalorder %s80, %s81
    %p92 = scmp.eq.s32.totalorder %s20, 0
    %p93 = por %p91, %p92
    %p94 = scmp.ne.s32.totalorder %s80, %s81
    %p95 = scmp.eq.s32.totalorder %s21, 1
    %p96 = por %p94, %p95
    %p98 = scmp.ne.s32.totalorder %s81, %s97
    %p99 = scmp.eq.s32.totalorder %s21, 0
    %p100 = por %p98, %p99
    %s102 = sadd.s32 %s101, 1
    %p105 = scmp.eq.s32.totalorder %s15, 1
    %p106 = scmp.ne.s32.totalorder %s101, %s103
    %p107 = scmp.eq.s32.totalorder %s15, 0
    %p108 = por %p106, %p107
    %p109 = scmp.ne.s32.totalorder %s101, %s103
    %p110 = scmp.eq.s32.totalorder %s20, 1
    %p111 = por %p109, %p110
    %p112 = scmp.ne.s32.totalorder %s103, %s104
    %p113 = scmp.eq.s32.totalorder %s20, 0
    %p114 = por %p112, %p113
    %p115 = scmp.ne.s32.totalorder %s103, %s104
    %p116 = scmp.eq.s32.totalorder %s21, 1
    %p117 = por %p115, %p116
    %p119 = scmp.ne.s32.totalorder %s104, %s118
    %p120 = scmp.eq.s32.totalorder %s21, 0
    %p121 = por %p119, %p120
    %s123 = sadd.s32 %s122, 1
    %p126 = scmp.eq.s32.totalorder %s15, 1
    %p127 = scmp.ne.s32.totalorder %s122, %s124
    %p128 = scmp.eq.s32.totalorder %s15, 0
    %p129 = por %p127, %p128
    %p130 = scmp.ne.s32.totalorder %s122, %s124
    %p131 = scmp.eq.s32.totalorder %s20, 1
    %p132 = por %p130, %p131
    %p133 = scmp.ne.s32.totalorder %s124, %s125
    %p134 = scmp.eq.s32.totalorder %s20, 0
    %p135 = por %p133, %p134
    %p136 = scmp.ne.s32.totalorder %s124, %s125
    %p137 = scmp.eq.s32.totalorder %s21, 1
    %p138 = por %p136, %p137
    %p140 = scmp.ne.s32.totalorder %s125, %s139
    %p141 = scmp.eq.s32.totalorder %s21, 0
    %p142 = por %p140, %p141
    %s144 = sadd.s32 %s143, 1
    %p147 = scmp.eq.s32.totalorder %s15, 1
    %p148 = scmp.ne.s32.totalorder %s143, %s145
    %p149 = scmp.eq.s32.totalorder %s15, 0
    %p150 = por %p148, %p149
    %p151 = scmp.ne.s32.totalorder %s143, %s145
    %p152 = scmp.eq.s32.totalorder %s20, 1
    %p153 = por %p151, %p152
    %p154 = scmp.ne.s32.totalorder %s145, %s146
    %p155 = scmp.eq.s32.totalorder %s20, 0
    %p156 = por %p154, %p155
    %p157 = scmp.ne.s32.totalorder %s145, %s146
    %p158 = scmp.eq.s32.totalorder %s21, 1
    %p159 = por %p157, %p158
    %p161 = scmp.ne.s32.totalorder %s146, %s160
    %p162 = scmp.eq.s32.totalorder %s21, 0
    %p163 = por %p161, %p162
    %s165 = sadd.s32 %s164, 1
    %p168 = scmp.eq.s32.totalorder %s15, 1
    %p169 = scmp.ne.s32.totalorder %s164, %s166
    %p170 = scmp.eq.s32.totalorder %s15, 0
    %p171 = por %p169, %p170
    %p172 = scmp.ne.s32.totalorder %s164, %s166
    %p173 = scmp.eq.s32.totalorder %s20, 1
    %p174 = por %p172, %p173
    %p175 = scmp.ne.s32.totalorder %s166, %s167
    %p176 = scmp.eq.s32.totalorder %s20, 0
    %p177 = por %p175, %p176
    %p178 = scmp.ne.s32.totalorder %s166, %s167
    %p179 = scmp.eq.s32.totalorder %s21, 1
    %p180 = por %p178, %p179
    %p182 = scmp.ne.s32.totalorder %s167, %s181
    %p183 = scmp.eq.s32.totalorder %s21, 0
    %p184 = por %p182, %p183
    %s185 = ssub.s32 %s15, %s22
    %p186 = scmp.eq.s32.totalorder %s185, 0
    %s188 = sadd.s32 %s187, 1
    %s189 = scalar_select %p186, %s187, %s188
    %p192 = pneg %p186
    %p193 = scmp.eq.s32.totalorder %s15, 1
    %p194 = por %p192, %p193
    %p195 = scmp.ne.s32.totalorder %s187, %s190
    %p196 = scmp.eq.s32.totalorder %s15, 0
    %p197 = por %p195, %p196
    %p198 = scmp.ne.s32.totalorder %s187, %s190
    %p199 = scmp.eq.s32.totalorder %s20, 1
    %p200 = por %p198, %p199
    %p201 = scmp.ne.s32.totalorder %s190, %s191
    %p202 = scmp.eq.s32.totalorder %s20, 0
    %p203 = por %p201, %p202
    %p204 = scmp.ne.s32.totalorder %s190, %s191
    %p205 = scmp.eq.s32.totalorder %s21, 1
    %p206 = por %p204, %p205
    %p208 = scmp.ne.s32.totalorder %s191, %s207
    %p209 = scmp.eq.s32.totalorder %s21, 0
    %p210 = por %p208, %p209
    %s211 = ssub.s32 %s15, %s22
    %p212 = scmp.eq.s32.totalorder %s211, 0
    %s214 = sadd.s32 %s213, 1
    %s215 = scalar_select %p212, %s213, %s214
    %p218 = pneg %p212
    %p219 = scmp.eq.s32.totalorder %s15, 1
    %p220 = por %p218, %p219
    %p221 = scmp.ne.s32.totalorder %s213, %s216
    %p222 = scmp.eq.s32.totalorder %s15, 0
    %p223 = por %p221, %p222
    %p224 = scmp.ne.s32.totalorder %s213, %s216
    %p225 = scmp.eq.s32.totalorder %s20, 1
    %p226 = por %p224, %p225
    %p227 = scmp.ne.s32.totalorder %s216, %s217
    %p228 = scmp.eq.s32.totalorder %s20, 0
    %p229 = por %p227, %p228
    %p230 = scmp.ne.s32.totalorder %s216, %s217
    %p231 = scmp.eq.s32.totalorder %s21, 1
    %p232 = por %p230, %p231
    %p234 = scmp.ne.s32.totalorder %s217, %s233
    %p235 = scmp.eq.s32.totalorder %s21, 0
    %p236 = por %p234, %p235
    %p237 = scmp.le.s32.totalorder 1, %s15
    %p238 = scmp.lt.s32.totalorder %s15, 3
    %p239 = pnand %p237, %p238
    %p240 = pneg %p239
    // Predicated region
    $region9: #{process_gnn_forward.1} parent=5 // pred_check
      _
    $region10: #{process_gnn_forward.1} parent=5 // pred_check_branch
      %242 = sbr.rel (%p239) target = $region12
    $region11: #{process_gnn_forward.1} parent=5 // pred_region
      %s243 = ssub.s32 %s15, 1
      // Predicated region
      $region13: #{process_gnn_forward.1} parent=11 // pred_check
        %p244 = pneg %p114
      $region14: #{process_gnn_forward.1} parent=11 // pred_check_branch
        %246 = sbr.rel (%p244) target = $region16
      $region15: #{process_gnn_forward.1} parent=11 // pred_region
        _
      $region16: #{process_gnn_forward.1} parent=11 // pred_fallthru
        _
      // Predicated region
      $region17: #{process_gnn_forward.1} parent=11 // pred_check
        %p247 = pneg %p135
      $region18: #{process_gnn_forward.1} parent=11 // pred_check_branch
        %249 = sbr.rel (%p247) target = $region20
      $region19: #{process_gnn_forward.1} parent=11 // pred_region
        _
      $region20: #{process_gnn_forward.1} parent=11 // pred_fallthru
        _
      // Predicated region
      $region21: #{process_gnn_forward.1} parent=11 // pred_check
        %p250 = pneg %p156
      $region22: #{process_gnn_forward.1} parent=11 // pred_check_branch
        %252 = sbr.rel (%p250) target = $region24
      $region23: #{process_gnn_forward.1} parent=11 // pred_region
        _
      $region24: #{process_gnn_forward.1} parent=11 // pred_fallthru
        _
      // Predicated region
      $region25: #{process_gnn_forward.1} parent=11 // pred_check
        %p253 = pneg %p177
      $region26: #{process_gnn_forward.1} parent=11 // pred_check_branch
        %255 = sbr.rel (%p253) target = $region28
      $region27: #{process_gnn_forward.1} parent=11 // pred_region
        _
      $region28: #{process_gnn_forward.1} parent=11 // pred_fallthru
        _
    $region12: #{process_gnn_forward.1} parent=5 // pred_fallthru
      _
    %p256 = scmp.lt.s32.totalorder %s15, 2
    // Predicated region
    $region29: #{process_gnn_forward.1} parent=5 // pred_check
      %p257 = pneg %p256
    $region30: #{process_gnn_forward.1} parent=5 // pred_check_branch
      %259 = sbr.rel (%p257) target = $region32
    $region31: #{process_gnn_forward.1} parent=5 // pred_region
      // Predicated region
      $region33: #{process_gnn_forward.1} parent=31 // pred_check
        %p260 = pneg %p35
      $region34: #{process_gnn_forward.1} parent=31 // pred_check_branch
        %262 = sbr.rel (%p260) target = $region36
      $region35: #{process_gnn_forward.1} parent=31 // pred_region
        %p263 = scmp.lt.s32.totalorder %s15, 1
        %s264 = scalar_select %p263, %s15, 1
        %s265 = smul.addr %s264, 16
        %s266 = smul.addr %s265, 8
        %s267 = scalar_lea.vmem %s0, %s266
      $region36: #{process_gnn_forward.1} parent=31 // pred_fallthru
        _
      // Predicated region
      $region37: #{process_gnn_forward.1} parent=31 // pred_check
        %p268 = pneg %p61
      $region38: #{process_gnn_forward.1} parent=31 // pred_check_branch
        %270 = sbr.rel (%p268) target = $region40
      $region39: #{process_gnn_forward.1} parent=31 // pred_region
        %p271 = scmp.lt.s32.totalorder %s15, 1
        %s272 = scalar_select %p271, %s15, 1
        %s273 = smul.addr %s272, 64
        %s274 = smul.addr %s273, 4
        %s275 = scalar_lea.vmem %s1, %s274
      $region40: #{process_gnn_forward.1} parent=31 // pred_fallthru
        _
      // Predicated region
      $region41: #{process_gnn_forward.1} parent=31 // pred_check
        %p276 = pneg %p87
      $region42: #{process_gnn_forward.1} parent=31 // pred_check_branch
        %278 = sbr.rel (%p276) target = $region44
      $region43: #{process_gnn_forward.1} parent=31 // pred_region
        %p279 = scmp.lt.s32.totalorder %s15, 1
        %s280 = scalar_select %p279, %s15, 1
        %s281 = smul.addr %s280, 16
        %s282 = smul.addr %s281, 4
        %s283 = scalar_lea.vmem %s2, %s282
      $region44: #{process_gnn_forward.1} parent=31 // pred_fallthru
        _
    $region32: #{process_gnn_forward.1} parent=5 // pred_fallthru
      _
    %p284 = scmp.le.s32.totalorder 1, %s15
    %p285 = scmp.lt.s32.totalorder %s15, 3
    %p286 = pnand %p284, %p285
    %p287 = pneg %p286
    // Predicated region
    $region45: #{process_gnn_forward.1} parent=5 // pred_check
      _
    $region46: #{process_gnn_forward.1} parent=5 // pred_check_branch
      %289 = sbr.rel (%p286) target = $region48
    $region47: #{process_gnn_forward.1} parent=5 // pred_region
      %s290 = ssub.s32 %s15, 1
      %p291 = scmp.lt.s32.totalorder %s20, 1
      %s292 = scalar_select %p291, %s20, 1
      %s293 = smul.addr %s292, 16
      %s294 = smul.addr %s293, 8
      %s295 = scalar_lea.vmem %s0, %s294
      %p296 = pneg %p41
      %p297 = pneg %p38
      %p298 = scmp.lt.s32.totalorder %s20, 1
      %s299 = scalar_select %p298, %s20, 1
      %s300 = smul.addr %s299, 64
      %s301 = smul.addr %s300, 4
      %s302 = scalar_lea.vmem %s1, %s301
      %p303 = pneg %p67
      %p304 = pneg %p64
      %p305 = scmp.lt.s32.totalorder %s20, 1
      %s306 = scalar_select %p305, %s20, 1
      %s307 = smul.addr %s306, 16
      %s308 = smul.addr %s307, 4
      %s309 = scalar_lea.vmem %s2, %s308
      %p310 = pneg %p93
      %p311 = pneg %p90
      %p312 = pneg %p114
      %p313 = pneg %p111
      %p314 = pneg %p135
      %p315 = pneg %p132
      %p316 = pneg %p156
      %p317 = pneg %p153
      %p318 = pneg %p177
      %p319 = pneg %p174
      %p320 = pneg %p203
      %p321 = pneg %p200
      %p322 = scmp.lt.s32.totalorder %s20, 1
      %s323 = scalar_select %p322, %s20, 1
      %s324 = smul.addr %s323, 16
      %s325 = smul.addr %s324, 8
      %s326 = scalar_lea.vmem %s7, %s325
      %p327 = pneg %p229
      %p328 = pneg %p226
      %p329 = scmp.lt.s32.totalorder %s20, 1
      %s330 = scalar_select %p329, %s20, 1
      %s331 = smul.addr %s330, 8
      %s332 = scalar_lea.vmem %s8, %s331
      %p333 = scmp.lt.s32.totalorder %s20, 1
      %s334 = scalar_select %p333, %s20, 1
      %s335 = smul.addr %s334, 16
      %s336 = smul.addr %s335, 8
      %s337 = scalar_lea.vmem %s0, %s336
      %p338 = scmp.lt.s32.totalorder %s20, 1
      %s339 = scalar_select %p338, %s20, 1
      %s340 = smul.addr %s339, 64
      %s341 = smul.addr %s340, 4
      %s342 = scalar_lea.vmem %s1, %s341
      %p343 = scmp.lt.s32.totalorder %s20, 1
      %s344 = scalar_select %p343, %s20, 1
      %s345 = smul.addr %s344, 16
      %s346 = smul.addr %s345, 4
      %s347 = scalar_lea.vmem %s2, %s346
      %p348 = scmp.lt.s32.totalorder %s20, 1
      %s349 = scalar_select %p348, %s20, 1
      %s350 = smul.addr %s349, 16
      %s351 = smul.addr %s350, 8
      %s352 = scalar_lea.vmem %s7, %s351
      %p353 = scmp.lt.s32.totalorder %s20, 1
      %s354 = scalar_select %p353, %s20, 1
      %s355 = smul.addr %s354, 8
      %s356 = scalar_lea.vmem %s8, %s355
      %v358 = vld [vmem:[%s337] sm:$0xff]
      %v359 = vld [vmem:[%s337 + $0x8] sm:$0xff]
      %v360 = vld [vmem:[%s337 + $0x10] sm:$0xff]
      %v361 = vld [vmem:[%s337 + $0x18] sm:$0xff]
      %v362 = vld [vmem:[%s337 + $0x20] sm:$0xff]
      %v363 = vld [vmem:[%s337 + $0x28] sm:$0xff]
      %v364 = vld [vmem:[%s337 + $0x30] sm:$0xff]
      %v365 = vld [vmem:[%s337 + $0x38] sm:$0xff]
      %v366 = vld [vmem:[%s337 + $0x40] sm:$0xff]
      %v367 = vld [vmem:[%s337 + $0x48] sm:$0xff]
      %v368 = vld [vmem:[%s337 + $0x50] sm:$0xff]
      %v369 = vld [vmem:[%s337 + $0x58] sm:$0xff]
      %v370 = vld [vmem:[%s337 + $0x60] sm:$0xff]
      %v371 = vld [vmem:[%s337 + $0x68] sm:$0xff]
      %v372 = vld [vmem:[%s337 + $0x70] sm:$0xff]
      %v373 = vld [vmem:[%s337 + $0x78] sm:$0xff]
      %v374 = vld [vmem:[%s4] sm:$0xff]
      %v375 = vld [vmem:[%s4 + $0x8] sm:$0xff]
      %v376 = vld [vmem:[%s4 + $0x10] sm:$0xff]
      %v377 = vld [vmem:[%s4 + $0x18] sm:$0xff]
      %v378 = vld [vmem:[%s4 + $0x20] sm:$0xff]
      %v379 = vld [vmem:[%s4 + $0x28] sm:$0xff]
      %v380 = vld [vmem:[%s4 + $0x30] sm:$0xff]
      %v381 = vld [vmem:[%s4 + $0x38] sm:$0xff]
      %v382 = vld [vmem:[%s4 + $0x40] sm:$0xff]
      %v383 = vld [vmem:[%s4 + $0x48] sm:$0xff]
      %v384 = vld [vmem:[%s4 + $0x50] sm:$0xff]
      %v385 = vld [vmem:[%s4 + $0x58] sm:$0xff]
      %v386 = vld [vmem:[%s4 + $0x60] sm:$0xff]
      %v387 = vld [vmem:[%s4 + $0x68] sm:$0xff]
      %v388 = vld [vmem:[%s4 + $0x70] sm:$0xff]
      %v389 = vld [vmem:[%s5] sm:$0xff]
      %v390 = vld [vmem:[%s5 + $0x8] sm:$0xff]
      %v391 = vld [vmem:[%s5 + $0x10] sm:$0xff]
      %v392 = vld [vmem:[%s5 + $0x18] sm:$0xff]
      %v393 = vld [vmem:[%s5 + $0x20] sm:$0xff]
      %v394 = vmul.f32 %v358, %v358
      %v395 = vmul.f32 %v359, %v359
      %v396 = vmul.f32 %v360, %v360
      %v397 = vmul.f32 %v361, %v361
      %v398 = vmul.f32 %v362, %v362
      %v399 = vmul.f32 %v363, %v363
      %v400 = vmul.f32 %v364, %v364
      %v401 = vmul.f32 %v365, %v365
      %v402 = vmul.f32 %v366, %v366
      %v403 = vmul.f32 %v367, %v367
      %v404 = vmul.f32 %v368, %v368
      %v405 = vmul.f32 %v369, %v369
      %v406 = vmul.f32 %v370, %v370
      %v407 = vmul.f32 %v371, %v371
      %v408 = vmul.f32 %v372, %v372
      %v409 = vmul.f32 %v373, %v373
      %vm410 = vcmask 64512
      %v411 = vsel %vm410, %v394, 0.0
      %412 = vadd.xlane.f32.xlu0 %v411
      %v413 = vpop.xlane.xlu0 %412
      %v414 = vsel %vm410, %v395, 0.0
      %415 = vadd.xlane.f32.xlu0 %v414
      %v416 = vpop.xlane.xlu0 %415
      %v417 = vsel %vm410, %v396, 0.0
      %418 = vadd.xlane.f32.xlu0 %v417
      %v419 = vpop.xlane.xlu0 %418
      %v420 = vsel %vm410, %v397, 0.0
      %421 = vadd.xlane.f32.xlu0 %v420
      %v422 = vpop.xlane.xlu0 %421
      %v423 = vsel %vm410, %v398, 0.0
      %424 = vadd.xlane.f32.xlu0 %v423
      %v425 = vpop.xlane.xlu0 %424
      %v426 = vsel %vm410, %v399, 0.0
      %427 = vadd.xlane.f32.xlu0 %v426
      %v428 = vpop.xlane.xlu0 %427
      %v429 = vsel %vm410, %v400, 0.0
      %430 = vadd.xlane.f32.xlu0 %v429
      %v431 = vpop.xlane.xlu0 %430
      %v432 = vsel %vm410, %v401, 0.0
      %433 = vadd.xlane.f32.xlu0 %v432
      %v434 = vpop.xlane.xlu0 %433
      %v435 = vsel %vm410, %v402, 0.0
      %436 = vadd.xlane.f32.xlu0 %v435
      %v437 = vpop.xlane.xlu0 %436
      %v438 = vsel %vm410, %v403, 0.0
      %439 = vadd.xlane.f32.xlu0 %v438
      %v440 = vpop.xlane.xlu0 %439
      %v441 = vsel %vm410, %v404, 0.0
      %442 = vadd.xlane.f32.xlu0 %v441
      %v443 = vpop.xlane.xlu0 %442
      %v444 = vsel %vm410, %v405, 0.0
      %445 = vadd.xlane.f32.xlu0 %v444
      %v446 = vpop.xlane.xlu0 %445
      %v447 = vsel %vm410, %v406, 0.0
      %448 = vadd.xlane.f32.xlu0 %v447
      %v449 = vpop.xlane.xlu0 %448
      %v450 = vsel %vm410, %v407, 0.0
      %451 = vadd.xlane.f32.xlu0 %v450
      %v452 = vpop.xlane.xlu0 %451
      %v453 = vsel %vm410, %v408, 0.0
      %454 = vadd.xlane.f32.xlu0 %v453
      %v455 = vpop.xlane.xlu0 %454
      %v456 = vsel %vm410, %v409, 0.0
      %457 = vadd.xlane.f32.xlu0 %v456
      %v458 = vpop.xlane.xlu0 %457
      %v459 = vrsqrt.pop %v413
      %v460 = vmul.f32 %v413, %v459
      %vm461 = vcmp.eq.f32.partialorder %v413, inf
      %v462 = vsel %vm461, %v413, %v460
      %vm463 = vcmp.eq.f32.partialorder %v413, 0.0
      %v464 = vand.u32 %v413, 2147483648
      %v465 = vsel %vm463, %v464, %v462
      %v466 = vrsqrt.pop %v416
      %v467 = vmul.f32 %v416, %v466
      %vm468 = vcmp.eq.f32.partialorder %v416, inf
      %v469 = vsel %vm468, %v416, %v467
      %vm470 = vcmp.eq.f32.partialorder %v416, 0.0
      %v471 = vand.u32 %v416, 2147483648
      %v472 = vsel %vm470, %v471, %v469
      %v473 = vrsqrt.pop %v419
      %v474 = vmul.f32 %v419, %v473
      %vm475 = vcmp.eq.f32.partialorder %v419, inf
      %v476 = vsel %vm475, %v419, %v474
      %vm477 = vcmp.eq.f32.partialorder %v419, 0.0
      %v478 = vand.u32 %v419, 2147483648
      %v479 = vsel %vm477, %v478, %v476
      %v480 = vrsqrt.pop %v422
      %v481 = vmul.f32 %v422, %v480
      %vm482 = vcmp.eq.f32.partialorder %v422, inf
      %v483 = vsel %vm482, %v422, %v481
      %vm484 = vcmp.eq.f32.partialorder %v422, 0.0
      %v485 = vand.u32 %v422, 2147483648
      %v486 = vsel %vm484, %v485, %v483
      %v487 = vrsqrt.pop %v425
      %v488 = vmul.f32 %v425, %v487
      %vm489 = vcmp.eq.f32.partialorder %v425, inf
      %v490 = vsel %vm489, %v425, %v488
      %vm491 = vcmp.eq.f32.partialorder %v425, 0.0
      %v492 = vand.u32 %v425, 2147483648
      %v493 = vsel %vm491, %v492, %v490
      %v494 = vrsqrt.pop %v428
      %v495 = vmul.f32 %v428, %v494
      %vm496 = vcmp.eq.f32.partialorder %v428, inf
      %v497 = vsel %vm496, %v428, %v495
      %vm498 = vcmp.eq.f32.partialorder %v428, 0.0
      %v499 = vand.u32 %v428, 2147483648
      %v500 = vsel %vm498, %v499, %v497
      %v501 = vrsqrt.pop %v431
      %v502 = vmul.f32 %v431, %v501
      %vm503 = vcmp.eq.f32.partialorder %v431, inf
      %v504 = vsel %vm503, %v431, %v502
      %vm505 = vcmp.eq.f32.partialorder %v431, 0.0
      %v506 = vand.u32 %v431, 2147483648
      %v507 = vsel %vm505, %v506, %v504
      %v508 = vrsqrt.pop %v434
      %v509 = vmul.f32 %v434, %v508
      %vm510 = vcmp.eq.f32.partialorder %v434, inf
      %v511 = vsel %vm510, %v434, %v509
      %vm512 = vcmp.eq.f32.partialorder %v434, 0.0
      %v513 = vand.u32 %v434, 2147483648
      %v514 = vsel %vm512, %v513, %v511
      %v515 = vrsqrt.pop %v437
      %v516 = vmul.f32 %v437, %v515
      %vm517 = vcmp.eq.f32.partialorder %v437, inf
      %v518 = vsel %vm517, %v437, %v516
      %vm519 = vcmp.eq.f32.partialorder %v437, 0.0
      %v520 = vand.u32 %v437, 2147483648
      %v521 = vsel %vm519, %v520, %v518
      %v522 = vrsqrt.pop %v440
      %v523 = vmul.f32 %v440, %v522
      %vm524 = vcmp.eq.f32.partialorder %v440, inf
      %v525 = vsel %vm524, %v440, %v523
      %vm526 = vcmp.eq.f32.partialorder %v440, 0.0
      %v527 = vand.u32 %v440, 2147483648
      %v528 = vsel %vm526, %v527, %v525
      %v529 = vrsqrt.pop %v443
      %v530 = vmul.f32 %v443, %v529
      %vm531 = vcmp.eq.f32.partialorder %v443, inf
      %v532 = vsel %vm531, %v443, %v530
      %vm533 = vcmp.eq.f32.partialorder %v443, 0.0
      %v534 = vand.u32 %v443, 2147483648
      %v535 = vsel %vm533, %v534, %v532
      %v536 = vrsqrt.pop %v446
      %v537 = vmul.f32 %v446, %v536
      %vm538 = vcmp.eq.f32.partialorder %v446, inf
      %v539 = vsel %vm538, %v446, %v537
      %vm540 = vcmp.eq.f32.partialorder %v446, 0.0
      %v541 = vand.u32 %v446, 2147483648
      %v542 = vsel %vm540, %v541, %v539
      %v543 = vrsqrt.pop %v449
      %v544 = vmul.f32 %v449, %v543
      %vm545 = vcmp.eq.f32.partialorder %v449, inf
      %v546 = vsel %vm545, %v449, %v544
      %vm547 = vcmp.eq.f32.partialorder %v449, 0.0
      %v548 = vand.u32 %v449, 2147483648
      %v549 = vsel %vm547, %v548, %v546
      %v550 = vrsqrt.pop %v452
      %v551 = vmul.f32 %v452, %v550
      %vm552 = vcmp.eq.f32.partialorder %v452, inf
      %v553 = vsel %vm552, %v452, %v551
      %vm554 = vcmp.eq.f32.partialorder %v452, 0.0
      %v555 = vand.u32 %v452, 2147483648
      %v556 = vsel %vm554, %v555, %v553
      %v557 = vrsqrt.pop %v455
      %v558 = vmul.f32 %v455, %v557
      %vm559 = vcmp.eq.f32.partialorder %v455, inf
      %v560 = vsel %vm559, %v455, %v558
      %vm561 = vcmp.eq.f32.partialorder %v455, 0.0
      %v562 = vand.u32 %v455, 2147483648
      %v563 = vsel %vm561, %v562, %v560
      %v564 = vrsqrt.pop %v458
      %v565 = vmul.f32 %v458, %v564
      %vm566 = vcmp.eq.f32.partialorder %v458, inf
      %v567 = vsel %vm566, %v458, %v565
      %vm568 = vcmp.eq.f32.partialorder %v458, 0.0
      %v569 = vand.u32 %v458, 2147483648
      %v570 = vsel %vm568, %v569, %v567
      %v571 = vadd.f32 %v465, 1e-06
      %v572 = vadd.f32 %v472, 1e-06
      %v573 = vadd.f32 %v479, 1e-06
      %v574 = vadd.f32 %v486, 1e-06
      %v575 = vadd.f32 %v493, 1e-06
      %v576 = vadd.f32 %v500, 1e-06
      %v577 = vadd.f32 %v507, 1e-06
      %v578 = vadd.f32 %v514, 1e-06
      %v579 = vadd.f32 %v521, 1e-06
      %v580 = vadd.f32 %v528, 1e-06
      %v581 = vadd.f32 %v535, 1e-06
      %v582 = vadd.f32 %v542, 1e-06
      %v583 = vadd.f32 %v549, 1e-06
      %v584 = vadd.f32 %v556, 1e-06
      %v585 = vadd.f32 %v563, 1e-06
      %v586 = vadd.f32 %v570, 1e-06
      %v587 = vrcp.pop %v571
      %v588 = vmul.f32 %v358, %v587
      %v589 = vrcp.pop %v572
      %v590 = vmul.f32 %v359, %v589
      %v591 = vrcp.pop %v573
      %v592 = vmul.f32 %v360, %v591
      %v593 = vrcp.pop %v574
      %v594 = vmul.f32 %v361, %v593
      %v595 = vrcp.pop %v575
      %v596 = vmul.f32 %v362, %v595
      %v597 = vrcp.pop %v576
      %v598 = vmul.f32 %v363, %v597
      %v599 = vrcp.pop %v577
      %v600 = vmul.f32 %v364, %v599
      %v601 = vrcp.pop %v578
      %v602 = vmul.f32 %v365, %v601
      %v603 = vrcp.pop %v579
      %v604 = vmul.f32 %v366, %v603
      %v605 = vrcp.pop %v580
      %v606 = vmul.f32 %v367, %v605
      %v607 = vrcp.pop %v581
      %v608 = vmul.f32 %v368, %v607
      %v609 = vrcp.pop %v582
      %v610 = vmul.f32 %v369, %v609
      %v611 = vrcp.pop %v583
      %v612 = vmul.f32 %v370, %v611
      %v613 = vrcp.pop %v584
      %v614 = vmul.f32 %v371, %v613
      %v615 = vrcp.pop %v585
      %v616 = vmul.f32 %v372, %v615
      %v617 = vrcp.pop %v586
      %v618 = vmul.f32 %v373, %v617
      %v619 = vlaneseq
      %v620 = vshrl.u32 %v619, 7
      %v621 = vsub.s32 0, %v620
      %v622 = vrot.slane %v375, %v621
      %v624 = vsel %vm410, %v588, 0
      %v627 = vsel %vm410, %v590, 0
      %v630 = vsel %vm410, %v592, 0
      %v633 = vsel %vm410, %v594, 0
      %v636 = vsel %vm410, %v596, 0
      %v639 = vsel %vm410, %v598, 0
      %v642 = vsel %vm410, %v600, 0
      %v645 = vsel %vm410, %v602, 0
      %v648 = vsel %vm410, %v604, 0
      %v651 = vsel %vm410, %v606, 0
      %v654 = vsel %vm410, %v608, 0
      %v657 = vsel %vm410, %v610, 0
      %v660 = vsel %vm410, %v612, 0
      %v663 = vsel %vm410, %v614, 0
      %v666 = vsel %vm410, %v616, 0
      %v669 = vsel %vm410, %v618, 0
      %671 = vmatprep.subr.mxu0 0.0
      %672 = vmatpush1.msra.mxu0 %v374
      %673 = vmatprep.subr.mxu0 0.0
      %674 = vmatpush1.msra.mxu0 0.0
      %675 = vmatprep.subr.mxu0 0.0
      %676 = vmatpush1.msra.mxu0 0.0
      %677 = vmatprep.subr.mxu0 0.0
      %678 = vmatpush1.msra.mxu0 0.0
      %679 = vmatprep.subr.mxu0 0.0
      %680 = vmatpush1.msra.mxu0 0.0
      %681 = vmatprep.subr.mxu0 0.0
      %682 = vmatpush1.msra.mxu0 0.0
      %683 = vmatprep.subr.mxu0 0.0
      %684 = vmatpush1.msra.mxu0 0.0
      %685 = vmatprep.subr.mxu0 0.0
      %686 = vmatpush1.msra.mxu0 0.0
      %687 = vmatprep.subr.mxu0 0.0
      %688 = vmatpush1.msra.mxu0 0.0
      %689 = vmatprep.subr.mxu0 0.0
      %690 = vmatpush1.msra.mxu0 0.0
      %691 = vmatprep.subr.mxu0 0.0
      %692 = vmatpush1.msra.mxu0 0.0
      %693 = vmatprep.subr.mxu0 0.0
      %694 = vmatpush1.msra.mxu0 0.0
      %695 = vmatprep.subr.mxu0 0.0
      %696 = vmatpush1.msra.mxu0 0.0
      %697 = vmatprep.subr.mxu0 0.0
      %698 = vmatpush1.msra.mxu0 0.0
      %699 = vmatprep.subr.mxu0 0.0
      %700 = vmatpush1.msra.mxu0 0.0
      %701 = vmatprep.subr.mxu0 0.0
      %702 = vmatpush1.msra.mxu0 0.0
      %703 = vmatprep.subr.mxu0 0.0
      %704 = vmatpush1.msra.mxu0 0.0
      %705 = vmatprep.subr.mxu0 0.0
      %706 = vmatpush1.msra.mxu0 0.0
      %707 = vmatprep.subr.mxu0 0.0
      %708 = vmatpush1.msra.mxu0 0.0
      %709 = vmatprep.subr.mxu0 0.0
      %710 = vmatpush1.msra.mxu0 0.0
      %711 = vmatprep.subr.mxu0 0.0
      %712 = vmatpush1.msra.mxu0 0.0
      %713 = vmatprep.subr.mxu0 0.0
      %714 = vmatpush1.msra.mxu0 0.0
      %715 = vmatprep.subr.mxu0 0.0
      %716 = vmatpush1.msra.mxu0 0.0
      %717 = vmatprep.subr.mxu0 0.0
      %718 = vmatpush1.msra.mxu0 0.0
      %719 = vmatprep.subr.mxu0 0.0
      %720 = vmatpush1.msra.mxu0 0.0
      %721 = vmatprep.subr.mxu0 0.0
      %722 = vmatpush1.msra.mxu0 0.0
      %723 = vmatprep.subr.mxu0 0.0
      %724 = vmatpush1.msra.mxu0 0.0
      %725 = vmatprep.subr.mxu0 0.0
      %726 = vmatpush1.msra.mxu0 0.0
      %727 = vmatprep.subr.mxu0 0.0
      %728 = vmatpush1.msra.mxu0 0.0
      %729 = vmatprep.subr.mxu0 0.0
      %730 = vmatpush1.msra.mxu0 0.0
      %731 = vmatprep.subr.mxu0 0.0
      %732 = vmatpush1.msra.mxu0 0.0
      %733 = vmatprep.subr.mxu0 0.0
      %734 = vmatpush1.msra.mxu0 0.0
      %735 = vmatprep.mubr.f32.mxu0 0.0
      %736 = vmatmul.mubr.f32.gmra.mrb[0].mxu0 %v624
      %v737 = vpop.f32.mrb[0].mxu0
      %v738 = vadd.f32 %v622, %v737
      %v739 = vpop.f32.mrb[0].mxu0
      %740 = vmatprep.mubr.f32.mxu0 0.0
      %741 = vmatmul.mubr.f32.gmra.mrb[0].mxu0 %v627
      %v742 = vpop.f32.mrb[0].mxu0
      %v743 = vadd.f32 %v622, %v742
      %v744 = vpop.f32.mrb[0].mxu0
      %745 = vmatprep.mubr.f32.mxu0 0.0
      %746 = vmatmul.mubr.f32.gmra.mrb[0].mxu0 %v630
      %v747 = vpop.f32.mrb[0].mxu0
      %v748 = vadd.f32 %v622, %v747
      %v749 = vpop.f32.mrb[0].mxu0
      %750 = vmatprep.mubr.f32.mxu0 0.0
      %751 = vmatmul.mubr.f32.gmra.mrb[0].mxu0 %v633
      %v752 = vpop.f32.mrb[0].mxu0
      %v753 = vadd.f32 %v622, %v752
      %v754 = vpop.f32.mrb[0].mxu0
      %755 = vmatprep.mubr.f32.mxu0 0.0
      %756 = vmatmul.mubr.f32.gmra.mrb[0].mxu0 %v636
      %v757 = vpop.f32.mrb[0].mxu0
      %v758 = vadd.f32 %v622, %v757
      %v759 = vpop.f32.mrb[0].mxu0
      %760 = vmatprep.mubr.f32.mxu0 0.0
      %761 = vmatmul.mubr.f32.gmra.mrb[0].mxu0 %v639
      %v762 = vpop.f32.mrb[0].mxu0
      %v763 = vadd.f32 %v622, %v762
      %v764 = vpop.f32.mrb[0].mxu0
      %765 = vmatprep.mubr.f32.mxu0 0.0
      %766 = vmatmul.mubr.f32.gmra.mrb[0].mxu0 %v642
      %v767 = vpop.f32.mrb[0].mxu0
      %v768 = vadd.f32 %v622, %v767
      %v769 = vpop.f32.mrb[0].mxu0
      %770 = vmatprep.mubr.f32.mxu0 0.0
      %771 = vmatmul.mubr.f32.gmra.mrb[0].mxu0 %v645
      %v772 = vpop.f32.mrb[0].mxu0
      %v773 = vadd.f32 %v622, %v772
      %v774 = vpop.f32.mrb[0].mxu0
      %775 = vmatprep.mubr.f32.mxu0 0.0
      %776 = vmatmul.mubr.f32.gmra.mrb[0].mxu0 %v648
      %v777 = vpop.f32.mrb[0].mxu0
      %v778 = vadd.f32 %v622, %v777
      %v779 = vpop.f32.mrb[0].mxu0
      %780 = vmatprep.mubr.f32.mxu0 0.0
      %781 = vmatmul.mubr.f32.gmra.mrb[0].mxu0 %v651
      %v782 = vpop.f32.mrb[0].mxu0
      %v783 = vadd.f32 %v622, %v782
      %v784 = vpop.f32.mrb[0].mxu0
      %785 = vmatprep.mubr.f32.mxu0 0.0
      %786 = vmatmul.mubr.f32.gmra.mrb[0].mxu0 %v654
      %v787 = vpop.f32.mrb[0].mxu0
      %v788 = vadd.f32 %v622, %v787
      %v789 = vpop.f32.mrb[0].mxu0
      %790 = vmatprep.mubr.f32.mxu0 0.0
      %791 = vmatmul.mubr.f32.gmra.mrb[0].mxu0 %v657
      %v792 = vpop.f32.mrb[0].mxu0
      %v793 = vadd.f32 %v622, %v792
      %v794 = vpop.f32.mrb[0].mxu0
      %795 = vmatprep.mubr.f32.mxu0 0.0
      %796 = vmatmul.mubr.f32.gmra.mrb[0].mxu0 %v660
      %v797 = vpop.f32.mrb[0].mxu0
      %v798 = vadd.f32 %v622, %v797
      %v799 = vpop.f32.mrb[0].mxu0
      %800 = vmatprep.mubr.f32.mxu0 0.0
      %801 = vmatmul.mubr.f32.gmra.mrb[0].mxu0 %v663
      %v802 = vpop.f32.mrb[0].mxu0
      %v803 = vadd.f32 %v622, %v802
      %v804 = vpop.f32.mrb[0].mxu0
      %805 = vmatprep.mubr.f32.mxu0 0.0
      %806 = vmatmul.mubr.f32.gmra.mrb[0].mxu0 %v666
      %v807 = vpop.f32.mrb[0].mxu0
      %v808 = vadd.f32 %v622, %v807
      %v809 = vpop.f32.mrb[0].mxu0
      %810 = vmatprep.mubr.f32.mxu0 0.0
      %811 = vmatmul.mubr.f32.gmra.mrb[0].mxu0 %v669
      %v812 = vpop.f32.mrb[0].mxu0
      %v813 = vadd.f32 %v622, %v812
      %v814 = vpop.f32.mrb[0].mxu0
      %815 = vdwg.mxu0
      %v816 = vpack.c.bf16 %v743, %v738
      %v817 = vpack.c.bf16 %v753, %v748
      %v818 = vpack.c.bf16 %v763, %v758
      %v819 = vpack.c.bf16 %v773, %v768
      %v820 = vpack.c.bf16 %v783, %v778
      %v821 = vpack.c.bf16 %v793, %v788
      %v822 = vpack.c.bf16 %v803, %v798
      %v823 = vpack.c.bf16 %v813, %v808
      %v828 = vunpack.c.l.b16 %v389
      %v829 = vunpack.c.h.b16 %v389
      %v830 = vunpack.c.l.b16 %v390
      %v831 = vunpack.c.h.b16 %v390
      %v832 = vunpack.c.l.b16 %v391
      %v833 = vunpack.c.h.b16 %v391
      %v834 = vunpack.c.l.b16 %v392
      %v835 = vunpack.c.h.b16 %v392
      %v836 = vpack.c.b16 %v830, %v828
      %v837 = vpack.c.b16 %v831, %v829
      %v838 = vpack.c.b16 %v834, %v832
      %v839 = vpack.c.b16 %v835, %v833
      %vm844 = vcmask 261120
      %v846 = vsel %vm844, %v816, 0
      %v849 = vsel %vm844, %v817, 0
      %v852 = vsel %vm844, %v818, 0
      %v855 = vsel %vm844, %v819, 0
      %v858 = vsel %vm844, %v820, 0
      %v861 = vsel %vm844, %v821, 0
      %v864 = vsel %vm844, %v822, 0
      %v867 = vsel %vm844, %v823, 0
      %869 = vmatprep.subr.bf16.mxu0 %v837
      %870 = vmatpush1.bf16.msra.mxu0 %v836
      %871 = vmatprep.subr.bf16.mxu0 %v839
      %872 = vmatpush1.bf16.msra.mxu0 %v838
      %873 = vmatprep.subr.bf16.mxu0 0
      %874 = vmatpush1.bf16.msra.mxu0 0
      %875 = vmatprep.subr.bf16.mxu0 0
      %876 = vmatpush1.bf16.msra.mxu0 0
      %877 = vmatprep.subr.bf16.mxu0 0
      %878 = vmatpush1.bf16.msra.mxu0 0
      %879 = vmatprep.subr.bf16.mxu0 0
      %880 = vmatpush1.bf16.msra.mxu0 0
      %881 = vmatprep.subr.bf16.mxu0 0
      %882 = vmatpush1.bf16.msra.mxu0 0
      %883 = vmatprep.subr.bf16.mxu0 0
      %884 = vmatpush1.bf16.msra.mxu0 0
      %885 = vmatprep.subr.bf16.mxu0 0
      %886 = vmatpush1.bf16.msra.mxu0 0
      %887 = vmatprep.subr.bf16.mxu0 0
      %888 = vmatpush1.bf16.msra.mxu0 0
      %889 = vmatprep.subr.bf16.mxu0 0
      %890 = vmatpush1.bf16.msra.mxu0 0
      %891 = vmatprep.subr.bf16.mxu0 0
      %892 = vmatpush1.bf16.msra.mxu0 0
      %893 = vmatprep.subr.bf16.mxu0 0
      %894 = vmatpush1.bf16.msra.mxu0 0
      %895 = vmatprep.subr.bf16.mxu0 0
      %896 = vmatpush1.bf16.msra.mxu0 0
      %897 = vmatprep.subr.bf16.mxu0 0
      %898 = vmatpush1.bf16.msra.mxu0 0
      %899 = vmatprep.subr.bf16.mxu0 0
      %900 = vmatpush1.bf16.msra.mxu0 0
      %901 = vmatprep.mubr.bf16.mxu0 0
      %902 = vmatmul.mubr.bf16.gmra.mrb[0].mxu0 %v846
      %v903 = vpop.f32.mrb[0].mxu0
      %v904 = vadd.f32 0.0, %v903
      %v905 = vpop.f32.mrb[0].mxu0
      %v906 = vadd.f32 0.0, %v905
      %v907 = vpop.f32.mrb[0].mxu0
      %v908 = vadd.f32 0.0, %v907
      %v909 = vpop.f32.mrb[0].mxu0
      %v910 = vadd.f32 0.0, %v909
      %911 = vmatprep.mubr.bf16.mxu0 0
      %912 = vmatmul.mubr.bf16.gmra.mrb[0].mxu0 %v849
      %v913 = vpop.f32.mrb[0].mxu0
      %v914 = vadd.f32 0.0, %v913
      %v915 = vpop.f32.mrb[0].mxu0
      %v916 = vadd.f32 0.0, %v915
      %v917 = vpop.f32.mrb[0].mxu0
      %v918 = vadd.f32 0.0, %v917
      %v919 = vpop.f32.mrb[0].mxu0
      %v920 = vadd.f32 0.0, %v919
      %921 = vmatprep.mubr.bf16.mxu0 0
      %922 = vmatmul.mubr.bf16.gmra.mrb[0].mxu0 %v852
      %v923 = vpop.f32.mrb[0].mxu0
      %v924 = vadd.f32 0.0, %v923
      %v925 = vpop.f32.mrb[0].mxu0
      %v926 = vadd.f32 0.0, %v925
      %v927 = vpop.f32.mrb[0].mxu0
      %v928 = vadd.f32 0.0, %v927
      %v929 = vpop.f32.mrb[0].mxu0
      %v930 = vadd.f32 0.0, %v929
      %931 = vmatprep.mubr.bf16.mxu0 0
      %932 = vmatmul.mubr.bf16.gmra.mrb[0].mxu0 %v855
      %v933 = vpop.f32.mrb[0].mxu0
      %v934 = vadd.f32 0.0, %v933
      %v935 = vpop.f32.mrb[0].mxu0
      %v936 = vadd.f32 0.0, %v935
      %v937 = vpop.f32.mrb[0].mxu0
      %v938 = vadd.f32 0.0, %v937
      %v939 = vpop.f32.mrb[0].mxu0
      %v940 = vadd.f32 0.0, %v939
      %941 = vmatprep.mubr.bf16.mxu0 0
      %942 = vmatmul.mubr.bf16.gmra.mrb[0].mxu0 %v858
      %v943 = vpop.f32.mrb[0].mxu0
      %v944 = vadd.f32 0.0, %v943
      %v945 = vpop.f32.mrb[0].mxu0
      %v946 = vadd.f32 0.0, %v945
      %v947 = vpop.f32.mrb[0].mxu0
      %v948 = vadd.f32 0.0, %v947
      %v949 = vpop.f32.mrb[0].mxu0
      %v950 = vadd.f32 0.0, %v949
      %951 = vmatprep.mubr.bf16.mxu0 0
      %952 = vmatmul.mubr.bf16.gmra.mrb[0].mxu0 %v861
      %v953 = vpop.f32.mrb[0].mxu0
      %v954 = vadd.f32 0.0, %v953
      %v955 = vpop.f32.mrb[0].mxu0
      %v956 = vadd.f32 0.0, %v955
      %v957 = vpop.f32.mrb[0].mxu0
      %v958 = vadd.f32 0.0, %v957
      %v959 = vpop.f32.mrb[0].mxu0
      %v960 = vadd.f32 0.0, %v959
      %961 = vmatprep.mubr.bf16.mxu0 0
      %962 = vmatmul.mubr.bf16.gmra.mrb[0].mxu0 %v864
      %v963 = vpop.f32.mrb[0].mxu0
      %v964 = vadd.f32 0.0, %v963
      %v965 = vpop.f32.mrb[0].mxu0
      %v966 = vadd.f32 0.0, %v965
      %v967 = vpop.f32.mrb[0].mxu0
      %v968 = vadd.f32 0.0, %v967
      %v969 = vpop.f32.mrb[0].mxu0
      %v970 = vadd.f32 0.0, %v969
      %971 = vmatprep.mubr.bf16.mxu0 0
      %972 = vmatmul.mubr.bf16.gmra.mrb[0].mxu0 %v867
      %v973 = vpop.f32.mrb[0].mxu0
      %v974 = vadd.f32 0.0, %v973
      %v975 = vpop.f32.mrb[0].mxu0
      %v976 = vadd.f32 0.0, %v975
      %v977 = vpop.f32.mrb[0].mxu0
      %v978 = vadd.f32 0.0, %v977
      %v979 = vpop.f32.mrb[0].mxu0
      %v980 = vadd.f32 0.0, %v979
      %981 = vdwg.mxu0
      %v982 = vpack.c.bf16 %v908, %v904
      %v983 = vpack.c.bf16 %v918, %v914
      %v984 = vpack.c.bf16 %v928, %v924
      %v985 = vpack.c.bf16 %v938, %v934
      %v986 = vpack.c.bf16 %v948, %v944
      %v987 = vpack.c.bf16 %v958, %v954
      %v988 = vpack.c.bf16 %v968, %v964
      %v989 = vpack.c.bf16 %v978, %v974
      %v991 = vsel %vm844, %v393, 0
      %993 = vmatprep.subr.bf16.mxu0 0
      %994 = vmatpush1.bf16.xpose.msra.mxu0 %v846
      %995 = vmatprep.subr.bf16.mxu0 0
      %996 = vmatpush1.bf16.xpose.msra.mxu0 %v849
      %997 = vmatprep.subr.bf16.mxu0 0
      %998 = vmatpush1.bf16.xpose.msra.mxu0 %v852
      %999 = vmatprep.subr.bf16.mxu0 0
      %1000 = vmatpush1.bf16.xpose.msra.mxu0 %v855
      %1001 = vmatprep.subr.bf16.mxu0 0
      %1002 = vmatpush1.bf16.xpose.msra.mxu0 %v858
      %1003 = vmatprep.subr.bf16.mxu0 0
      %1004 = vmatpush1.bf16.xpose.msra.mxu0 %v861
      %1005 = vmatprep.subr.bf16.mxu0 0
      %1006 = vmatpush1.bf16.xpose.msra.mxu0 %v864
      %1007 = vmatprep.subr.bf16.mxu0 0
      %1008 = vmatpush1.bf16.xpose.msra.mxu0 %v867
      %1009 = vmatprep.subr.bf16.mxu0 0
      %1010 = vmatpush1.bf16.xpose.msra.mxu0 0
      %1011 = vmatprep.subr.bf16.mxu0 0
      %1012 = vmatpush1.bf16.xpose.msra.mxu0 0
      %1013 = vmatprep.subr.bf16.mxu0 0
      %1014 = vmatpush1.bf16.xpose.msra.mxu0 0
      %1015 = vmatprep.subr.bf16.mxu0 0
      %1016 = vmatpush1.bf16.xpose.msra.mxu0 0
      %1017 = vmatprep.subr.bf16.mxu0 0
      %1018 = vmatpush1.bf16.xpose.msra.mxu0 0
      %1019 = vmatprep.subr.bf16.mxu0 0
      %1020 = vmatpush1.bf16.xpose.msra.mxu0 0
      %1021 = vmatprep.subr.bf16.mxu0 0
      %1022 = vmatpush1.bf16.xpose.msra.mxu0 0
      %1023 = vmatprep.subr.bf16.mxu0 0
      %1024 = vmatpush1.bf16.xpose.msra.mxu0 0
      %1025 = vmatprep.mubr.bf16.mxu0 0
      %1026 = vmatmul.mubr.bf16.gmra.mrb[0].mxu0 %v991
      %v1027 = vpop.f32.mrb[0].mxu0
      %v1028 = vadd.f32 0.0, %v1027
      %v1029 = vpop.f32.mrb[0].mxu0
      %v1030 = vpop.f32.mrb[0].mxu0
      %v1031 = vpop.f32.mrb[0].mxu0
      %1032 = vdwg.mxu0
      %1034 = vset.pattern.permute.xlu0 0
      %1035 = vperm.xlu0 %1034, %v906
      %v1036 = vpop.permute.xlu0 %1035
      %1039 = vset.pattern.permute.xlu0 0
      %1040 = vperm.xlu0 %1039, %v910
      %v1041 = vpop.permute.xlu0 %1040
      %1044 = vset.pattern.permute.xlu0 0
      %1045 = vperm.xlu0 %1044, %v916
      %v1046 = vpop.permute.xlu0 %1045
      %1049 = vset.pattern.permute.xlu0 0
      %1050 = vperm.xlu0 %1049, %v920
      %v1051 = vpop.permute.xlu0 %1050
      %1054 = vset.pattern.permute.xlu0 0
      %1055 = vperm.xlu0 %1054, %v926
      %v1056 = vpop.permute.xlu0 %1055
      %1059 = vset.pattern.permute.xlu0 0
      %1060 = vperm.xlu0 %1059, %v930
      %v1061 = vpop.permute.xlu0 %1060
      %1064 = vset.pattern.permute.xlu0 0
      %1065 = vperm.xlu0 %1064, %v936
      %v1066 = vpop.permute.xlu0 %1065
      %1069 = vset.pattern.permute.xlu0 0
      %1070 = vperm.xlu0 %1069, %v940
      %v1071 = vpop.permute.xlu0 %1070
      %1074 = vset.pattern.permute.xlu0 0
      %1075 = vperm.xlu0 %1074, %v946
      %v1076 = vpop.permute.xlu0 %1075
      %1079 = vset.pattern.permute.xlu0 0
      %1080 = vperm.xlu0 %1079, %v950
      %v1081 = vpop.permute.xlu0 %1080
      %1084 = vset.pattern.permute.xlu0 0
      %1085 = vperm.xlu0 %1084, %v956
      %v1086 = vpop.permute.xlu0 %1085
      %1089 = vset.pattern.permute.xlu0 0
      %1090 = vperm.xlu0 %1089, %v960
      %v1091 = vpop.permute.xlu0 %1090
      %1094 = vset.pattern.permute.xlu0 0
      %1095 = vperm.xlu0 %1094, %v966
      %v1096 = vpop.permute.xlu0 %1095
      %1099 = vset.pattern.permute.xlu0 0
      %1100 = vperm.xlu0 %1099, %v970
      %v1101 = vpop.permute.xlu0 %1100
      %1104 = vset.pattern.permute.xlu0 0
      %1105 = vperm.xlu0 %1104, %v976
      %v1106 = vpop.permute.xlu0 %1105
      %1109 = vset.pattern.permute.xlu0 0
      %1110 = vperm.xlu0 %1109, %v980
      %v1111 = vpop.permute.xlu0 %1110
      %v1113 = vlaneseq
      %v1114 = vshrl.u32 %v1113, 7
      %v1115 = vsub.s32 0, %v1114
      %v1116 = vrot.slane %v1028, %v1115
      %v1117 = vadd.f32 %v1036, %v1116
      %v1118 = vadd.f32 %v1041, %v1116
      %v1119 = vadd.f32 %v1046, %v1116
      %v1120 = vadd.f32 %v1051, %v1116
      %v1121 = vadd.f32 %v1056, %v1116
      %v1122 = vadd.f32 %v1061, %v1116
      %v1123 = vadd.f32 %v1066, %v1116
      %v1124 = vadd.f32 %v1071, %v1116
      %v1125 = vadd.f32 %v1076, %v1116
      %v1126 = vadd.f32 %v1081, %v1116
      %v1127 = vadd.f32 %v1086, %v1116
      %v1128 = vadd.f32 %v1091, %v1116
      %v1129 = vadd.f32 %v1096, %v1116
      %v1130 = vadd.f32 %v1101, %v1116
      %v1131 = vadd.f32 %v1106, %v1116
      %v1132 = vadd.f32 %v1111, %v1116
      %v1133 = vld [vmem:[%s342] sm:$0xf]
      %v1134 = vld [vmem:[%s342 + $0x4] sm:$0xf]
      %v1135 = vld [vmem:[%s342 + $0x8] sm:$0xf]
      %v1136 = vld [vmem:[%s342 + $0xc] sm:$0xf]
      %v1137 = vld [vmem:[%s342 + $0x10] sm:$0xf]
      %v1138 = vld [vmem:[%s342 + $0x14] sm:$0xf]
      %v1139 = vld [vmem:[%s342 + $0x18] sm:$0xf]
      %v1140 = vld [vmem:[%s342 + $0x1c] sm:$0xf]
      %v1141 = vld [vmem:[%s342 + $0x20] sm:$0xf]
      %v1142 = vld [vmem:[%s342 + $0x24] sm:$0xf]
      %v1143 = vld [vmem:[%s342 + $0x28] sm:$0xf]
      %v1144 = vld [vmem:[%s342 + $0x2c] sm:$0xf]
      %v1145 = vld [vmem:[%s342 + $0x30] sm:$0xf]
      %v1146 = vld [vmem:[%s342 + $0x34] sm:$0xf]
      %v1147 = vld [vmem:[%s342 + $0x38] sm:$0xf]
      %v1148 = vld [vmem:[%s342 + $0x3c] sm:$0xf]
      %v1149 = vunpack.c.l.bf16 %v1133
      %v1150 = vunpack.c.l.bf16 %v1134
      %v1151 = vunpack.c.l.bf16 %v1135
      %v1152 = vunpack.c.l.bf16 %v1136
      %v1153 = vunpack.c.l.bf16 %v1137
      %v1154 = vunpack.c.l.bf16 %v1138
      %v1155 = vunpack.c.l.bf16 %v1139
      %v1156 = vunpack.c.l.bf16 %v1140
      %v1157 = vunpack.c.l.bf16 %v1141
      %v1158 = vunpack.c.l.bf16 %v1142
      %v1159 = vunpack.c.l.bf16 %v1143
      %v1160 = vunpack.c.l.bf16 %v1144
      %v1161 = vunpack.c.l.bf16 %v1145
      %v1162 = vunpack.c.l.bf16 %v1146
      %v1163 = vunpack.c.l.bf16 %v1147
      %v1164 = vunpack.c.l.bf16 %v1148
      %v1165 = vadd.f32 %v1117, %v1149
      %v1166 = vadd.f32 %v1118, %v1150
      %v1167 = vadd.f32 %v1119, %v1151
      %v1168 = vadd.f32 %v1120, %v1152
      %v1169 = vadd.f32 %v1121, %v1153
      %v1170 = vadd.f32 %v1122, %v1154
      %v1171 = vadd.f32 %v1123, %v1155
      %v1172 = vadd.f32 %v1124, %v1156
      %v1173 = vadd.f32 %v1125, %v1157
      %v1174 = vadd.f32 %v1126, %v1158
      %v1175 = vadd.f32 %v1127, %v1159
      %v1176 = vadd.f32 %v1128, %v1160
      %v1177 = vadd.f32 %v1129, %v1161
      %v1178 = vadd.f32 %v1130, %v1162
      %v1179 = vadd.f32 %v1131, %v1163
      %v1180 = vadd.f32 %v1132, %v1164
      %v1181 = vmul.f32 %v1165, 0.2
      %v1182 = vmul.f32 %v1166, 0.2
      %v1183 = vmul.f32 %v1167, 0.2
      %v1184 = vmul.f32 %v1168, 0.2
      %v1185 = vmul.f32 %v1169, 0.2
      %v1186 = vmul.f32 %v1170, 0.2
      %v1187 = vmul.f32 %v1171, 0.2
      %v1188 = vmul.f32 %v1172, 0.2
      %v1189 = vmul.f32 %v1173, 0.2
      %v1190 = vmul.f32 %v1174, 0.2
      %v1191 = vmul.f32 %v1175, 0.2
      %v1192 = vmul.f32 %v1176, 0.2
      %v1193 = vmul.f32 %v1177, 0.2
      %v1194 = vmul.f32 %v1178, 0.2
      %v1195 = vmul.f32 %v1179, 0.2
      %v1196 = vmul.f32 %v1180, 0.2
      %v1197 = vmax.f32 %v1165, %v1181
      %v1198 = vmax.f32 %v1166, %v1182
      %v1199 = vmax.f32 %v1167, %v1183
      %v1200 = vmax.f32 %v1168, %v1184
      %v1201 = vmax.f32 %v1169, %v1185
      %v1202 = vmax.f32 %v1170, %v1186
      %v1203 = vmax.f32 %v1171, %v1187
      %v1204 = vmax.f32 %v1172, %v1188
      %v1205 = vmax.f32 %v1173, %v1189
      %v1206 = vmax.f32 %v1174, %v1190
      %v1207 = vmax.f32 %v1175, %v1191
      %v1208 = vmax.f32 %v1176, %v1192
      %v1209 = vmax.f32 %v1177, %v1193
      %v1210 = vmax.f32 %v1178, %v1194
      %v1211 = vmax.f32 %v1179, %v1195
      %v1212 = vmax.f32 %v1180, %v1196
      %1213 = vmax.xlane.f32.xlu0 %v1197
      %v1214 = vpop.xlane.xlu0 %1213
      %1215 = vmax.xlane.f32.xlu0 %v1198
      %v1216 = vpop.xlane.xlu0 %1215
      %1217 = vmax.xlane.f32.xlu0 %v1199
      %v1218 = vpop.xlane.xlu0 %1217
      %1219 = vmax.xlane.f32.xlu0 %v1200
      %v1220 = vpop.xlane.xlu0 %1219
      %1221 = vmax.xlane.f32.xlu0 %v1201
      %v1222 = vpop.xlane.xlu0 %1221
      %1223 = vmax.xlane.f32.xlu0 %v1202
      %v1224 = vpop.xlane.xlu0 %1223
      %1225 = vmax.xlane.f32.xlu0 %v1203
      %v1226 = vpop.xlane.xlu0 %1225
      %1227 = vmax.xlane.f32.xlu0 %v1204
      %v1228 = vpop.xlane.xlu0 %1227
      %1229 = vmax.xlane.f32.xlu0 %v1205
      %v1230 = vpop.xlane.xlu0 %1229
      %1231 = vmax.xlane.f32.xlu0 %v1206
      %v1232 = vpop.xlane.xlu0 %1231
      %1233 = vmax.xlane.f32.xlu0 %v1207
      %v1234 = vpop.xlane.xlu0 %1233
      %1235 = vmax.xlane.f32.xlu0 %v1208
      %v1236 = vpop.xlane.xlu0 %1235
      %1237 = vmax.xlane.f32.xlu0 %v1209
      %v1238 = vpop.xlane.xlu0 %1237
      %1239 = vmax.xlane.f32.xlu0 %v1210
      %v1240 = vpop.xlane.xlu0 %1239
      %1241 = vmax.xlane.f32.xlu0 %v1211
      %v1242 = vpop.xlane.xlu0 %1241
      %1243 = vmax.xlane.f32.xlu0 %v1212
      %v1244 = vpop.xlane.xlu0 %1243
      %v1245 = vsub.f32 %v1197, %v1214
      %v1246 = vsub.f32 %v1198, %v1216
      %v1247 = vsub.f32 %v1199, %v1218
      %v1248 = vsub.f32 %v1200, %v1220
      %v1249 = vsub.f32 %v1201, %v1222
      %v1250 = vsub.f32 %v1202, %v1224
      %v1251 = vsub.f32 %v1203, %v1226
      %v1252 = vsub.f32 %v1204, %v1228
      %v1253 = vsub.f32 %v1205, %v1230
      %v1254 = vsub.f32 %v1206, %v1232
      %v1255 = vsub.f32 %v1207, %v1234
      %v1256 = vsub.f32 %v1208, %v1236
      %v1257 = vsub.f32 %v1209, %v1238
      %v1258 = vsub.f32 %v1210, %v1240
      %v1259 = vsub.f32 %v1211, %v1242
      %v1260 = vsub.f32 %v1212, %v1244
      %v1261 = vmul.f32 %v1245, 1.442695
      %v1262 = vpow.pop %v1261
      %v1263 = vmul.f32 %v1246, 1.442695
      %v1264 = vpow.pop %v1263
      %v1265 = vmul.f32 %v1247, 1.442695
      %v1266 = vpow.pop %v1265
      %v1267 = vmul.f32 %v1248, 1.442695
      %v1268 = vpow.pop %v1267
      %v1269 = vmul.f32 %v1249, 1.442695
      %v1270 = vpow.pop %v1269
      %v1271 = vmul.f32 %v1250, 1.442695
      %v1272 = vpow.pop %v1271
      %v1273 = vmul.f32 %v1251, 1.442695
      %v1274 = vpow.pop %v1273
      %v1275 = vmul.f32 %v1252, 1.442695
      %v1276 = vpow.pop %v1275
      %v1277 = vmul.f32 %v1253, 1.442695
      %v1278 = vpow.pop %v1277
      %v1279 = vmul.f32 %v1254, 1.442695
      %v1280 = vpow.pop %v1279
      %v1281 = vmul.f32 %v1255, 1.442695
      %v1282 = vpow.pop %v1281
      %v1283 = vmul.f32 %v1256, 1.442695
      %v1284 = vpow.pop %v1283
      %v1285 = vmul.f32 %v1257, 1.442695
      %v1286 = vpow.pop %v1285
      %v1287 = vmul.f32 %v1258, 1.442695
      %v1288 = vpow.pop %v1287
      %v1289 = vmul.f32 %v1259, 1.442695
      %v1290 = vpow.pop %v1289
      %v1291 = vmul.f32 %v1260, 1.442695
      %v1292 = vpow.pop %v1291
      %1293 = vadd.xlane.f32.xlu0 %v1262
      %v1294 = vpop.xlane.xlu0 %1293
      %1295 = vadd.xlane.f32.xlu0 %v1264
      %v1296 = vpop.xlane.xlu0 %1295
      %1297 = vadd.xlane.f32.xlu0 %v1266
      %v1298 = vpop.xlane.xlu0 %1297
      %1299 = vadd.xlane.f32.xlu0 %v1268
      %v1300 = vpop.xlane.xlu0 %1299
      %1301 = vadd.xlane.f32.xlu0 %v1270
      %v1302 = vpop.xlane.xlu0 %1301
      %1303 = vadd.xlane.f32.xlu0 %v1272
      %v1304 = vpop.xlane.xlu0 %1303
      %1305 = vadd.xlane.f32.xlu0 %v1274
      %v1306 = vpop.xlane.xlu0 %1305
      %1307 = vadd.xlane.f32.xlu0 %v1276
      %v1308 = vpop.xlane.xlu0 %1307
      %1309 = vadd.xlane.f32.xlu0 %v1278
      %v1310 = vpop.xlane.xlu0 %1309
      %1311 = vadd.xlane.f32.xlu0 %v1280
      %v1312 = vpop.xlane.xlu0 %1311
      %1313 = vadd.xlane.f32.xlu0 %v1282
      %v1314 = vpop.xlane.xlu0 %1313
      %1315 = vadd.xlane.f32.xlu0 %v1284
      %v1316 = vpop.xlane.xlu0 %1315
      %1317 = vadd.xlane.f32.xlu0 %v1286
      %v1318 = vpop.xlane.xlu0 %1317
      %1319 = vadd.xlane.f32.xlu0 %v1288
      %v1320 = vpop.xlane.xlu0 %1319
      %1321 = vadd.xlane.f32.xlu0 %v1290
      %v1322 = vpop.xlane.xlu0 %1321
      %1323 = vadd.xlane.f32.xlu0 %v1292
      %v1324 = vpop.xlane.xlu0 %1323
      %v1325 = vrcp.pop %v1294
      %v1326 = vrcp.pop %v1296
      %v1327 = vrcp.pop %v1298
      %v1328 = vrcp.pop %v1300
      %v1329 = vrcp.pop %v1302
      %v1330 = vrcp.pop %v1304
      %v1331 = vrcp.pop %v1306
      %v1332 = vrcp.pop %v1308
      %v1333 = vrcp.pop %v1310
      %v1334 = vrcp.pop %v1312
      %v1335 = vrcp.pop %v1314
      %v1336 = vrcp.pop %v1316
      %v1337 = vrcp.pop %v1318
      %v1338 = vrcp.pop %v1320
      %v1339 = vrcp.pop %v1322
      %v1340 = vrcp.pop %v1324
      %v1341 = vmul.f32 %v1262, %v1325
      %v1342 = vmul.f32 %v1264, %v1326
      %v1343 = vmul.f32 %v1266, %v1327
      %v1344 = vmul.f32 %v1268, %v1328
      %v1345 = vmul.f32 %v1270, %v1329
      %v1346 = vmul.f32 %v1272, %v1330
      %v1347 = vmul.f32 %v1274, %v1331
      %v1348 = vmul.f32 %v1276, %v1332
      %v1349 = vmul.f32 %v1278, %v1333
      %v1350 = vmul.f32 %v1280, %v1334
      %v1351 = vmul.f32 %v1282, %v1335
      %v1352 = vmul.f32 %v1284, %v1336
      %v1353 = vmul.f32 %v1286, %v1337
      %v1354 = vmul.f32 %v1288, %v1338
      %v1355 = vmul.f32 %v1290, %v1339
      %v1356 = vmul.f32 %v1292, %v1340
      %v1357 = vpack.c.bf16 %v1342, %v1341
      %v1358 = vpack.c.bf16 %v1344, %v1343
      %v1359 = vpack.c.bf16 %v1346, %v1345
      %v1360 = vpack.c.bf16 %v1348, %v1347
      %v1361 = vpack.c.bf16 %v1350, %v1349
      %v1362 = vpack.c.bf16 %v1352, %v1351
      %v1363 = vpack.c.bf16 %v1354, %v1353
      %v1364 = vpack.c.bf16 %v1356, %v1355
      %1365 = vmatprep.subr.bf16.mxu0 0
      %1366 = vmatpush1.bf16.msra.mxu0 %v982
      %1367 = vmatprep.subr.bf16.mxu0 0
      %1368 = vmatpush1.bf16.msra.mxu0 %v983
      %1369 = vmatprep.subr.bf16.mxu0 0
      %1370 = vmatpush1.bf16.msra.mxu0 %v984
      %1371 = vmatprep.subr.bf16.mxu0 0
      %1372 = vmatpush1.bf16.msra.mxu0 %v985
      %1373 = vmatprep.subr.bf16.mxu0 0
      %1374 = vmatpush1.bf16.msra.mxu0 %v986
      %1375 = vmatprep.subr.bf16.mxu0 0
      %1376 = vmatpush1.bf16.msra.mxu0 %v987
      %1377 = vmatprep.subr.bf16.mxu0 0
      %1378 = vmatpush1.bf16.msra.mxu0 %v988
      %1379 = vmatprep.subr.bf16.mxu0 0
      %1380 = vmatpush1.bf16.msra.mxu0 %v989
      %1381 = vmatprep.subr.bf16.mxu0 0
      %1382 = vmatpush1.bf16.msra.mxu0 0
      %1383 = vmatprep.subr.bf16.mxu0 0
      %1384 = vmatpush1.bf16.msra.mxu0 0
      %1385 = vmatprep.subr.bf16.mxu0 0
      %1386 = vmatpush1.bf16.msra.mxu0 0
      %1387 = vmatprep.subr.bf16.mxu0 0
      %1388 = vmatpush1.bf16.msra.mxu0 0
      %1389 = vmatprep.subr.bf16.mxu0 0
      %1390 = vmatpush1.bf16.msra.mxu0 0
      %1391 = vmatprep.subr.bf16.mxu0 0
      %1392 = vmatpush1.bf16.msra.mxu0 0
      %1393 = vmatprep.subr.bf16.mxu0 0
      %1394 = vmatpush1.bf16.msra.mxu0 0
      %1395 = vmatprep.subr.bf16.mxu0 0
      %1396 = vmatpush1.bf16.msra.mxu0 0
      %1397 = vmatprep.mubr.bf16.mxu0 0
      %1398 = vmatmul.mubr.bf16.gmra.mrb[0].mxu0 %v1357
      %v1399 = vpop.f32.mrb[0].mxu0
      %v1400 = vadd.f32 0.0, %v1399
      %v1401 = vpop.f32.mrb[0].mxu0
      %v1402 = vpop.f32.mrb[0].mxu0
      %v1403 = vadd.f32 0.0, %v1402
      %v1404 = vpop.f32.mrb[0].mxu0
      %1405 = vmatprep.mubr.bf16.mxu0 0
      %1406 = vmatmul.mubr.bf16.gmra.mrb[0].mxu0 %v1358
      %v1407 = vpop.f32.mrb[0].mxu0
      %v1408 = vadd.f32 0.0, %v1407
      %v1409 = vpop.f32.mrb[0].mxu0
      %v1410 = vpop.f32.mrb[0].mxu0
      %v1411 = vadd.f32 0.0, %v1410
      %v1412 = vpop.f32.mrb[0].mxu0
      %1413 = vmatprep.mubr.bf16.mxu0 0
      %1414 = vmatmul.mubr.bf16.gmra.mrb[0].mxu0 %v1359
      %v1415 = vpop.f32.mrb[0].mxu0
      %v1416 = vadd.f32 0.0, %v1415
      %v1417 = vpop.f32.mrb[0].mxu0
      %v1418 = vpop.f32.mrb[0].mxu0
      %v1419 = vadd.f32 0.0, %v1418
      %v1420 = vpop.f32.mrb[0].mxu0
      %1421 = vmatprep.mubr.bf16.mxu0 0
      %1422 = vmatmul.mubr.bf16.gmra.mrb[0].mxu0 %v1360
      %v1423 = vpop.f32.mrb[0].mxu0
      %v1424 = vadd.f32 0.0, %v1423
      %v1425 = vpop.f32.mrb[0].mxu0
      %v1426 = vpop.f32.mrb[0].mxu0
      %v1427 = vadd.f32 0.0, %v1426
      %v1428 = vpop.f32.mrb[0].mxu0
      %1429 = vmatprep.mubr.bf16.mxu0 0
      %1430 = vmatmul.mubr.bf16.gmra.mrb[0].mxu0 %v1361
      %v1431 = vpop.f32.mrb[0].mxu0
      %v1432 = vadd.f32 0.0, %v1431
      %v1433 = vpop.f32.mrb[0].mxu0
      %v1434 = vpop.f32.mrb[0].mxu0
      %v1435 = vadd.f32 0.0, %v1434
      %v1436 = vpop.f32.mrb[0].mxu0
      %1437 = vmatprep.mubr.bf16.mxu0 0
      %1438 = vmatmul.mubr.bf16.gmra.mrb[0].mxu0 %v1362
      %v1439 = vpop.f32.mrb[0].mxu0
      %v1440 = vadd.f32 0.0, %v1439
      %v1441 = vpop.f32.mrb[0].mxu0
      %v1442 = vpop.f32.mrb[0].mxu0
      %v1443 = vadd.f32 0.0, %v1442
      %v1444 = vpop.f32.mrb[0].mxu0
      %1445 = vmatprep.mubr.bf16.mxu0 0
      %1446 = vmatmul.mubr.bf16.gmra.mrb[0].mxu0 %v1363
      %v1447 = vpop.f32.mrb[0].mxu0
      %v1448 = vadd.f32 0.0, %v1447
      %v1449 = vpop.f32.mrb[0].mxu0
      %v1450 = vpop.f32.mrb[0].mxu0
      %v1451 = vadd.f32 0.0, %v1450
      %v1452 = vpop.f32.mrb[0].mxu0
      %1453 = vmatprep.mubr.bf16.mxu0 0
      %1454 = vmatmul.mubr.bf16.gmra.mrb[0].mxu0 %v1364
      %v1455 = vpop.f32.mrb[0].mxu0
      %v1456 = vadd.f32 0.0, %v1455
      %v1457 = vpop.f32.mrb[0].mxu0
      %v1458 = vpop.f32.mrb[0].mxu0
      %v1459 = vadd.f32 0.0, %v1458
      %v1460 = vpop.f32.mrb[0].mxu0
      %1461 = vdwg.mxu0
      %1462 = vset.pattern.permute.xlu0 1
      %1463 = vperm.xlu0 %1462, %v906
      %v1464 = vpop.permute.xlu0 %1463
      %1466 = vset.pattern.permute.xlu0 1
      %1467 = vperm.xlu0 %1466, %v910
      %v1468 = vpop.permute.xlu0 %1467
      %1470 = vset.pattern.permute.xlu0 1
      %1471 = vperm.xlu0 %1470, %v916
      %v1472 = vpop.permute.xlu0 %1471
      %1474 = vset.pattern.permute.xlu0 1
      %1475 = vperm.xlu0 %1474, %v920
      %v1476 = vpop.permute.xlu0 %1475
      %1478 = vset.pattern.permute.xlu0 1
      %1479 = vperm.xlu0 %1478, %v926
      %v1480 = vpop.permute.xlu0 %1479
      %1482 = vset.pattern.permute.xlu0 1
      %1483 = vperm.xlu0 %1482, %v930
      %v1484 = vpop.permute.xlu0 %1483
      %1486 = vset.pattern.permute.xlu0 1
      %1487 = vperm.xlu0 %1486, %v936
      %v1488 = vpop.permute.xlu0 %1487
      %1490 = vset.pattern.permute.xlu0 1
      %1491 = vperm.xlu0 %1490, %v940
      %v1492 = vpop.permute.xlu0 %1491
      %1494 = vset.pattern.permute.xlu0 1
      %1495 = vperm.xlu0 %1494, %v946
      %v1496 = vpop.permute.xlu0 %1495
      %1498 = vset.pattern.permute.xlu0 1
      %1499 = vperm.xlu0 %1498, %v950
      %v1500 = vpop.permute.xlu0 %1499
      %1502 = vset.pattern.permute.xlu0 1
      %1503 = vperm.xlu0 %1502, %v956
      %v1504 = vpop.permute.xlu0 %1503
      %1506 = vset.pattern.permute.xlu0 1
      %1507 = vperm.xlu0 %1506, %v960
      %v1508 = vpop.permute.xlu0 %1507
      %1510 = vset.pattern.permute.xlu0 1
      %1511 = vperm.xlu0 %1510, %v966
      %v1512 = vpop.permute.xlu0 %1511
      %1514 = vset.pattern.permute.xlu0 1
      %1515 = vperm.xlu0 %1514, %v970
      %v1516 = vpop.permute.xlu0 %1515
      %1518 = vset.pattern.permute.xlu0 1
      %1519 = vperm.xlu0 %1518, %v976
      %v1520 = vpop.permute.xlu0 %1519
      %1522 = vset.pattern.permute.xlu0 1
      %1523 = vperm.xlu0 %1522, %v980
      %v1524 = vpop.permute.xlu0 %1523
      %v1526 = vlaneseq
      %v1527 = vshrl.u32 %v1526, 7
      %v1528 = vsub.s32 1, %v1527
      %v1529 = vrot.slane %v1028, %v1528
      %v1530 = vadd.f32 %v1464, %v1529
      %v1531 = vadd.f32 %v1468, %v1529
      %v1532 = vadd.f32 %v1472, %v1529
      %v1533 = vadd.f32 %v1476, %v1529
      %v1534 = vadd.f32 %v1480, %v1529
      %v1535 = vadd.f32 %v1484, %v1529
      %v1536 = vadd.f32 %v1488, %v1529
      %v1537 = vadd.f32 %v1492, %v1529
      %v1538 = vadd.f32 %v1496, %v1529
      %v1539 = vadd.f32 %v1500, %v1529
      %v1540 = vadd.f32 %v1504, %v1529
      %v1541 = vadd.f32 %v1508, %v1529
      %v1542 = vadd.f32 %v1512, %v1529
      %v1543 = vadd.f32 %v1516, %v1529
      %v1544 = vadd.f32 %v1520, %v1529
      %v1545 = vadd.f32 %v1524, %v1529
      %s1546 = scalar_lea.vmem %s342, 64
      %v1547 = vld [vmem:[%s1546] sm:$0xf]
      %v1548 = vld [vmem:[%s1546 + $0x4] sm:$0xf]
      %v1549 = vld [vmem:[%s1546 + $0x8] sm:$0xf]
      %v1550 = vld [vmem:[%s1546 + $0xc] sm:$0xf]
      %v1551 = vld [vmem:[%s1546 + $0x10] sm:$0xf]
      %v1552 = vld [vmem:[%s1546 + $0x14] sm:$0xf]
      %v1553 = vld [vmem:[%s1546 + $0x18] sm:$0xf]
      %v1554 = vld [vmem:[%s1546 + $0x1c] sm:$0xf]
      %v1555 = vld [vmem:[%s1546 + $0x20] sm:$0xf]
      %v1556 = vld [vmem:[%s1546 + $0x24] sm:$0xf]
      %v1557 = vld [vmem:[%s1546 + $0x28] sm:$0xf]
      %v1558 = vld [vmem:[%s1546 + $0x2c] sm:$0xf]
      %v1559 = vld [vmem:[%s1546 + $0x30] sm:$0xf]
      %v1560 = vld [vmem:[%s1546 + $0x34] sm:$0xf]
      %v1561 = vld [vmem:[%s1546 + $0x38] sm:$0xf]
      %v1562 = vld [vmem:[%s1546 + $0x3c] sm:$0xf]
      %v1563 = vunpack.c.l.bf16 %v1547
      %v1564 = vunpack.c.l.bf16 %v1548
      %v1565 = vunpack.c.l.bf16 %v1549
      %v1566 = vunpack.c.l.bf16 %v1550
      %v1567 = vunpack.c.l.bf16 %v1551
      %v1568 = vunpack.c.l.bf16 %v1552
      %v1569 = vunpack.c.l.bf16 %v1553
      %v1570 = vunpack.c.l.bf16 %v1554
      %v1571 = vunpack.c.l.bf16 %v1555
      %v1572 = vunpack.c.l.bf16 %v1556
      %v1573 = vunpack.c.l.bf16 %v1557
      %v1574 = vunpack.c.l.bf16 %v1558
      %v1575 = vunpack.c.l.bf16 %v1559
      %v1576 = vunpack.c.l.bf16 %v1560
      %v1577 = vunpack.c.l.bf16 %v1561
      %v1578 = vunpack.c.l.bf16 %v1562
      %v1579 = vadd.f32 %v1530, %v1563
      %v1580 = vadd.f32 %v1531, %v1564
      %v1581 = vadd.f32 %v1532, %v1565
      %v1582 = vadd.f32 %v1533, %v1566
      %v1583 = vadd.f32 %v1534, %v1567
      %v1584 = vadd.f32 %v1535, %v1568
      %v1585 = vadd.f32 %v1536, %v1569
      %v1586 = vadd.f32 %v1537, %v1570
      %v1587 = vadd.f32 %v1538, %v1571
      %v1588 = vadd.f32 %v1539, %v1572
      %v1589 = vadd.f32 %v1540, %v1573
      %v1590 = vadd.f32 %v1541, %v1574
      %v1591 = vadd.f32 %v1542, %v1575
      %v1592 = vadd.f32 %v1543, %v1576
      %v1593 = vadd.f32 %v1544, %v1577
      %v1594 = vadd.f32 %v1545, %v1578
      %v1595 = vmul.f32 %v1579, 0.2
      %v1596 = vmul.f32 %v1580, 0.2
      %v1597 = vmul.f32 %v1581, 0.2
      %v1598 = vmul.f32 %v1582, 0.2
      %v1599 = vmul.f32 %v1583, 0.2
      %v1600 = vmul.f32 %v1584, 0.2
      %v1601 = vmul.f32 %v1585, 0.2
      %v1602 = vmul.f32 %v1586, 0.2
      %v1603 = vmul.f32 %v1587, 0.2
      %v1604 = vmul.f32 %v1588, 0.2
      %v1605 = vmul.f32 %v1589, 0.2
      %v1606 = vmul.f32 %v1590, 0.2
      %v1607 = vmul.f32 %v1591, 0.2
      %v1608 = vmul.f32 %v1592, 0.2
      %v1609 = vmul.f32 %v1593, 0.2
      %v1610 = vmul.f32 %v1594, 0.2
      %v1611 = vmax.f32 %v1579, %v1595
      %v1612 = vmax.f32 %v1580, %v1596
      %v1613 = vmax.f32 %v1581, %v1597
      %v1614 = vmax.f32 %v1582, %v1598
      %v1615 = vmax.f32 %v1583, %v1599
      %v1616 = vmax.f32 %v1584, %v1600
      %v1617 = vmax.f32 %v1585, %v1601
      %v1618 = vmax.f32 %v1586, %v1602
      %v1619 = vmax.f32 %v1587, %v1603
      %v1620 = vmax.f32 %v1588, %v1604
      %v1621 = vmax.f32 %v1589, %v1605
      %v1622 = vmax.f32 %v1590, %v1606
      %v1623 = vmax.f32 %v1591, %v1607
      %v1624 = vmax.f32 %v1592, %v1608
      %v1625 = vmax.f32 %v1593, %v1609
      %v1626 = vmax.f32 %v1594, %v1610
      %1627 = vmax.xlane.f32.xlu0 %v1611
      %v1628 = vpop.xlane.xlu0 %1627
      %1629 = vmax.xlane.f32.xlu0 %v1612
      %v1630 = vpop.xlane.xlu0 %1629
      %1631 = vmax.xlane.f32.xlu0 %v1613
      %v1632 = vpop.xlane.xlu0 %1631
      %1633 = vmax.xlane.f32.xlu0 %v1614
      %v1634 = vpop.xlane.xlu0 %1633
      %1635 = vmax.xlane.f32.xlu0 %v1615
      %v1636 = vpop.xlane.xlu0 %1635
      %1637 = vmax.xlane.f32.xlu0 %v1616
      %v1638 = vpop.xlane.xlu0 %1637
      %1639 = vmax.xlane.f32.xlu0 %v1617
      %v1640 = vpop.xlane.xlu0 %1639
      %1641 = vmax.xlane.f32.xlu0 %v1618
      %v1642 = vpop.xlane.xlu0 %1641
      %1643 = vmax.xlane.f32.xlu0 %v1619
      %v1644 = vpop.xlane.xlu0 %1643
      %1645 = vmax.xlane.f32.xlu0 %v1620
      %v1646 = vpop.xlane.xlu0 %1645
      %1647 = vmax.xlane.f32.xlu0 %v1621
      %v1648 = vpop.xlane.xlu0 %1647
      %1649 = vmax.xlane.f32.xlu0 %v1622
      %v1650 = vpop.xlane.xlu0 %1649
      %1651 = vmax.xlane.f32.xlu0 %v1623
      %v1652 = vpop.xlane.xlu0 %1651
      %1653 = vmax.xlane.f32.xlu0 %v1624
      %v1654 = vpop.xlane.xlu0 %1653
      %1655 = vmax.xlane.f32.xlu0 %v1625
      %v1656 = vpop.xlane.xlu0 %1655
      %1657 = vmax.xlane.f32.xlu0 %v1626
      %v1658 = vpop.xlane.xlu0 %1657
      %v1659 = vsub.f32 %v1611, %v1628
      %v1660 = vsub.f32 %v1612, %v1630
      %v1661 = vsub.f32 %v1613, %v1632
      %v1662 = vsub.f32 %v1614, %v1634
      %v1663 = vsub.f32 %v1615, %v1636
      %v1664 = vsub.f32 %v1616, %v1638
      %v1665 = vsub.f32 %v1617, %v1640
      %v1666 = vsub.f32 %v1618, %v1642
      %v1667 = vsub.f32 %v1619, %v1644
      %v1668 = vsub.f32 %v1620, %v1646
      %v1669 = vsub.f32 %v1621, %v1648
      %v1670 = vsub.f32 %v1622, %v1650
      %v1671 = vsub.f32 %v1623, %v1652
      %v1672 = vsub.f32 %v1624, %v1654
      %v1673 = vsub.f32 %v1625, %v1656
      %v1674 = vsub.f32 %v1626, %v1658
      %v1675 = vmul.f32 %v1659, 1.442695
      %v1676 = vpow.pop %v1675
      %v1677 = vmul.f32 %v1660, 1.442695
      %v1678 = vpow.pop %v1677
      %v1679 = vmul.f32 %v1661, 1.442695
      %v1680 = vpow.pop %v1679
      %v1681 = vmul.f32 %v1662, 1.442695
      %v1682 = vpow.pop %v1681
      %v1683 = vmul.f32 %v1663, 1.442695
      %v1684 = vpow.pop %v1683
      %v1685 = vmul.f32 %v1664, 1.442695
      %v1686 = vpow.pop %v1685
      %v1687 = vmul.f32 %v1665, 1.442695
      %v1688 = vpow.pop %v1687
      %v1689 = vmul.f32 %v1666, 1.442695
      %v1690 = vpow.pop %v1689
      %v1691 = vmul.f32 %v1667, 1.442695
      %v1692 = vpow.pop %v1691
      %v1693 = vmul.f32 %v1668, 1.442695
      %v1694 = vpow.pop %v1693
      %v1695 = vmul.f32 %v1669, 1.442695
      %v1696 = vpow.pop %v1695
      %v1697 = vmul.f32 %v1670, 1.442695
      %v1698 = vpow.pop %v1697
      %v1699 = vmul.f32 %v1671, 1.442695
      %v1700 = vpow.pop %v1699
      %v1701 = vmul.f32 %v1672, 1.442695
      %v1702 = vpow.pop %v1701
      %v1703 = vmul.f32 %v1673, 1.442695
      %v1704 = vpow.pop %v1703
      %v1705 = vmul.f32 %v1674, 1.442695
      %v1706 = vpow.pop %v1705
      %1707 = vadd.xlane.f32.xlu0 %v1676
      %v1708 = vpop.xlane.xlu0 %1707
      %1709 = vadd.xlane.f32.xlu0 %v1678
      %v1710 = vpop.xlane.xlu0 %1709
      %1711 = vadd.xlane.f32.xlu0 %v1680
      %v1712 = vpop.xlane.xlu0 %1711
      %1713 = vadd.xlane.f32.xlu0 %v1682
      %v1714 = vpop.xlane.xlu0 %1713
      %1715 = vadd.xlane.f32.xlu0 %v1684
      %v1716 = vpop.xlane.xlu0 %1715
      %1717 = vadd.xlane.f32.xlu0 %v1686
      %v1718 = vpop.xlane.xlu0 %1717
      %1719 = vadd.xlane.f32.xlu0 %v1688
      %v1720 = vpop.xlane.xlu0 %1719
      %1721 = vadd.xlane.f32.xlu0 %v1690
      %v1722 = vpop.xlane.xlu0 %1721
      %1723 = vadd.xlane.f32.xlu0 %v1692
      %v1724 = vpop.xlane.xlu0 %1723
      %1725 = vadd.xlane.f32.xlu0 %v1694
      %v1726 = vpop.xlane.xlu0 %1725
      %1727 = vadd.xlane.f32.xlu0 %v1696
      %v1728 = vpop.xlane.xlu0 %1727
      %1729 = vadd.xlane.f32.xlu0 %v1698
      %v1730 = vpop.xlane.xlu0 %1729
      %1731 = vadd.xlane.f32.xlu0 %v1700
      %v1732 = vpop.xlane.xlu0 %1731
      %1733 = vadd.xlane.f32.xlu0 %v1702
      %v1734 = vpop.xlane.xlu0 %1733
      %1735 = vadd.xlane.f32.xlu0 %v1704
      %v1736 = vpop.xlane.xlu0 %1735
      %1737 = vadd.xlane.f32.xlu0 %v1706
      %v1738 = vpop.xlane.xlu0 %1737
      %v1739 = vrcp.pop %v1708
      %v1740 = vrcp.pop %v1710
      %v1741 = vrcp.pop %v1712
      %v1742 = vrcp.pop %v1714
      %v1743 = vrcp.pop %v1716
      %v1744 = vrcp.pop %v1718
      %v1745 = vrcp.pop %v1720
      %v1746 = vrcp.pop %v1722
      %v1747 = vrcp.pop %v1724
      %v1748 = vrcp.pop %v1726
      %v1749 = vrcp.pop %v1728
      %v1750 = vrcp.pop %v1730
      %v1751 = vrcp.pop %v1732
      %v1752 = vrcp.pop %v1734
      %v1753 = vrcp.pop %v1736
      %v1754 = vrcp.pop %v1738
      %v1755 = vmul.f32 %v1676, %v1739
      %v1756 = vmul.f32 %v1678, %v1740
      %v1757 = vmul.f32 %v1680, %v1741
      %v1758 = vmul.f32 %v1682, %v1742
      %v1759 = vmul.f32 %v1684, %v1743
      %v1760 = vmul.f32 %v1686, %v1744
      %v1761 = vmul.f32 %v1688, %v1745
      %v1762 = vmul.f32 %v1690, %v1746
      %v1763 = vmul.f32 %v1692, %v1747
      %v1764 = vmul.f32 %v1694, %v1748
      %v1765 = vmul.f32 %v1696, %v1749
      %v1766 = vmul.f32 %v1698, %v1750
      %v1767 = vmul.f32 %v1700, %v1751
      %v1768 = vmul.f32 %v1702, %v1752
      %v1769 = vmul.f32 %v1704, %v1753
      %v1770 = vmul.f32 %v1706, %v1754
      %v1771 = vpack.c.bf16 %v1756, %v1755
      %v1772 = vpack.c.bf16 %v1758, %v1757
      %v1773 = vpack.c.bf16 %v1760, %v1759
      %v1774 = vpack.c.bf16 %v1762, %v1761
      %v1775 = vpack.c.bf16 %v1764, %v1763
      %v1776 = vpack.c.bf16 %v1766, %v1765
      %v1777 = vpack.c.bf16 %v1768, %v1767
      %v1778 = vpack.c.bf16 %v1770, %v1769
      %1787 = vrot.lane.b32.xlu0 %v982, 96
      %v1788 = vpop.permute.xlu0 %1787
      %1789 = vrot.lane.b32.xlu0 %v983, 96
      %v1790 = vpop.permute.xlu0 %1789
      %1791 = vrot.lane.b32.xlu0 %v984, 96
      %v1792 = vpop.permute.xlu0 %1791
      %1793 = vrot.lane.b32.xlu0 %v985, 96
      %v1794 = vpop.permute.xlu0 %1793
      %1795 = vrot.lane.b32.xlu0 %v986, 96
      %v1796 = vpop.permute.xlu0 %1795
      %1797 = vrot.lane.b32.xlu0 %v987, 96
      %v1798 = vpop.permute.xlu0 %1797
      %1799 = vrot.lane.b32.xlu0 %v988, 96
      %v1800 = vpop.permute.xlu0 %1799
      %1801 = vrot.lane.b32.xlu0 %v989, 96
      %v1802 = vpop.permute.xlu0 %1801
      %1811 = vmatprep.subr.bf16.mxu0 0
      %1812 = vmatpush1.bf16.msra.mxu0 %v1788
      %1813 = vmatprep.subr.bf16.mxu0 0
      %1814 = vmatpush1.bf16.msra.mxu0 %v1790
      %1815 = vmatprep.subr.bf16.mxu0 0
      %1816 = vmatpush1.bf16.msra.mxu0 %v1792
      %1817 = vmatprep.subr.bf16.mxu0 0
      %1818 = vmatpush1.bf16.msra.mxu0 %v1794
      %1819 = vmatprep.subr.bf16.mxu0 0
      %1820 = vmatpush1.bf16.msra.mxu0 %v1796
      %1821 = vmatprep.subr.bf16.mxu0 0
      %1822 = vmatpush1.bf16.msra.mxu0 %v1798
      %1823 = vmatprep.subr.bf16.mxu0 0
      %1824 = vmatpush1.bf16.msra.mxu0 %v1800
      %1825 = vmatprep.subr.bf16.mxu0 0
      %1826 = vmatpush1.bf16.msra.mxu0 %v1802
      %1827 = vmatprep.subr.bf16.mxu0 0
      %1828 = vmatpush1.bf16.msra.mxu0 0
      %1829 = vmatprep.subr.bf16.mxu0 0
      %1830 = vmatpush1.bf16.msra.mxu0 0
      %1831 = vmatprep.subr.bf16.mxu0 0
      %1832 = vmatpush1.bf16.msra.mxu0 0
      %1833 = vmatprep.subr.bf16.mxu0 0
      %1834 = vmatpush1.bf16.msra.mxu0 0
      %1835 = vmatprep.subr.bf16.mxu0 0
      %1836 = vmatpush1.bf16.msra.mxu0 0
      %1837 = vmatprep.subr.bf16.mxu0 0
      %1838 = vmatpush1.bf16.msra.mxu0 0
      %1839 = vmatprep.subr.bf16.mxu0 0
      %1840 = vmatpush1.bf16.msra.mxu0 0
      %1841 = vmatprep.subr.bf16.mxu0 0
      %1842 = vmatpush1.bf16.msra.mxu0 0
      %1843 = vmatprep.mubr.bf16.mxu0 0
      %1844 = vmatmul.mubr.bf16.gmra.mrb[0].mxu0 %v1771
      %v1845 = vpop.f32.mrb[0].mxu0
      %v1846 = vadd.f32 0.0, %v1845
      %v1847 = vpop.f32.mrb[0].mxu0
      %v1848 = vpop.f32.mrb[0].mxu0
      %v1849 = vadd.f32 0.0, %v1848
      %v1850 = vpop.f32.mrb[0].mxu0
      %1851 = vmatprep.mubr.bf16.mxu0 0
      %1852 = vmatmul.mubr.bf16.gmra.mrb[0].mxu0 %v1772
      %v1853 = vpop.f32.mrb[0].mxu0
      %v1854 = vadd.f32 0.0, %v1853
      %v1855 = vpop.f32.mrb[0].mxu0
      %v1856 = vpop.f32.mrb[0].mxu0
      %v1857 = vadd.f32 0.0, %v1856
      %v1858 = vpop.f32.mrb[0].mxu0
      %1859 = vmatprep.mubr.bf16.mxu0 0
      %1860 = vmatmul.mubr.bf16.gmra.mrb[0].mxu0 %v1773
      %v1861 = vpop.f32.mrb[0].mxu0
      %v1862 = vadd.f32 0.0, %v1861
      %v1863 = vpop.f32.mrb[0].mxu0
      %v1864 = vpop.f32.mrb[0].mxu0
      %v1865 = vadd.f32 0.0, %v1864
      %v1866 = vpop.f32.mrb[0].mxu0
      %1867 = vmatprep.mubr.bf16.mxu0 0
      %1868 = vmatmul.mubr.bf16.gmra.mrb[0].mxu0 %v1774
      %v1869 = vpop.f32.mrb[0].mxu0
      %v1870 = vadd.f32 0.0, %v1869
      %v1871 = vpop.f32.mrb[0].mxu0
      %v1872 = vpop.f32.mrb[0].mxu0
      %v1873 = vadd.f32 0.0, %v1872
      %v1874 = vpop.f32.mrb[0].mxu0
      %1875 = vmatprep.mubr.bf16.mxu0 0
      %1876 = vmatmul.mubr.bf16.gmra.mrb[0].mxu0 %v1775
      %v1877 = vpop.f32.mrb[0].mxu0
      %v1878 = vadd.f32 0.0, %v1877
      %v1879 = vpop.f32.mrb[0].mxu0
      %v1880 = vpop.f32.mrb[0].mxu0
      %v1881 = vadd.f32 0.0, %v1880
      %v1882 = vpop.f32.mrb[0].mxu0
      %1883 = vmatprep.mubr.bf16.mxu0 0
      %1884 = vmatmul.mubr.bf16.gmra.mrb[0].mxu0 %v1776
      %v1885 = vpop.f32.mrb[0].mxu0
      %v1886 = vadd.f32 0.0, %v1885
      %v1887 = vpop.f32.mrb[0].mxu0
      %v1888 = vpop.f32.mrb[0].mxu0
      %v1889 = vadd.f32 0.0, %v1888
      %v1890 = vpop.f32.mrb[0].mxu0
      %1891 = vmatprep.mubr.bf16.mxu0 0
      %1892 = vmatmul.mubr.bf16.gmra.mrb[0].mxu0 %v1777
      %v1893 = vpop.f32.mrb[0].mxu0
      %v1894 = vadd.f32 0.0, %v1893
      %v1895 = vpop.f32.mrb[0].mxu0
      %v1896 = vpop.f32.mrb[0].mxu0
      %v1897 = vadd.f32 0.0, %v1896
      %v1898 = vpop.f32.mrb[0].mxu0
      %1899 = vmatprep.mubr.bf16.mxu0 0
      %1900 = vmatmul.mubr.bf16.gmra.mrb[0].mxu0 %v1778
      %v1901 = vpop.f32.mrb[0].mxu0
      %v1902 = vadd.f32 0.0, %v1901
      %v1903 = vpop.f32.mrb[0].mxu0
      %v1904 = vpop.f32.mrb[0].mxu0
      %v1905 = vadd.f32 0.0, %v1904
      %v1906 = vpop.f32.mrb[0].mxu0
      %1907 = vdwg.mxu0
      %1908 = vset.pattern.permute.xlu0 2
      %1909 = vperm.xlu0 %1908, %v906
      %v1910 = vpop.permute.xlu0 %1909
      %1912 = vset.pattern.permute.xlu0 2
      %1913 = vperm.xlu0 %1912, %v910
      %v1914 = vpop.permute.xlu0 %1913
      %1916 = vset.pattern.permute.xlu0 2
      %1917 = vperm.xlu0 %1916, %v916
      %v1918 = vpop.permute.xlu0 %1917
      %1920 = vset.pattern.permute.xlu0 2
      %1921 = vperm.xlu0 %1920, %v920
      %v1922 = vpop.permute.xlu0 %1921
      %1924 = vset.pattern.permute.xlu0 2
      %1925 = vperm.xlu0 %1924, %v926
      %v1926 = vpop.permute.xlu0 %1925
      %1928 = vset.pattern.permute.xlu0 2
      %1929 = vperm.xlu0 %1928, %v930
      %v1930 = vpop.permute.xlu0 %1929
      %1932 = vset.pattern.permute.xlu0 2
      %1933 = vperm.xlu0 %1932, %v936
      %v1934 = vpop.permute.xlu0 %1933
      %1936 = vset.pattern.permute.xlu0 2
      %1937 = vperm.xlu0 %1936, %v940
      %v1938 = vpop.permute.xlu0 %1937
      %1940 = vset.pattern.permute.xlu0 2
      %1941 = vperm.xlu0 %1940, %v946
      %v1942 = vpop.permute.xlu0 %1941
      %1944 = vset.pattern.permute.xlu0 2
      %1945 = vperm.xlu0 %1944, %v950
      %v1946 = vpop.permute.xlu0 %1945
      %1948 = vset.pattern.permute.xlu0 2
      %1949 = vperm.xlu0 %1948, %v956
      %v1950 = vpop.permute.xlu0 %1949
      %1952 = vset.pattern.permute.xlu0 2
      %1953 = vperm.xlu0 %1952, %v960
      %v1954 = vpop.permute.xlu0 %1953
      %1956 = vset.pattern.permute.xlu0 2
      %1957 = vperm.xlu0 %1956, %v966
      %v1958 = vpop.permute.xlu0 %1957
      %1960 = vset.pattern.permute.xlu0 2
      %1961 = vperm.xlu0 %1960, %v970
      %v1962 = vpop.permute.xlu0 %1961
      %1964 = vset.pattern.permute.xlu0 2
      %1965 = vperm.xlu0 %1964, %v976
      %v1966 = vpop.permute.xlu0 %1965
      %1968 = vset.pattern.permute.xlu0 2
      %1969 = vperm.xlu0 %1968, %v980
      %v1970 = vpop.permute.xlu0 %1969
      %v1972 = vlaneseq
      %v1973 = vshrl.u32 %v1972, 7
      %v1974 = vsub.s32 2, %v1973
      %v1975 = vrot.slane %v1028, %v1974
      %v1976 = vadd.f32 %v1910, %v1975
      %v1977 = vadd.f32 %v1914, %v1975
      %v1978 = vadd.f32 %v1918, %v1975
      %v1979 = vadd.f32 %v1922, %v1975
      %v1980 = vadd.f32 %v1926, %v1975
      %v1981 = vadd.f32 %v1930, %v1975
      %v1982 = vadd.f32 %v1934, %v1975
      %v1983 = vadd.f32 %v1938, %v1975
      %v1984 = vadd.f32 %v1942, %v1975
      %v1985 = vadd.f32 %v1946, %v1975
      %v1986 = vadd.f32 %v1950, %v1975
      %v1987 = vadd.f32 %v1954, %v1975
      %v1988 = vadd.f32 %v1958, %v1975
      %v1989 = vadd.f32 %v1962, %v1975
      %v1990 = vadd.f32 %v1966, %v1975
      %v1991 = vadd.f32 %v1970, %v1975
      %s1992 = scalar_lea.vmem %s342, 128
      %v1993 = vld [vmem:[%s1992] sm:$0xf]
      %v1994 = vld [vmem:[%s1992 + $0x4] sm:$0xf]
      %v1995 = vld [vmem:[%s1992 + $0x8] sm:$0xf]
      %v1996 = vld [vmem:[%s1992 + $0xc] sm:$0xf]
      %v1997 = vld [vmem:[%s1992 + $0x10] sm:$0xf]
      %v1998 = vld [vmem:[%s1992 + $0x14] sm:$0xf]
      %v1999 = vld [vmem:[%s1992 + $0x18] sm:$0xf]
      %v2000 = vld [vmem:[%s1992 + $0x1c] sm:$0xf]
      %v2001 = vld [vmem:[%s1992 + $0x20] sm:$0xf]
      %v2002 = vld [vmem:[%s1992 + $0x24] sm:$0xf]
      %v2003 = vld [vmem:[%s1992 + $0x28] sm:$0xf]
      %v2004 = vld [vmem:[%s1992 + $0x2c] sm:$0xf]
      %v2005 = vld [vmem:[%s1992 + $0x30] sm:$0xf]
      %v2006 = vld [vmem:[%s1992 + $0x34] sm:$0xf]
      %v2007 = vld [vmem:[%s1992 + $0x38] sm:$0xf]
      %v2008 = vld [vmem:[%s1992 + $0x3c] sm:$0xf]
      %v2009 = vunpack.c.l.bf16 %v1993
      %v2010 = vunpack.c.l.bf16 %v1994
      %v2011 = vunpack.c.l.bf16 %v1995
      %v2012 = vunpack.c.l.bf16 %v1996
      %v2013 = vunpack.c.l.bf16 %v1997
      %v2014 = vunpack.c.l.bf16 %v1998
      %v2015 = vunpack.c.l.bf16 %v1999
      %v2016 = vunpack.c.l.bf16 %v2000
      %v2017 = vunpack.c.l.bf16 %v2001
      %v2018 = vunpack.c.l.bf16 %v2002
      %v2019 = vunpack.c.l.bf16 %v2003
      %v2020 = vunpack.c.l.bf16 %v2004
      %v2021 = vunpack.c.l.bf16 %v2005
      %v2022 = vunpack.c.l.bf16 %v2006
      %v2023 = vunpack.c.l.bf16 %v2007
      %v2024 = vunpack.c.l.bf16 %v2008
      %v2025 = vadd.f32 %v1976, %v2009
      %v2026 = vadd.f32 %v1977, %v2010
      %v2027 = vadd.f32 %v1978, %v2011
      %v2028 = vadd.f32 %v1979, %v2012
      %v2029 = vadd.f32 %v1980, %v2013
      %v2030 = vadd.f32 %v1981, %v2014
      %v2031 = vadd.f32 %v1982, %v2015
      %v2032 = vadd.f32 %v1983, %v2016
      %v2033 = vadd.f32 %v1984, %v2017
      %v2034 = vadd.f32 %v1985, %v2018
      %v2035 = vadd.f32 %v1986, %v2019
      %v2036 = vadd.f32 %v1987, %v2020
      %v2037 = vadd.f32 %v1988, %v2021
      %v2038 = vadd.f32 %v1989, %v2022
      %v2039 = vadd.f32 %v1990, %v2023
      %v2040 = vadd.f32 %v1991, %v2024
      %v2041 = vmul.f32 %v2025, 0.2
      %v2042 = vmul.f32 %v2026, 0.2
      %v2043 = vmul.f32 %v2027, 0.2
      %v2044 = vmul.f32 %v2028, 0.2
      %v2045 = vmul.f32 %v2029, 0.2
      %v2046 = vmul.f32 %v2030, 0.2
      %v2047 = vmul.f32 %v2031, 0.2
      %v2048 = vmul.f32 %v2032, 0.2
      %v2049 = vmul.f32 %v2033, 0.2
      %v2050 = vmul.f32 %v2034, 0.2
      %v2051 = vmul.f32 %v2035, 0.2
      %v2052 = vmul.f32 %v2036, 0.2
      %v2053 = vmul.f32 %v2037, 0.2
      %v2054 = vmul.f32 %v2038, 0.2
      %v2055 = vmul.f32 %v2039, 0.2
      %v2056 = vmul.f32 %v2040, 0.2
      %v2057 = vmax.f32 %v2025, %v2041
      %v2058 = vmax.f32 %v2026, %v2042
      %v2059 = vmax.f32 %v2027, %v2043
      %v2060 = vmax.f32 %v2028, %v2044
      %v2061 = vmax.f32 %v2029, %v2045
      %v2062 = vmax.f32 %v2030, %v2046
      %v2063 = vmax.f32 %v2031, %v2047
      %v2064 = vmax.f32 %v2032, %v2048
      %v2065 = vmax.f32 %v2033, %v2049
      %v2066 = vmax.f32 %v2034, %v2050
      %v2067 = vmax.f32 %v2035, %v2051
      %v2068 = vmax.f32 %v2036, %v2052
      %v2069 = vmax.f32 %v2037, %v2053
      %v2070 = vmax.f32 %v2038, %v2054
      %v2071 = vmax.f32 %v2039, %v2055
      %v2072 = vmax.f32 %v2040, %v2056
      %2073 = vmax.xlane.f32.xlu0 %v2057
      %v2074 = vpop.xlane.xlu0 %2073
      %2075 = vmax.xlane.f32.xlu0 %v2058
      %v2076 = vpop.xlane.xlu0 %2075
      %2077 = vmax.xlane.f32.xlu0 %v2059
      %v2078 = vpop.xlane.xlu0 %2077
      %2079 = vmax.xlane.f32.xlu0 %v2060
      %v2080 = vpop.xlane.xlu0 %2079
      %2081 = vmax.xlane.f32.xlu0 %v2061
      %v2082 = vpop.xlane.xlu0 %2081
      %2083 = vmax.xlane.f32.xlu0 %v2062
      %v2084 = vpop.xlane.xlu0 %2083
      %2085 = vmax.xlane.f32.xlu0 %v2063
      %v2086 = vpop.xlane.xlu0 %2085
      %2087 = vmax.xlane.f32.xlu0 %v2064
      %v2088 = vpop.xlane.xlu0 %2087
      %2089 = vmax.xlane.f32.xlu0 %v2065
      %v2090 = vpop.xlane.xlu0 %2089
      %2091 = vmax.xlane.f32.xlu0 %v2066
      %v2092 = vpop.xlane.xlu0 %2091
      %2093 = vmax.xlane.f32.xlu0 %v2067
      %v2094 = vpop.xlane.xlu0 %2093
      %2095 = vmax.xlane.f32.xlu0 %v2068
      %v2096 = vpop.xlane.xlu0 %2095
      %2097 = vmax.xlane.f32.xlu0 %v2069
      %v2098 = vpop.xlane.xlu0 %2097
      %2099 = vmax.xlane.f32.xlu0 %v2070
      %v2100 = vpop.xlane.xlu0 %2099
      %2101 = vmax.xlane.f32.xlu0 %v2071
      %v2102 = vpop.xlane.xlu0 %2101
      %2103 = vmax.xlane.f32.xlu0 %v2072
      %v2104 = vpop.xlane.xlu0 %2103
      %v2105 = vsub.f32 %v2057, %v2074
      %v2106 = vsub.f32 %v2058, %v2076
      %v2107 = vsub.f32 %v2059, %v2078
      %v2108 = vsub.f32 %v2060, %v2080
      %v2109 = vsub.f32 %v2061, %v2082
      %v2110 = vsub.f32 %v2062, %v2084
      %v2111 = vsub.f32 %v2063, %v2086
      %v2112 = vsub.f32 %v2064, %v2088
      %v2113 = vsub.f32 %v2065, %v2090
      %v2114 = vsub.f32 %v2066, %v2092
      %v2115 = vsub.f32 %v2067, %v2094
      %v2116 = vsub.f32 %v2068, %v2096
      %v2117 = vsub.f32 %v2069, %v2098
      %v2118 = vsub.f32 %v2070, %v2100
      %v2119 = vsub.f32 %v2071, %v2102
      %v2120 = vsub.f32 %v2072, %v2104
      %v2121 = vmul.f32 %v2105, 1.442695
      %v2122 = vpow.pop %v2121
      %v2123 = vmul.f32 %v2106, 1.442695
      %v2124 = vpow.pop %v2123
      %v2125 = vmul.f32 %v2107, 1.442695
      %v2126 = vpow.pop %v2125
      %v2127 = vmul.f32 %v2108, 1.442695
      %v2128 = vpow.pop %v2127
      %v2129 = vmul.f32 %v2109, 1.442695
      %v2130 = vpow.pop %v2129
      %v2131 = vmul.f32 %v2110, 1.442695
      %v2132 = vpow.pop %v2131
      %v2133 = vmul.f32 %v2111, 1.442695
      %v2134 = vpow.pop %v2133
      %v2135 = vmul.f32 %v2112, 1.442695
      %v2136 = vpow.pop %v2135
      %v2137 = vmul.f32 %v2113, 1.442695
      %v2138 = vpow.pop %v2137
      %v2139 = vmul.f32 %v2114, 1.442695
      %v2140 = vpow.pop %v2139
      %v2141 = vmul.f32 %v2115, 1.442695
      %v2142 = vpow.pop %v2141
      %v2143 = vmul.f32 %v2116, 1.442695
      %v2144 = vpow.pop %v2143
      %v2145 = vmul.f32 %v2117, 1.442695
      %v2146 = vpow.pop %v2145
      %v2147 = vmul.f32 %v2118, 1.442695
      %v2148 = vpow.pop %v2147
      %v2149 = vmul.f32 %v2119, 1.442695
      %v2150 = vpow.pop %v2149
      %v2151 = vmul.f32 %v2120, 1.442695
      %v2152 = vpow.pop %v2151
      %2153 = vadd.xlane.f32.xlu0 %v2122
      %v2154 = vpop.xlane.xlu0 %2153
      %2155 = vadd.xlane.f32.xlu0 %v2124
      %v2156 = vpop.xlane.xlu0 %2155
      %2157 = vadd.xlane.f32.xlu0 %v2126
      %v2158 = vpop.xlane.xlu0 %2157
      %2159 = vadd.xlane.f32.xlu0 %v2128
      %v2160 = vpop.xlane.xlu0 %2159
      %2161 = vadd.xlane.f32.xlu0 %v2130
      %v2162 = vpop.xlane.xlu0 %2161
      %2163 = vadd.xlane.f32.xlu0 %v2132
      %v2164 = vpop.xlane.xlu0 %2163
      %2165 = vadd.xlane.f32.xlu0 %v2134
      %v2166 = vpop.xlane.xlu0 %2165
      %2167 = vadd.xlane.f32.xlu0 %v2136
      %v2168 = vpop.xlane.xlu0 %2167
      %2169 = vadd.xlane.f32.xlu0 %v2138
      %v2170 = vpop.xlane.xlu0 %2169
      %2171 = vadd.xlane.f32.xlu0 %v2140
      %v2172 = vpop.xlane.xlu0 %2171
      %2173 = vadd.xlane.f32.xlu0 %v2142
      %v2174 = vpop.xlane.xlu0 %2173
      %2175 = vadd.xlane.f32.xlu0 %v2144
      %v2176 = vpop.xlane.xlu0 %2175
      %2177 = vadd.xlane.f32.xlu0 %v2146
      %v2178 = vpop.xlane.xlu0 %2177
      %2179 = vadd.xlane.f32.xlu0 %v2148
      %v2180 = vpop.xlane.xlu0 %2179
      %2181 = vadd.xlane.f32.xlu0 %v2150
      %v2182 = vpop.xlane.xlu0 %2181
      %2183 = vadd.xlane.f32.xlu0 %v2152
      %v2184 = vpop.xlane.xlu0 %2183
      %v2185 = vrcp.pop %v2154
      %v2186 = vrcp.pop %v2156
      %v2187 = vrcp.pop %v2158
      %v2188 = vrcp.pop %v2160
      %v2189 = vrcp.pop %v2162
      %v2190 = vrcp.pop %v2164
      %v2191 = vrcp.pop %v2166
      %v2192 = vrcp.pop %v2168
      %v2193 = vrcp.pop %v2170
      %v2194 = vrcp.pop %v2172
      %v2195 = vrcp.pop %v2174
      %v2196 = vrcp.pop %v2176
      %v2197 = vrcp.pop %v2178
      %v2198 = vrcp.pop %v2180
      %v2199 = vrcp.pop %v2182
      %v2200 = vrcp.pop %v2184
      %v2201 = vmul.f32 %v2122, %v2185
      %v2202 = vmul.f32 %v2124, %v2186
      %v2203 = vmul.f32 %v2126, %v2187
      %v2204 = vmul.f32 %v2128, %v2188
      %v2205 = vmul.f32 %v2130, %v2189
      %v2206 = vmul.f32 %v2132, %v2190
      %v2207 = vmul.f32 %v2134, %v2191
      %v2208 = vmul.f32 %v2136, %v2192
      %v2209 = vmul.f32 %v2138, %v2193
      %v2210 = vmul.f32 %v2140, %v2194
      %v2211 = vmul.f32 %v2142, %v2195
      %v2212 = vmul.f32 %v2144, %v2196
      %v2213 = vmul.f32 %v2146, %v2197
      %v2214 = vmul.f32 %v2148, %v2198
      %v2215 = vmul.f32 %v2150, %v2199
      %v2216 = vmul.f32 %v2152, %v2200
      %v2217 = vpack.c.bf16 %v2202, %v2201
      %v2218 = vpack.c.bf16 %v2204, %v2203
      %v2219 = vpack.c.bf16 %v2206, %v2205
      %v2220 = vpack.c.bf16 %v2208, %v2207
      %v2221 = vpack.c.bf16 %v2210, %v2209
      %v2222 = vpack.c.bf16 %v2212, %v2211
      %v2223 = vpack.c.bf16 %v2214, %v2213
      %v2224 = vpack.c.bf16 %v2216, %v2215
      %2225 = vrot.lane.b32.xlu0 %v982, 64
      %v2226 = vpop.permute.xlu0 %2225
      %2227 = vrot.lane.b32.xlu0 %v983, 64
      %v2228 = vpop.permute.xlu0 %2227
      %2229 = vrot.lane.b32.xlu0 %v984, 64
      %v2230 = vpop.permute.xlu0 %2229
      %2231 = vrot.lane.b32.xlu0 %v985, 64
      %v2232 = vpop.permute.xlu0 %2231
      %2233 = vrot.lane.b32.xlu0 %v986, 64
      %v2234 = vpop.permute.xlu0 %2233
      %2235 = vrot.lane.b32.xlu0 %v987, 64
      %v2236 = vpop.permute.xlu0 %2235
      %2237 = vrot.lane.b32.xlu0 %v988, 64
      %v2238 = vpop.permute.xlu0 %2237
      %2239 = vrot.lane.b32.xlu0 %v989, 64
      %v2240 = vpop.permute.xlu0 %2239
      %2249 = vmatprep.subr.bf16.mxu0 0
      %2250 = vmatpush1.bf16.msra.mxu0 %v2226
      %2251 = vmatprep.subr.bf16.mxu0 0
      %2252 = vmatpush1.bf16.msra.mxu0 %v2228
      %2253 = vmatprep.subr.bf16.mxu0 0
      %2254 = vmatpush1.bf16.msra.mxu0 %v2230
      %2255 = vmatprep.subr.bf16.mxu0 0
      %2256 = vmatpush1.bf16.msra.mxu0 %v2232
      %2257 = vmatprep.subr.bf16.mxu0 0
      %2258 = vmatpush1.bf16.msra.mxu0 %v2234
      %2259 = vmatprep.subr.bf16.mxu0 0
      %2260 = vmatpush1.bf16.msra.mxu0 %v2236
      %2261 = vmatprep.subr.bf16.mxu0 0
      %2262 = vmatpush1.bf16.msra.mxu0 %v2238
      %2263 = vmatprep.subr.bf16.mxu0 0
      %2264 = vmatpush1.bf16.msra.mxu0 %v2240
      %2265 = vmatprep.subr.bf16.mxu0 0
      %2266 = vmatpush1.bf16.msra.mxu0 0
      %2267 = vmatprep.subr.bf16.mxu0 0
      %2268 = vmatpush1.bf16.msra.mxu0 0
      %2269 = vmatprep.subr.bf16.mxu0 0
      %2270 = vmatpush1.bf16.msra.mxu0 0
      %2271 = vmatprep.subr.bf16.mxu0 0
      %2272 = vmatpush1.bf16.msra.mxu0 0
      %2273 = vmatprep.subr.bf16.mxu0 0
      %2274 = vmatpush1.bf16.msra.mxu0 0
      %2275 = vmatprep.subr.bf16.mxu0 0
      %2276 = vmatpush1.bf16.msra.mxu0 0
      %2277 = vmatprep.subr.bf16.mxu0 0
      %2278 = vmatpush1.bf16.msra.mxu0 0
      %2279 = vmatprep.subr.bf16.mxu0 0
      %2280 = vmatpush1.bf16.msra.mxu0 0
      %2281 = vmatprep.mubr.bf16.mxu0 0
      %2282 = vmatmul.mubr.bf16.gmra.mrb[0].mxu0 %v2217
      %v2283 = vpop.f32.mrb[0].mxu0
      %v2284 = vadd.f32 0.0, %v2283
      %v2285 = vpop.f32.mrb[0].mxu0
      %v2286 = vpop.f32.mrb[0].mxu0
      %v2287 = vadd.f32 0.0, %v2286
      %v2288 = vpop.f32.mrb[0].mxu0
      %2289 = vmatprep.mubr.bf16.mxu0 0
      %2290 = vmatmul.mubr.bf16.gmra.mrb[0].mxu0 %v2218
      %v2291 = vpop.f32.mrb[0].mxu0
      %v2292 = vadd.f32 0.0, %v2291
      %v2293 = vpop.f32.mrb[0].mxu0
      %v2294 = vpop.f32.mrb[0].mxu0
      %v2295 = vadd.f32 0.0, %v2294
      %v2296 = vpop.f32.mrb[0].mxu0
      %2297 = vmatprep.mubr.bf16.mxu0 0
      %2298 = vmatmul.mubr.bf16.gmra.mrb[0].mxu0 %v2219
      %v2299 = vpop.f32.mrb[0].mxu0
      %v2300 = vadd.f32 0.0, %v2299
      %v2301 = vpop.f32.mrb[0].mxu0
      %v2302 = vpop.f32.mrb[0].mxu0
      %v2303 = vadd.f32 0.0, %v2302
      %v2304 = vpop.f32.mrb[0].mxu0
      %2305 = vmatprep.mubr.bf16.mxu0 0
      %2306 = vmatmul.mubr.bf16.gmra.mrb[0].mxu0 %v2220
      %v2307 = vpop.f32.mrb[0].mxu0
      %v2308 = vadd.f32 0.0, %v2307
      %v2309 = vpop.f32.mrb[0].mxu0
      %v2310 = vpop.f32.mrb[0].mxu0
      %v2311 = vadd.f32 0.0, %v2310
      %v2312 = vpop.f32.mrb[0].mxu0
      %2313 = vmatprep.mubr.bf16.mxu0 0
      %2314 = vmatmul.mubr.bf16.gmra.mrb[0].mxu0 %v2221
      %v2315 = vpop.f32.mrb[0].mxu0
      %v2316 = vadd.f32 0.0, %v2315
      %v2317 = vpop.f32.mrb[0].mxu0
      %v2318 = vpop.f32.mrb[0].mxu0
      %v2319 = vadd.f32 0.0, %v2318
      %v2320 = vpop.f32.mrb[0].mxu0
      %2321 = vmatprep.mubr.bf16.mxu0 0
      %2322 = vmatmul.mubr.bf16.gmra.mrb[0].mxu0 %v2222
      %v2323 = vpop.f32.mrb[0].mxu0
      %v2324 = vadd.f32 0.0, %v2323
      %v2325 = vpop.f32.mrb[0].mxu0
      %v2326 = vpop.f32.mrb[0].mxu0
      %v2327 = vadd.f32 0.0, %v2326
      %v2328 = vpop.f32.mrb[0].mxu0
      %2329 = vmatprep.mubr.bf16.mxu0 0
      %2330 = vmatmul.mubr.bf16.gmra.mrb[0].mxu0 %v2223
      %v2331 = vpop.f32.mrb[0].mxu0
      %v2332 = vadd.f32 0.0, %v2331
      %v2333 = vpop.f32.mrb[0].mxu0
      %v2334 = vpop.f32.mrb[0].mxu0
      %v2335 = vadd.f32 0.0, %v2334
      %v2336 = vpop.f32.mrb[0].mxu0
      %2337 = vmatprep.mubr.bf16.mxu0 0
      %2338 = vmatmul.mubr.bf16.gmra.mrb[0].mxu0 %v2224
      %v2339 = vpop.f32.mrb[0].mxu0
      %v2340 = vadd.f32 0.0, %v2339
      %v2341 = vpop.f32.mrb[0].mxu0
      %v2342 = vpop.f32.mrb[0].mxu0
      %v2343 = vadd.f32 0.0, %v2342
      %v2344 = vpop.f32.mrb[0].mxu0
      %2345 = vdwg.mxu0
      %2346 = vset.pattern.permute.xlu0 3
      %2347 = vperm.xlu0 %2346, %v906
      %v2348 = vpop.permute.xlu0 %2347
      %2350 = vset.pattern.permute.xlu0 3
      %2351 = vperm.xlu0 %2350, %v910
      %v2352 = vpop.permute.xlu0 %2351
      %2354 = vset.pattern.permute.xlu0 3
      %2355 = vperm.xlu0 %2354, %v916
      %v2356 = vpop.permute.xlu0 %2355
      %2358 = vset.pattern.permute.xlu0 3
      %2359 = vperm.xlu0 %2358, %v920
      %v2360 = vpop.permute.xlu0 %2359
      %2362 = vset.pattern.permute.xlu0 3
      %2363 = vperm.xlu0 %2362, %v926
      %v2364 = vpop.permute.xlu0 %2363
      %2366 = vset.pattern.permute.xlu0 3
      %2367 = vperm.xlu0 %2366, %v930
      %v2368 = vpop.permute.xlu0 %2367
      %2370 = vset.pattern.permute.xlu0 3
      %2371 = vperm.xlu0 %2370, %v936
      %v2372 = vpop.permute.xlu0 %2371
      %2374 = vset.pattern.permute.xlu0 3
      %2375 = vperm.xlu0 %2374, %v940
      %v2376 = vpop.permute.xlu0 %2375
      %2378 = vset.pattern.permute.xlu0 3
      %2379 = vperm.xlu0 %2378, %v946
      %v2380 = vpop.permute.xlu0 %2379
      %2382 = vset.pattern.permute.xlu0 3
      %2383 = vperm.xlu0 %2382, %v950
      %v2384 = vpop.permute.xlu0 %2383
      %2386 = vset.pattern.permute.xlu0 3
      %2387 = vperm.xlu0 %2386, %v956
      %v2388 = vpop.permute.xlu0 %2387
      %2390 = vset.pattern.permute.xlu0 3
      %2391 = vperm.xlu0 %2390, %v960
      %v2392 = vpop.permute.xlu0 %2391
      %2394 = vset.pattern.permute.xlu0 3
      %2395 = vperm.xlu0 %2394, %v966
      %v2396 = vpop.permute.xlu0 %2395
      %2398 = vset.pattern.permute.xlu0 3
      %2399 = vperm.xlu0 %2398, %v970
      %v2400 = vpop.permute.xlu0 %2399
      %2402 = vset.pattern.permute.xlu0 3
      %2403 = vperm.xlu0 %2402, %v976
      %v2404 = vpop.permute.xlu0 %2403
      %2406 = vset.pattern.permute.xlu0 3
      %2407 = vperm.xlu0 %2406, %v980
      %v2408 = vpop.permute.xlu0 %2407
      %v2410 = vlaneseq
      %v2411 = vshrl.u32 %v2410, 7
      %v2412 = vsub.s32 3, %v2411
      %v2413 = vrot.slane %v1028, %v2412
      %v2414 = vadd.f32 %v2348, %v2413
      %v2415 = vadd.f32 %v2352, %v2413
      %v2416 = vadd.f32 %v2356, %v2413
      %v2417 = vadd.f32 %v2360, %v2413
      %v2418 = vadd.f32 %v2364, %v2413
      %v2419 = vadd.f32 %v2368, %v2413
      %v2420 = vadd.f32 %v2372, %v2413
      %v2421 = vadd.f32 %v2376, %v2413
      %v2422 = vadd.f32 %v2380, %v2413
      %v2423 = vadd.f32 %v2384, %v2413
      %v2424 = vadd.f32 %v2388, %v2413
      %v2425 = vadd.f32 %v2392, %v2413
      %v2426 = vadd.f32 %v2396, %v2413
      %v2427 = vadd.f32 %v2400, %v2413
      %v2428 = vadd.f32 %v2404, %v2413
      %v2429 = vadd.f32 %v2408, %v2413
      %s2430 = scalar_lea.vmem %s342, 192
      %v2431 = vld [vmem:[%s2430] sm:$0xf]
      %v2432 = vld [vmem:[%s2430 + $0x4] sm:$0xf]
      %v2433 = vld [vmem:[%s2430 + $0x8] sm:$0xf]
      %v2434 = vld [vmem:[%s2430 + $0xc] sm:$0xf]
      %v2435 = vld [vmem:[%s2430 + $0x10] sm:$0xf]
      %v2436 = vld [vmem:[%s2430 + $0x14] sm:$0xf]
      %v2437 = vld [vmem:[%s2430 + $0x18] sm:$0xf]
      %v2438 = vld [vmem:[%s2430 + $0x1c] sm:$0xf]
      %v2439 = vld [vmem:[%s2430 + $0x20] sm:$0xf]
      %v2440 = vld [vmem:[%s2430 + $0x24] sm:$0xf]
      %v2441 = vld [vmem:[%s2430 + $0x28] sm:$0xf]
      %v2442 = vld [vmem:[%s2430 + $0x2c] sm:$0xf]
      %v2443 = vld [vmem:[%s2430 + $0x30] sm:$0xf]
      %v2444 = vld [vmem:[%s2430 + $0x34] sm:$0xf]
      %v2445 = vld [vmem:[%s2430 + $0x38] sm:$0xf]
      %v2446 = vld [vmem:[%s2430 + $0x3c] sm:$0xf]
      %v2447 = vunpack.c.l.bf16 %v2431
      %v2448 = vunpack.c.l.bf16 %v2432
      %v2449 = vunpack.c.l.bf16 %v2433
      %v2450 = vunpack.c.l.bf16 %v2434
      %v2451 = vunpack.c.l.bf16 %v2435
      %v2452 = vunpack.c.l.bf16 %v2436
      %v2453 = vunpack.c.l.bf16 %v2437
      %v2454 = vunpack.c.l.bf16 %v2438
      %v2455 = vunpack.c.l.bf16 %v2439
      %v2456 = vunpack.c.l.bf16 %v2440
      %v2457 = vunpack.c.l.bf16 %v2441
      %v2458 = vunpack.c.l.bf16 %v2442
      %v2459 = vunpack.c.l.bf16 %v2443
      %v2460 = vunpack.c.l.bf16 %v2444
      %v2461 = vunpack.c.l.bf16 %v2445
      %v2462 = vunpack.c.l.bf16 %v2446
      %v2463 = vadd.f32 %v2414, %v2447
      %v2464 = vadd.f32 %v2415, %v2448
      %v2465 = vadd.f32 %v2416, %v2449
      %v2466 = vadd.f32 %v2417, %v2450
      %v2467 = vadd.f32 %v2418, %v2451
      %v2468 = vadd.f32 %v2419, %v2452
      %v2469 = vadd.f32 %v2420, %v2453
      %v2470 = vadd.f32 %v2421, %v2454
      %v2471 = vadd.f32 %v2422, %v2455
      %v2472 = vadd.f32 %v2423, %v2456
      %v2473 = vadd.f32 %v2424, %v2457
      %v2474 = vadd.f32 %v2425, %v2458
      %v2475 = vadd.f32 %v2426, %v2459
      %v2476 = vadd.f32 %v2427, %v2460
      %v2477 = vadd.f32 %v2428, %v2461
      %v2478 = vadd.f32 %v2429, %v2462
      %v2479 = vmul.f32 %v2463, 0.2
      %v2480 = vmul.f32 %v2464, 0.2
      %v2481 = vmul.f32 %v2465, 0.2
      %v2482 = vmul.f32 %v2466, 0.2
      %v2483 = vmul.f32 %v2467, 0.2
      %v2484 = vmul.f32 %v2468, 0.2
      %v2485 = vmul.f32 %v2469, 0.2
      %v2486 = vmul.f32 %v2470, 0.2
      %v2487 = vmul.f32 %v2471, 0.2
      %v2488 = vmul.f32 %v2472, 0.2
      %v2489 = vmul.f32 %v2473, 0.2
      %v2490 = vmul.f32 %v2474, 0.2
      %v2491 = vmul.f32 %v2475, 0.2
      %v2492 = vmul.f32 %v2476, 0.2
      %v2493 = vmul.f32 %v2477, 0.2
      %v2494 = vmul.f32 %v2478, 0.2
      %v2495 = vmax.f32 %v2463, %v2479
      %v2496 = vmax.f32 %v2464, %v2480
      %v2497 = vmax.f32 %v2465, %v2481
      %v2498 = vmax.f32 %v2466, %v2482
      %v2499 = vmax.f32 %v2467, %v2483
      %v2500 = vmax.f32 %v2468, %v2484
      %v2501 = vmax.f32 %v2469, %v2485
      %v2502 = vmax.f32 %v2470, %v2486
      %v2503 = vmax.f32 %v2471, %v2487
      %v2504 = vmax.f32 %v2472, %v2488
      %v2505 = vmax.f32 %v2473, %v2489
      %v2506 = vmax.f32 %v2474, %v2490
      %v2507 = vmax.f32 %v2475, %v2491
      %v2508 = vmax.f32 %v2476, %v2492
      %v2509 = vmax.f32 %v2477, %v2493
      %v2510 = vmax.f32 %v2478, %v2494
      %2511 = vmax.xlane.f32.xlu0 %v2495
      %v2512 = vpop.xlane.xlu0 %2511
      %2513 = vmax.xlane.f32.xlu0 %v2496
      %v2514 = vpop.xlane.xlu0 %2513
      %2515 = vmax.xlane.f32.xlu0 %v2497
      %v2516 = vpop.xlane.xlu0 %2515
      %2517 = vmax.xlane.f32.xlu0 %v2498
      %v2518 = vpop.xlane.xlu0 %2517
      %2519 = vmax.xlane.f32.xlu0 %v2499
      %v2520 = vpop.xlane.xlu0 %2519
      %2521 = vmax.xlane.f32.xlu0 %v2500
      %v2522 = vpop.xlane.xlu0 %2521
      %2523 = vmax.xlane.f32.xlu0 %v2501
      %v2524 = vpop.xlane.xlu0 %2523
      %2525 = vmax.xlane.f32.xlu0 %v2502
      %v2526 = vpop.xlane.xlu0 %2525
      %2527 = vmax.xlane.f32.xlu0 %v2503
      %v2528 = vpop.xlane.xlu0 %2527
      %2529 = vmax.xlane.f32.xlu0 %v2504
      %v2530 = vpop.xlane.xlu0 %2529
      %2531 = vmax.xlane.f32.xlu0 %v2505
      %v2532 = vpop.xlane.xlu0 %2531
      %2533 = vmax.xlane.f32.xlu0 %v2506
      %v2534 = vpop.xlane.xlu0 %2533
      %2535 = vmax.xlane.f32.xlu0 %v2507
      %v2536 = vpop.xlane.xlu0 %2535
      %2537 = vmax.xlane.f32.xlu0 %v2508
      %v2538 = vpop.xlane.xlu0 %2537
      %2539 = vmax.xlane.f32.xlu0 %v2509
      %v2540 = vpop.xlane.xlu0 %2539
      %2541 = vmax.xlane.f32.xlu0 %v2510
      %v2542 = vpop.xlane.xlu0 %2541
      %v2543 = vsub.f32 %v2495, %v2512
      %v2544 = vsub.f32 %v2496, %v2514
      %v2545 = vsub.f32 %v2497, %v2516
      %v2546 = vsub.f32 %v2498, %v2518
      %v2547 = vsub.f32 %v2499, %v2520
      %v2548 = vsub.f32 %v2500, %v2522
      %v2549 = vsub.f32 %v2501, %v2524
      %v2550 = vsub.f32 %v2502, %v2526
      %v2551 = vsub.f32 %v2503, %v2528
      %v2552 = vsub.f32 %v2504, %v2530
      %v2553 = vsub.f32 %v2505, %v2532
      %v2554 = vsub.f32 %v2506, %v2534
      %v2555 = vsub.f32 %v2507, %v2536
      %v2556 = vsub.f32 %v2508, %v2538
      %v2557 = vsub.f32 %v2509, %v2540
      %v2558 = vsub.f32 %v2510, %v2542
      %v2559 = vmul.f32 %v2543, 1.442695
      %v2560 = vpow.pop %v2559
      %v2561 = vmul.f32 %v2544, 1.442695
      %v2562 = vpow.pop %v2561
      %v2563 = vmul.f32 %v2545, 1.442695
      %v2564 = vpow.pop %v2563
      %v2565 = vmul.f32 %v2546, 1.442695
      %v2566 = vpow.pop %v2565
      %v2567 = vmul.f32 %v2547, 1.442695
      %v2568 = vpow.pop %v2567
      %v2569 = vmul.f32 %v2548, 1.442695
      %v2570 = vpow.pop %v2569
      %v2571 = vmul.f32 %v2549, 1.442695
      %v2572 = vpow.pop %v2571
      %v2573 = vmul.f32 %v2550, 1.442695
      %v2574 = vpow.pop %v2573
      %v2575 = vmul.f32 %v2551, 1.442695
      %v2576 = vpow.pop %v2575
      %v2577 = vmul.f32 %v2552, 1.442695
      %v2578 = vpow.pop %v2577
      %v2579 = vmul.f32 %v2553, 1.442695
      %v2580 = vpow.pop %v2579
      %v2581 = vmul.f32 %v2554, 1.442695
      %v2582 = vpow.pop %v2581
      %v2583 = vmul.f32 %v2555, 1.442695
      %v2584 = vpow.pop %v2583
      %v2585 = vmul.f32 %v2556, 1.442695
      %v2586 = vpow.pop %v2585
      %v2587 = vmul.f32 %v2557, 1.442695
      %v2588 = vpow.pop %v2587
      %v2589 = vmul.f32 %v2558, 1.442695
      %v2590 = vpow.pop %v2589
      %2591 = vadd.xlane.f32.xlu0 %v2560
      %v2592 = vpop.xlane.xlu0 %2591
      %2593 = vadd.xlane.f32.xlu0 %v2562
      %v2594 = vpop.xlane.xlu0 %2593
      %2595 = vadd.xlane.f32.xlu0 %v2564
      %v2596 = vpop.xlane.xlu0 %2595
      %2597 = vadd.xlane.f32.xlu0 %v2566
      %v2598 = vpop.xlane.xlu0 %2597
      %2599 = vadd.xlane.f32.xlu0 %v2568
      %v2600 = vpop.xlane.xlu0 %2599
      %2601 = vadd.xlane.f32.xlu0 %v2570
      %v2602 = vpop.xlane.xlu0 %2601
      %2603 = vadd.xlane.f32.xlu0 %v2572
      %v2604 = vpop.xlane.xlu0 %2603
      %2605 = vadd.xlane.f32.xlu0 %v2574
      %v2606 = vpop.xlane.xlu0 %2605
      %2607 = vadd.xlane.f32.xlu0 %v2576
      %v2608 = vpop.xlane.xlu0 %2607
      %2609 = vadd.xlane.f32.xlu0 %v2578
      %v2610 = vpop.xlane.xlu0 %2609
      %2611 = vadd.xlane.f32.xlu0 %v2580
      %v2612 = vpop.xlane.xlu0 %2611
      %2613 = vadd.xlane.f32.xlu0 %v2582
      %v2614 = vpop.xlane.xlu0 %2613
      %2615 = vadd.xlane.f32.xlu0 %v2584
      %v2616 = vpop.xlane.xlu0 %2615
      %2617 = vadd.xlane.f32.xlu0 %v2586
      %v2618 = vpop.xlane.xlu0 %2617
      %2619 = vadd.xlane.f32.xlu0 %v2588
      %v2620 = vpop.xlane.xlu0 %2619
      %2621 = vadd.xlane.f32.xlu0 %v2590
      %v2622 = vpop.xlane.xlu0 %2621
      %v2623 = vrcp.pop %v2592
      %v2624 = vrcp.pop %v2594
      %v2625 = vrcp.pop %v2596
      %v2626 = vrcp.pop %v2598
      %v2627 = vrcp.pop %v2600
      %v2628 = vrcp.pop %v2602
      %v2629 = vrcp.pop %v2604
      %v2630 = vrcp.pop %v2606
      %v2631 = vrcp.pop %v2608
      %v2632 = vrcp.pop %v2610
      %v2633 = vrcp.pop %v2612
      %v2634 = vrcp.pop %v2614
      %v2635 = vrcp.pop %v2616
      %v2636 = vrcp.pop %v2618
      %v2637 = vrcp.pop %v2620
      %v2638 = vrcp.pop %v2622
      %v2639 = vmul.f32 %v2560, %v2623
      %v2640 = vmul.f32 %v2562, %v2624
      %v2641 = vmul.f32 %v2564, %v2625
      %v2642 = vmul.f32 %v2566, %v2626
      %v2643 = vmul.f32 %v2568, %v2627
      %v2644 = vmul.f32 %v2570, %v2628
      %v2645 = vmul.f32 %v2572, %v2629
      %v2646 = vmul.f32 %v2574, %v2630
      %v2647 = vmul.f32 %v2576, %v2631
      %v2648 = vmul.f32 %v2578, %v2632
      %v2649 = vmul.f32 %v2580, %v2633
      %v2650 = vmul.f32 %v2582, %v2634
      %v2651 = vmul.f32 %v2584, %v2635
      %v2652 = vmul.f32 %v2586, %v2636
      %v2653 = vmul.f32 %v2588, %v2637
      %v2654 = vmul.f32 %v2590, %v2638
      %v2655 = vpack.c.bf16 %v2640, %v2639
      %v2656 = vpack.c.bf16 %v2642, %v2641
      %v2657 = vpack.c.bf16 %v2644, %v2643
      %v2658 = vpack.c.bf16 %v2646, %v2645
      %v2659 = vpack.c.bf16 %v2648, %v2647
      %v2660 = vpack.c.bf16 %v2650, %v2649
      %v2661 = vpack.c.bf16 %v2652, %v2651
      %v2662 = vpack.c.bf16 %v2654, %v2653
      %2663 = vrot.lane.b32.xlu0 %v982, 32
      %v2664 = vpop.permute.xlu0 %2663
      %2665 = vrot.lane.b32.xlu0 %v983, 32
      %v2666 = vpop.permute.xlu0 %2665
      %2667 = vrot.lane.b32.xlu0 %v984, 32
      %v2668 = vpop.permute.xlu0 %2667
      %2669 = vrot.lane.b32.xlu0 %v985, 32
      %v2670 = vpop.permute.xlu0 %2669
      %2671 = vrot.lane.b32.xlu0 %v986, 32
      %v2672 = vpop.permute.xlu0 %2671
      %2673 = vrot.lane.b32.xlu0 %v987, 32
      %v2674 = vpop.permute.xlu0 %2673
      %2675 = vrot.lane.b32.xlu0 %v988, 32
      %v2676 = vpop.permute.xlu0 %2675
      %2677 = vrot.lane.b32.xlu0 %v989, 32
      %v2678 = vpop.permute.xlu0 %2677
      %2687 = vmatprep.subr.bf16.mxu0 0
      %2688 = vmatpush1.bf16.msra.mxu0 %v2664
      %2689 = vmatprep.subr.bf16.mxu0 0
      %2690 = vmatpush1.bf16.msra.mxu0 %v2666
      %2691 = vmatprep.subr.bf16.mxu0 0
      %2692 = vmatpush1.bf16.msra.mxu0 %v2668
      %2693 = vmatprep.subr.bf16.mxu0 0
      %2694 = vmatpush1.bf16.msra.mxu0 %v2670
      %2695 = vmatprep.subr.bf16.mxu0 0
      %2696 = vmatpush1.bf16.msra.mxu0 %v2672
      %2697 = vmatprep.subr.bf16.mxu0 0
      %2698 = vmatpush1.bf16.msra.mxu0 %v2674
      %2699 = vmatprep.subr.bf16.mxu0 0
      %2700 = vmatpush1.bf16.msra.mxu0 %v2676
      %2701 = vmatprep.subr.bf16.mxu0 0
      %2702 = vmatpush1.bf16.msra.mxu0 %v2678
      %2703 = vmatprep.subr.bf16.mxu0 0
      %2704 = vmatpush1.bf16.msra.mxu0 0
      %2705 = vmatprep.subr.bf16.mxu0 0
      %2706 = vmatpush1.bf16.msra.mxu0 0
      %2707 = vmatprep.subr.bf16.mxu0 0
      %2708 = vmatpush1.bf16.msra.mxu0 0
      %2709 = vmatprep.subr.bf16.mxu0 0
      %2710 = vmatpush1.bf16.msra.mxu0 0
      %2711 = vmatprep.subr.bf16.mxu0 0
      %2712 = vmatpush1.bf16.msra.mxu0 0
      %2713 = vmatprep.subr.bf16.mxu0 0
      %2714 = vmatpush1.bf16.msra.mxu0 0
      %2715 = vmatprep.subr.bf16.mxu0 0
      %2716 = vmatpush1.bf16.msra.mxu0 0
      %2717 = vmatprep.subr.bf16.mxu0 0
      %2718 = vmatpush1.bf16.msra.mxu0 0
      %2719 = vmatprep.mubr.bf16.mxu0 0
      %2720 = vmatmul.mubr.bf16.gmra.mrb[0].mxu0 %v2655
      %v2721 = vpop.f32.mrb[0].mxu0
      %v2722 = vadd.f32 0.0, %v2721
      %v2723 = vpop.f32.mrb[0].mxu0
      %v2724 = vpop.f32.mrb[0].mxu0
      %v2725 = vadd.f32 0.0, %v2724
      %v2726 = vpop.f32.mrb[0].mxu0
      %2727 = vmatprep.mubr.bf16.mxu0 0
      %2728 = vmatmul.mubr.bf16.gmra.mrb[0].mxu0 %v2656
      %v2729 = vpop.f32.mrb[0].mxu0
      %v2730 = vadd.f32 0.0, %v2729
      %v2731 = vpop.f32.mrb[0].mxu0
      %v2732 = vpop.f32.mrb[0].mxu0
      %v2733 = vadd.f32 0.0, %v2732
      %v2734 = vpop.f32.mrb[0].mxu0
      %2735 = vmatprep.mubr.bf16.mxu0 0
      %2736 = vmatmul.mubr.bf16.gmra.mrb[0].mxu0 %v2657
      %v2737 = vpop.f32.mrb[0].mxu0
      %v2738 = vadd.f32 0.0, %v2737
      %v2739 = vpop.f32.mrb[0].mxu0
      %v2740 = vpop.f32.mrb[0].mxu0
      %v2741 = vadd.f32 0.0, %v2740
      %v2742 = vpop.f32.mrb[0].mxu0
      %2743 = vmatprep.mubr.bf16.mxu0 0
      %2744 = vmatmul.mubr.bf16.gmra.mrb[0].mxu0 %v2658
      %v2745 = vpop.f32.mrb[0].mxu0
      %v2746 = vadd.f32 0.0, %v2745
      %v2747 = vpop.f32.mrb[0].mxu0
      %v2748 = vpop.f32.mrb[0].mxu0
      %v2749 = vadd.f32 0.0, %v2748
      %v2750 = vpop.f32.mrb[0].mxu0
      %2751 = vmatprep.mubr.bf16.mxu0 0
      %2752 = vmatmul.mubr.bf16.gmra.mrb[0].mxu0 %v2659
      %v2753 = vpop.f32.mrb[0].mxu0
      %v2754 = vadd.f32 0.0, %v2753
      %v2755 = vpop.f32.mrb[0].mxu0
      %v2756 = vpop.f32.mrb[0].mxu0
      %v2757 = vadd.f32 0.0, %v2756
      %v2758 = vpop.f32.mrb[0].mxu0
      %2759 = vmatprep.mubr.bf16.mxu0 0
      %2760 = vmatmul.mubr.bf16.gmra.mrb[0].mxu0 %v2660
      %v2761 = vpop.f32.mrb[0].mxu0
      %v2762 = vadd.f32 0.0, %v2761
      %v2763 = vpop.f32.mrb[0].mxu0
      %v2764 = vpop.f32.mrb[0].mxu0
      %v2765 = vadd.f32 0.0, %v2764
      %v2766 = vpop.f32.mrb[0].mxu0
      %2767 = vmatprep.mubr.bf16.mxu0 0
      %2768 = vmatmul.mubr.bf16.gmra.mrb[0].mxu0 %v2661
      %v2769 = vpop.f32.mrb[0].mxu0
      %v2770 = vadd.f32 0.0, %v2769
      %v2771 = vpop.f32.mrb[0].mxu0
      %v2772 = vpop.f32.mrb[0].mxu0
      %v2773 = vadd.f32 0.0, %v2772
      %v2774 = vpop.f32.mrb[0].mxu0
      %2775 = vmatprep.mubr.bf16.mxu0 0
      %2776 = vmatmul.mubr.bf16.gmra.mrb[0].mxu0 %v2662
      %v2777 = vpop.f32.mrb[0].mxu0
      %v2778 = vadd.f32 0.0, %v2777
      %v2779 = vpop.f32.mrb[0].mxu0
      %v2780 = vpop.f32.mrb[0].mxu0
      %v2781 = vadd.f32 0.0, %v2780
      %v2782 = vpop.f32.mrb[0].mxu0
      %2783 = vdwg.mxu0
      %2800 = vrot.lane.b32.xlu0 %v1846, 32
      %v2801 = vpop.permute.xlu0 %2800
      %2802 = vrot.lane.b32.xlu0 %v1849, 32
      %v2803 = vpop.permute.xlu0 %2802
      %2804 = vrot.lane.b32.xlu0 %v1854, 32
      %v2805 = vpop.permute.xlu0 %2804
      %2806 = vrot.lane.b32.xlu0 %v1857, 32
      %v2807 = vpop.permute.xlu0 %2806
      %2808 = vrot.lane.b32.xlu0 %v1862, 32
      %v2809 = vpop.permute.xlu0 %2808
      %2810 = vrot.lane.b32.xlu0 %v1865, 32
      %v2811 = vpop.permute.xlu0 %2810
      %2812 = vrot.lane.b32.xlu0 %v1870, 32
      %v2813 = vpop.permute.xlu0 %2812
      %2814 = vrot.lane.b32.xlu0 %v1873, 32
      %v2815 = vpop.permute.xlu0 %2814
      %2816 = vrot.lane.b32.xlu0 %v1878, 32
      %v2817 = vpop.permute.xlu0 %2816
      %2818 = vrot.lane.b32.xlu0 %v1881, 32
      %v2819 = vpop.permute.xlu0 %2818
      %2820 = vrot.lane.b32.xlu0 %v1886, 32
      %v2821 = vpop.permute.xlu0 %2820
      %2822 = vrot.lane.b32.xlu0 %v1889, 32
      %v2823 = vpop.permute.xlu0 %2822
      %2824 = vrot.lane.b32.xlu0 %v1894, 32
      %v2825 = vpop.permute.xlu0 %2824
      %2826 = vrot.lane.b32.xlu0 %v1897, 32
      %v2827 = vpop.permute.xlu0 %2826
      %2828 = vrot.lane.b32.xlu0 %v1902, 32
      %v2829 = vpop.permute.xlu0 %2828
      %2830 = vrot.lane.b32.xlu0 %v1905, 32
      %v2831 = vpop.permute.xlu0 %2830
      %2864 = vrot.lane.b32.xlu0 %v2284, 64
      %v2865 = vpop.permute.xlu0 %2864
      %2866 = vrot.lane.b32.xlu0 %v2287, 64
      %v2867 = vpop.permute.xlu0 %2866
      %2868 = vrot.lane.b32.xlu0 %v2292, 64
      %v2869 = vpop.permute.xlu0 %2868
      %2870 = vrot.lane.b32.xlu0 %v2295, 64
      %v2871 = vpop.permute.xlu0 %2870
      %2872 = vrot.lane.b32.xlu0 %v2300, 64
      %v2873 = vpop.permute.xlu0 %2872
      %2874 = vrot.lane.b32.xlu0 %v2303, 64
      %v2875 = vpop.permute.xlu0 %2874
      %2876 = vrot.lane.b32.xlu0 %v2308, 64
      %v2877 = vpop.permute.xlu0 %2876
      %2878 = vrot.lane.b32.xlu0 %v2311, 64
      %v2879 = vpop.permute.xlu0 %2878
      %2880 = vrot.lane.b32.xlu0 %v2316, 64
      %v2881 = vpop.permute.xlu0 %2880
      %2882 = vrot.lane.b32.xlu0 %v2319, 64
      %v2883 = vpop.permute.xlu0 %2882
      %2884 = vrot.lane.b32.xlu0 %v2324, 64
      %v2885 = vpop.permute.xlu0 %2884
      %2886 = vrot.lane.b32.xlu0 %v2327, 64
      %v2887 = vpop.permute.xlu0 %2886
      %2888 = vrot.lane.b32.xlu0 %v2332, 64
      %v2889 = vpop.permute.xlu0 %2888
      %2890 = vrot.lane.b32.xlu0 %v2335, 64
      %v2891 = vpop.permute.xlu0 %2890
      %2892 = vrot.lane.b32.xlu0 %v2340, 64
      %v2893 = vpop.permute.xlu0 %2892
      %2894 = vrot.lane.b32.xlu0 %v2343, 64
      %v2895 = vpop.permute.xlu0 %2894
      %2928 = vrot.lane.b32.xlu0 %v2722, 96
      %v2929 = vpop.permute.xlu0 %2928
      %2930 = vrot.lane.b32.xlu0 %v2725, 96
      %v2931 = vpop.permute.xlu0 %2930
      %2932 = vrot.lane.b32.xlu0 %v2730, 96
      %v2933 = vpop.permute.xlu0 %2932
      %2934 = vrot.lane.b32.xlu0 %v2733, 96
      %v2935 = vpop.permute.xlu0 %2934
      %2936 = vrot.lane.b32.xlu0 %v2738, 96
      %v2937 = vpop.permute.xlu0 %2936
      %2938 = vrot.lane.b32.xlu0 %v2741, 96
      %v2939 = vpop.permute.xlu0 %2938
      %2940 = vrot.lane.b32.xlu0 %v2746, 96
      %v2941 = vpop.permute.xlu0 %2940
      %2942 = vrot.lane.b32.xlu0 %v2749, 96
      %v2943 = vpop.permute.xlu0 %2942
      %2944 = vrot.lane.b32.xlu0 %v2754, 96
      %v2945 = vpop.permute.xlu0 %2944
      %2946 = vrot.lane.b32.xlu0 %v2757, 96
      %v2947 = vpop.permute.xlu0 %2946
      %2948 = vrot.lane.b32.xlu0 %v2762, 96
      %v2949 = vpop.permute.xlu0 %2948
      %2950 = vrot.lane.b32.xlu0 %v2765, 96
      %v2951 = vpop.permute.xlu0 %2950
      %2952 = vrot.lane.b32.xlu0 %v2770, 96
      %v2953 = vpop.permute.xlu0 %2952
      %2954 = vrot.lane.b32.xlu0 %v2773, 96
      %v2955 = vpop.permute.xlu0 %2954
      %2956 = vrot.lane.b32.xlu0 %v2778, 96
      %v2957 = vpop.permute.xlu0 %2956
      %2958 = vrot.lane.b32.xlu0 %v2781, 96
      %v2959 = vpop.permute.xlu0 %2958
      %v2976 = vsel %vm844, %v1400, %v2801
      %v2977 = vsel %vm844, %v1403, %v2803
      %v2978 = vsel %vm844, %v1408, %v2805
      %v2979 = vsel %vm844, %v1411, %v2807
      %v2980 = vsel %vm844, %v1416, %v2809
      %v2981 = vsel %vm844, %v1419, %v2811
      %v2982 = vsel %vm844, %v1424, %v2813
      %v2983 = vsel %vm844, %v1427, %v2815
      %v2984 = vsel %vm844, %v1432, %v2817
      %v2985 = vsel %vm844, %v1435, %v2819
      %v2986 = vsel %vm844, %v1440, %v2821
      %v2987 = vsel %vm844, %v1443, %v2823
      %v2988 = vsel %vm844, %v1448, %v2825
      %v2989 = vsel %vm844, %v1451, %v2827
      %v2990 = vsel %vm844, %v1456, %v2829
      %v2991 = vsel %vm844, %v1459, %v2831
      %vm2992 = vcmask 523264
      %v2993 = vsel %vm2992, %v2976, %v2865
      %v2994 = vsel %vm2992, %v2977, %v2867
      %v2995 = vsel %vm2992, %v2978, %v2869
      %v2996 = vsel %vm2992, %v2979, %v2871
      %v2997 = vsel %vm2992, %v2980, %v2873
      %v2998 = vsel %vm2992, %v2981, %v2875
      %v2999 = vsel %vm2992, %v2982, %v2877
      %v3000 = vsel %vm2992, %v2983, %v2879
      %v3001 = vsel %vm2992, %v2984, %v2881
      %v3002 = vsel %vm2992, %v2985, %v2883
      %v3003 = vsel %vm2992, %v2986, %v2885
      %v3004 = vsel %vm2992, %v2987, %v2887
      %v3005 = vsel %vm2992, %v2988, %v2889
      %v3006 = vsel %vm2992, %v2989, %v2891
      %v3007 = vsel %vm2992, %v2990, %v2893
      %v3008 = vsel %vm2992, %v2991, %v2895
      %vm3009 = vcmask 785408
      %v3010 = vsel %vm3009, %v2993, %v2929
      %v3011 = vsel %vm3009, %v2994, %v2931
      %v3012 = vsel %vm3009, %v2995, %v2933
      %v3013 = vsel %vm3009, %v2996, %v2935
      %v3014 = vsel %vm3009, %v2997, %v2937
      %v3015 = vsel %vm3009, %v2998, %v2939
      %v3016 = vsel %vm3009, %v2999, %v2941
      %v3017 = vsel %vm3009, %v3000, %v2943
      %v3018 = vsel %vm3009, %v3001, %v2945
      %v3019 = vsel %vm3009, %v3002, %v2947
      %v3020 = vsel %vm3009, %v3003, %v2949
      %v3021 = vsel %vm3009, %v3004, %v2951
      %v3022 = vsel %vm3009, %v3005, %v2953
      %v3023 = vsel %vm3009, %v3006, %v2955
      %v3024 = vsel %vm3009, %v3007, %v2957
      %v3025 = vsel %vm3009, %v3008, %v2959
      %v3026 = vlaneseq
      %v3027 = vshrl.u32 %v3026, 7
      %v3028 = vsub.s32 1, %v3027
      %v3029 = vrot.slane %v375, %v3028
      %v3030 = vadd.f32 %v3010, %v3029
      %v3031 = vadd.f32 %v3011, %v3029
      %v3032 = vadd.f32 %v3012, %v3029
      %v3033 = vadd.f32 %v3013, %v3029
      %v3034 = vadd.f32 %v3014, %v3029
      %v3035 = vadd.f32 %v3015, %v3029
      %v3036 = vadd.f32 %v3016, %v3029
      %v3037 = vadd.f32 %v3017, %v3029
      %v3038 = vadd.f32 %v3018, %v3029
      %v3039 = vadd.f32 %v3019, %v3029
      %v3040 = vadd.f32 %v3020, %v3029
      %v3041 = vadd.f32 %v3021, %v3029
      %v3042 = vadd.f32 %v3022, %v3029
      %v3043 = vadd.f32 %v3023, %v3029
      %v3044 = vadd.f32 %v3024, %v3029
      %v3045 = vadd.f32 %v3025, %v3029
      %v3046 = vmax.f32 %v3030, 0.0
      %v3047 = vmax.f32 %v3031, 0.0
      %v3048 = vmax.f32 %v3032, 0.0
      %v3049 = vmax.f32 %v3033, 0.0
      %v3050 = vmax.f32 %v3034, 0.0
      %v3051 = vmax.f32 %v3035, 0.0
      %v3052 = vmax.f32 %v3036, 0.0
      %v3053 = vmax.f32 %v3037, 0.0
      %v3054 = vmax.f32 %v3038, 0.0
      %v3055 = vmax.f32 %v3039, 0.0
      %v3056 = vmax.f32 %v3040, 0.0
      %v3057 = vmax.f32 %v3041, 0.0
      %v3058 = vmax.f32 %v3042, 0.0
      %v3059 = vmax.f32 %v3043, 0.0
      %v3060 = vmax.f32 %v3044, 0.0
      %v3061 = vmax.f32 %v3045, 0.0
      %v3062 = vpack.c.bf16 %v3047, %v3046
      %v3063 = vpack.c.bf16 %v3049, %v3048
      %v3064 = vpack.c.bf16 %v3051, %v3050
      %v3065 = vpack.c.bf16 %v3053, %v3052
      %v3066 = vpack.c.bf16 %v3055, %v3054
      %v3067 = vpack.c.bf16 %v3057, %v3056
      %v3068 = vpack.c.bf16 %v3059, %v3058
      %v3069 = vpack.c.bf16 %v3061, %v3060
      %v3070 = vld [vmem:[%s6] sm:$0xf]
      %v3071 = vld [vmem:[%s6 + $0x4] sm:$0xf]
      %v3072 = vld [vmem:[%s6 + $0x8] sm:$0xf]
      %v3073 = vld [vmem:[%s6 + $0xc] sm:$0xf]
      %v3074 = vld [vmem:[%s6 + $0x10] sm:$0xf]
      %v3075 = vld [vmem:[%s6 + $0x14] sm:$0xf]
      %v3076 = vld [vmem:[%s6 + $0x18] sm:$0xf]
      %v3077 = vld [vmem:[%s6 + $0x1c] sm:$0xf]
      %v3078 = vld [vmem:[%s6 + $0x20] sm:$0xf]
      %v3079 = vld [vmem:[%s6 + $0x24] sm:$0xf]
      %v3080 = vld [vmem:[%s6 + $0x28] sm:$0xf]
      %v3081 = vld [vmem:[%s6 + $0x2c] sm:$0xf]
      %v3082 = vld [vmem:[%s6 + $0x30] sm:$0xf]
      %v3083 = vld [vmem:[%s6 + $0x34] sm:$0xf]
      %v3084 = vld [vmem:[%s6 + $0x38] sm:$0xf]
      %v3085 = vld [vmem:[%s6 + $0x3c] sm:$0xf]
      %v3086 = vld [vmem:[%s6 + $0x40] sm:$0xf]
      %v3103 = vunpack.c.l.b16 %v3070
      %v3104 = vunpack.c.l.b16 %v3071
      %v3105 = vunpack.c.l.b16 %v3072
      %v3106 = vunpack.c.l.b16 %v3073
      %v3107 = vunpack.c.l.b16 %v3074
      %v3108 = vunpack.c.l.b16 %v3075
      %v3109 = vunpack.c.l.b16 %v3076
      %v3110 = vunpack.c.l.b16 %v3077
      %v3111 = vunpack.c.l.b16 %v3078
      %v3112 = vunpack.c.l.b16 %v3079
      %v3113 = vunpack.c.l.b16 %v3080
      %v3114 = vunpack.c.l.b16 %v3081
      %v3115 = vunpack.c.l.b16 %v3082
      %v3116 = vunpack.c.l.b16 %v3083
      %v3117 = vunpack.c.l.b16 %v3084
      %v3118 = vunpack.c.l.b16 %v3085
      %v3119 = vpack.c.b16 %v3104, %v3103
      %v3120 = vpack.c.b16 %v3106, %v3105
      %v3121 = vpack.c.b16 %v3108, %v3107
      %v3122 = vpack.c.b16 %v3110, %v3109
      %v3123 = vpack.c.b16 %v3112, %v3111
      %v3124 = vpack.c.b16 %v3114, %v3113
      %v3125 = vpack.c.b16 %v3116, %v3115
      %v3126 = vpack.c.b16 %v3118, %v3117
      %3135 = vmatprep.subr.bf16.mxu0 0
      %3136 = vmatpush1.bf16.msra.mxu0 %v3119
      %3137 = vmatprep.subr.bf16.mxu0 0
      %3138 = vmatpush1.bf16.msra.mxu0 %v3120
      %3139 = vmatprep.subr.bf16.mxu0 0
      %3140 = vmatpush1.bf16.msra.mxu0 %v3121
      %3141 = vmatprep.subr.bf16.mxu0 0
      %3142 = vmatpush1.bf16.msra.mxu0 %v3122
      %3143 = vmatprep.subr.bf16.mxu0 0
      %3144 = vmatpush1.bf16.msra.mxu0 %v3123
      %3145 = vmatprep.subr.bf16.mxu0 0
      %3146 = vmatpush1.bf16.msra.mxu0 %v3124
      %3147 = vmatprep.subr.bf16.mxu0 0
      %3148 = vmatpush1.bf16.msra.mxu0 %v3125
      %3149 = vmatprep.subr.bf16.mxu0 0
      %3150 = vmatpush1.bf16.msra.mxu0 %v3126
      %3151 = vmatprep.subr.bf16.mxu0 0
      %3152 = vmatpush1.bf16.msra.mxu0 0
      %3153 = vmatprep.subr.bf16.mxu0 0
      %3154 = vmatpush1.bf16.msra.mxu0 0
      %3155 = vmatprep.subr.bf16.mxu0 0
      %3156 = vmatpush1.bf16.msra.mxu0 0
      %3157 = vmatprep.subr.bf16.mxu0 0
      %3158 = vmatpush1.bf16.msra.mxu0 0
      %3159 = vmatprep.subr.bf16.mxu0 0
      %3160 = vmatpush1.bf16.msra.mxu0 0
      %3161 = vmatprep.subr.bf16.mxu0 0
      %3162 = vmatpush1.bf16.msra.mxu0 0
      %3163 = vmatprep.subr.bf16.mxu0 0
      %3164 = vmatpush1.bf16.msra.mxu0 0
      %3165 = vmatprep.subr.bf16.mxu0 0
      %3166 = vmatpush1.bf16.msra.mxu0 0
      %3167 = vmatprep.mubr.bf16.mxu0 0
      %3168 = vmatmul.mubr.bf16.gmra.mrb[0].mxu0 %v3062
      %v3169 = vpop.f32.mrb[0].mxu0
      %v3170 = vadd.f32 0.0, %v3169
      %v3171 = vpop.f32.mrb[0].mxu0
      %v3172 = vpop.f32.mrb[0].mxu0
      %v3173 = vadd.f32 0.0, %v3172
      %v3174 = vpop.f32.mrb[0].mxu0
      %3175 = vmatprep.mubr.bf16.mxu0 0
      %3176 = vmatmul.mubr.bf16.gmra.mrb[0].mxu0 %v3063
      %v3177 = vpop.f32.mrb[0].mxu0
      %v3178 = vadd.f32 0.0, %v3177
      %v3179 = vpop.f32.mrb[0].mxu0
      %v3180 = vpop.f32.mrb[0].mxu0
      %v3181 = vadd.f32 0.0, %v3180
      %v3182 = vpop.f32.mrb[0].mxu0
      %3183 = vmatprep.mubr.bf16.mxu0 0
      %3184 = vmatmul.mubr.bf16.gmra.mrb[0].mxu0 %v3064
      %v3185 = vpop.f32.mrb[0].mxu0
      %v3186 = vadd.f32 0.0, %v3185
      %v3187 = vpop.f32.mrb[0].mxu0
      %v3188 = vpop.f32.mrb[0].mxu0
      %v3189 = vadd.f32 0.0, %v3188
      %v3190 = vpop.f32.mrb[0].mxu0
      %3191 = vmatprep.mubr.bf16.mxu0 0
      %3192 = vmatmul.mubr.bf16.gmra.mrb[0].mxu0 %v3065
      %v3193 = vpop.f32.mrb[0].mxu0
      %v3194 = vadd.f32 0.0, %v3193
      %v3195 = vpop.f32.mrb[0].mxu0
      %v3196 = vpop.f32.mrb[0].mxu0
      %v3197 = vadd.f32 0.0, %v3196
      %v3198 = vpop.f32.mrb[0].mxu0
      %3199 = vmatprep.mubr.bf16.mxu0 0
      %3200 = vmatmul.mubr.bf16.gmra.mrb[0].mxu0 %v3066
      %v3201 = vpop.f32.mrb[0].mxu0
      %v3202 = vadd.f32 0.0, %v3201
      %v3203 = vpop.f32.mrb[0].mxu0
      %v3204 = vpop.f32.mrb[0].mxu0
      %v3205 = vadd.f32 0.0, %v3204
      %v3206 = vpop.f32.mrb[0].mxu0
      %3207 = vmatprep.mubr.bf16.mxu0 0
      %3208 = vmatmul.mubr.bf16.gmra.mrb[0].mxu0 %v3067
      %v3209 = vpop.f32.mrb[0].mxu0
      %v3210 = vadd.f32 0.0, %v3209
      %v3211 = vpop.f32.mrb[0].mxu0
      %v3212 = vpop.f32.mrb[0].mxu0
      %v3213 = vadd.f32 0.0, %v3212
      %v3214 = vpop.f32.mrb[0].mxu0
      %3215 = vmatprep.mubr.bf16.mxu0 0
      %3216 = vmatmul.mubr.bf16.gmra.mrb[0].mxu0 %v3068
      %v3217 = vpop.f32.mrb[0].mxu0
      %v3218 = vadd.f32 0.0, %v3217
      %v3219 = vpop.f32.mrb[0].mxu0
      %v3220 = vpop.f32.mrb[0].mxu0
      %v3221 = vadd.f32 0.0, %v3220
      %v3222 = vpop.f32.mrb[0].mxu0
      %3223 = vmatprep.mubr.bf16.mxu0 0
      %3224 = vmatmul.mubr.bf16.gmra.mrb[0].mxu0 %v3069
      %v3225 = vpop.f32.mrb[0].mxu0
      %v3226 = vadd.f32 0.0, %v3225
      %v3227 = vpop.f32.mrb[0].mxu0
      %v3228 = vpop.f32.mrb[0].mxu0
      %v3229 = vadd.f32 0.0, %v3228
      %v3230 = vpop.f32.mrb[0].mxu0
      %3231 = vdwg.mxu0
      %v3232 = vpack.c.bf16 %v3173, %v3170
      %v3233 = vpack.c.bf16 %v3181, %v3178
      %v3234 = vpack.c.bf16 %v3189, %v3186
      %v3235 = vpack.c.bf16 %v3197, %v3194
      %v3236 = vpack.c.bf16 %v3205, %v3202
      %v3237 = vpack.c.bf16 %v3213, %v3210
      %v3238 = vpack.c.bf16 %v3221, %v3218
      %v3239 = vpack.c.bf16 %v3229, %v3226
      %3240 = vmatprep.subr.bf16.mxu0 0
      %3241 = vmatpush1.bf16.xpose.msra.mxu0 %v3062
      %3242 = vmatprep.subr.bf16.mxu0 0
      %3243 = vmatpush1.bf16.xpose.msra.mxu0 %v3063
      %3244 = vmatprep.subr.bf16.mxu0 0
      %3245 = vmatpush1.bf16.xpose.msra.mxu0 %v3064
      %3246 = vmatprep.subr.bf16.mxu0 0
      %3247 = vmatpush1.bf16.xpose.msra.mxu0 %v3065
      %3248 = vmatprep.subr.bf16.mxu0 0
      %3249 = vmatpush1.bf16.xpose.msra.mxu0 %v3066
      %3250 = vmatprep.subr.bf16.mxu0 0
      %3251 = vmatpush1.bf16.xpose.msra.mxu0 %v3067
      %3252 = vmatprep.subr.bf16.mxu0 0
      %3253 = vmatpush1.bf16.xpose.msra.mxu0 %v3068
      %3254 = vmatprep.subr.bf16.mxu0 0
      %3255 = vmatpush1.bf16.xpose.msra.mxu0 %v3069
      %3256 = vmatprep.subr.bf16.mxu0 0
      %3257 = vmatpush1.bf16.xpose.msra.mxu0 0
      %3258 = vmatprep.subr.bf16.mxu0 0
      %3259 = vmatpush1.bf16.xpose.msra.mxu0 0
      %3260 = vmatprep.subr.bf16.mxu0 0
      %3261 = vmatpush1.bf16.xpose.msra.mxu0 0
      %3262 = vmatprep.subr.bf16.mxu0 0
      %3263 = vmatpush1.bf16.xpose.msra.mxu0 0
      %3264 = vmatprep.subr.bf16.mxu0 0
      %3265 = vmatpush1.bf16.xpose.msra.mxu0 0
      %3266 = vmatprep.subr.bf16.mxu0 0
      %3267 = vmatpush1.bf16.xpose.msra.mxu0 0
      %3268 = vmatprep.subr.bf16.mxu0 0
      %3269 = vmatpush1.bf16.xpose.msra.mxu0 0
      %3270 = vmatprep.subr.bf16.mxu0 0
      %3271 = vmatpush1.bf16.xpose.msra.mxu0 0
      %3272 = vmatprep.mubr.bf16.mxu0 0
      %3273 = vmatmul.mubr.bf16.gmra.mrb[0].mxu0 %v3086
      %v3274 = vpop.f32.mrb[0].mxu0
      %v3275 = vadd.f32 0.0, %v3274
      %v3276 = vpop.f32.mrb[0].mxu0
      %v3277 = vpop.f32.mrb[0].mxu0
      %v3278 = vpop.f32.mrb[0].mxu0
      %3279 = vdwg.mxu0
      %3281 = vset.pattern.permute.xlu0 32
      %3282 = vperm.xlu0 %3281, %v3170
      %v3283 = vpop.permute.xlu0 %3282
      %3286 = vset.pattern.permute.xlu0 32
      %3287 = vperm.xlu0 %3286, %v3173
      %v3288 = vpop.permute.xlu0 %3287
      %3291 = vset.pattern.permute.xlu0 32
      %3292 = vperm.xlu0 %3291, %v3178
      %v3293 = vpop.permute.xlu0 %3292
      %3296 = vset.pattern.permute.xlu0 32
      %3297 = vperm.xlu0 %3296, %v3181
      %v3298 = vpop.permute.xlu0 %3297
      %3301 = vset.pattern.permute.xlu0 32
      %3302 = vperm.xlu0 %3301, %v3186
      %v3303 = vpop.permute.xlu0 %3302
      %3306 = vset.pattern.permute.xlu0 32
      %3307 = vperm.xlu0 %3306, %v3189
      %v3308 = vpop.permute.xlu0 %3307
      %3311 = vset.pattern.permute.xlu0 32
      %3312 = vperm.xlu0 %3311, %v3194
      %v3313 = vpop.permute.xlu0 %3312
      %3316 = vset.pattern.permute.xlu0 32
      %3317 = vperm.xlu0 %3316, %v3197
      %v3318 = vpop.permute.xlu0 %3317
      %3321 = vset.pattern.permute.xlu0 32
      %3322 = vperm.xlu0 %3321, %v3202
      %v3323 = vpop.permute.xlu0 %3322
      %3326 = vset.pattern.permute.xlu0 32
      %3327 = vperm.xlu0 %3326, %v3205
      %v3328 = vpop.permute.xlu0 %3327
      %3331 = vset.pattern.permute.xlu0 32
      %3332 = vperm.xlu0 %3331, %v3210
      %v3333 = vpop.permute.xlu0 %3332
      %3336 = vset.pattern.permute.xlu0 32
      %3337 = vperm.xlu0 %3336, %v3213
      %v3338 = vpop.permute.xlu0 %3337
      %3341 = vset.pattern.permute.xlu0 32
      %3342 = vperm.xlu0 %3341, %v3218
      %v3343 = vpop.permute.xlu0 %3342
      %3346 = vset.pattern.permute.xlu0 32
      %3347 = vperm.xlu0 %3346, %v3221
      %v3348 = vpop.permute.xlu0 %3347
      %3351 = vset.pattern.permute.xlu0 32
      %3352 = vperm.xlu0 %3351, %v3226
      %v3353 = vpop.permute.xlu0 %3352
      %3356 = vset.pattern.permute.xlu0 32
      %3357 = vperm.xlu0 %3356, %v3229
      %v3358 = vpop.permute.xlu0 %3357
      %v3360 = vlaneseq
      %v3361 = vshrl.u32 %v3360, 7
      %v3362 = vsub.s32 0, %v3361
      %v3363 = vrot.slane %v3275, %v3362
      %v3364 = vadd.f32 %v3283, %v3363
      %v3365 = vadd.f32 %v3288, %v3363
      %v3366 = vadd.f32 %v3293, %v3363
      %v3367 = vadd.f32 %v3298, %v3363
      %v3368 = vadd.f32 %v3303, %v3363
      %v3369 = vadd.f32 %v3308, %v3363
      %v3370 = vadd.f32 %v3313, %v3363
      %v3371 = vadd.f32 %v3318, %v3363
      %v3372 = vadd.f32 %v3323, %v3363
      %v3373 = vadd.f32 %v3328, %v3363
      %v3374 = vadd.f32 %v3333, %v3363
      %v3375 = vadd.f32 %v3338, %v3363
      %v3376 = vadd.f32 %v3343, %v3363
      %v3377 = vadd.f32 %v3348, %v3363
      %v3378 = vadd.f32 %v3353, %v3363
      %v3379 = vadd.f32 %v3358, %v3363
      %v3380 = vld [vmem:[%s347] sm:$0xf]
      %v3381 = vld [vmem:[%s347 + $0x4] sm:$0xf]
      %v3382 = vld [vmem:[%s347 + $0x8] sm:$0xf]
      %v3383 = vld [vmem:[%s347 + $0xc] sm:$0xf]
      %v3384 = vld [vmem:[%s347 + $0x10] sm:$0xf]
      %v3385 = vld [vmem:[%s347 + $0x14] sm:$0xf]
      %v3386 = vld [vmem:[%s347 + $0x18] sm:$0xf]
      %v3387 = vld [vmem:[%s347 + $0x1c] sm:$0xf]
      %v3388 = vld [vmem:[%s347 + $0x20] sm:$0xf]
      %v3389 = vld [vmem:[%s347 + $0x24] sm:$0xf]
      %v3390 = vld [vmem:[%s347 + $0x28] sm:$0xf]
      %v3391 = vld [vmem:[%s347 + $0x2c] sm:$0xf]
      %v3392 = vld [vmem:[%s347 + $0x30] sm:$0xf]
      %v3393 = vld [vmem:[%s347 + $0x34] sm:$0xf]
      %v3394 = vld [vmem:[%s347 + $0x38] sm:$0xf]
      %v3395 = vld [vmem:[%s347 + $0x3c] sm:$0xf]
      %v3396 = vunpack.c.l.bf16 %v3380
      %v3397 = vunpack.c.l.bf16 %v3381
      %v3398 = vunpack.c.l.bf16 %v3382
      %v3399 = vunpack.c.l.bf16 %v3383
      %v3400 = vunpack.c.l.bf16 %v3384
      %v3401 = vunpack.c.l.bf16 %v3385
      %v3402 = vunpack.c.l.bf16 %v3386
      %v3403 = vunpack.c.l.bf16 %v3387
      %v3404 = vunpack.c.l.bf16 %v3388
      %v3405 = vunpack.c.l.bf16 %v3389
      %v3406 = vunpack.c.l.bf16 %v3390
      %v3407 = vunpack.c.l.bf16 %v3391
      %v3408 = vunpack.c.l.bf16 %v3392
      %v3409 = vunpack.c.l.bf16 %v3393
      %v3410 = vunpack.c.l.bf16 %v3394
      %v3411 = vunpack.c.l.bf16 %v3395
      %v3412 = vadd.f32 %v3364, %v3396
      %v3413 = vadd.f32 %v3365, %v3397
      %v3414 = vadd.f32 %v3366, %v3398
      %v3415 = vadd.f32 %v3367, %v3399
      %v3416 = vadd.f32 %v3368, %v3400
      %v3417 = vadd.f32 %v3369, %v3401
      %v3418 = vadd.f32 %v3370, %v3402
      %v3419 = vadd.f32 %v3371, %v3403
      %v3420 = vadd.f32 %v3372, %v3404
      %v3421 = vadd.f32 %v3373, %v3405
      %v3422 = vadd.f32 %v3374, %v3406
      %v3423 = vadd.f32 %v3375, %v3407
      %v3424 = vadd.f32 %v3376, %v3408
      %v3425 = vadd.f32 %v3377, %v3409
      %v3426 = vadd.f32 %v3378, %v3410
      %v3427 = vadd.f32 %v3379, %v3411
      %v3428 = vmul.f32 %v3412, 0.2
      %v3429 = vmul.f32 %v3413, 0.2
      %v3430 = vmul.f32 %v3414, 0.2
      %v3431 = vmul.f32 %v3415, 0.2
      %v3432 = vmul.f32 %v3416, 0.2
      %v3433 = vmul.f32 %v3417, 0.2
      %v3434 = vmul.f32 %v3418, 0.2
      %v3435 = vmul.f32 %v3419, 0.2
      %v3436 = vmul.f32 %v3420, 0.2
      %v3437 = vmul.f32 %v3421, 0.2
      %v3438 = vmul.f32 %v3422, 0.2
      %v3439 = vmul.f32 %v3423, 0.2
      %v3440 = vmul.f32 %v3424, 0.2
      %v3441 = vmul.f32 %v3425, 0.2
      %v3442 = vmul.f32 %v3426, 0.2
      %v3443 = vmul.f32 %v3427, 0.2
      %v3444 = vmax.f32 %v3412, %v3428
      %v3445 = vmax.f32 %v3413, %v3429
      %v3446 = vmax.f32 %v3414, %v3430
      %v3447 = vmax.f32 %v3415, %v3431
      %v3448 = vmax.f32 %v3416, %v3432
      %v3449 = vmax.f32 %v3417, %v3433
      %v3450 = vmax.f32 %v3418, %v3434
      %v3451 = vmax.f32 %v3419, %v3435
      %v3452 = vmax.f32 %v3420, %v3436
      %v3453 = vmax.f32 %v3421, %v3437
      %v3454 = vmax.f32 %v3422, %v3438
      %v3455 = vmax.f32 %v3423, %v3439
      %v3456 = vmax.f32 %v3424, %v3440
      %v3457 = vmax.f32 %v3425, %v3441
      %v3458 = vmax.f32 %v3426, %v3442
      %v3459 = vmax.f32 %v3427, %v3443
      %3460 = vmax.xlane.f32.xlu0 %v3444
      %v3461 = vpop.xlane.xlu0 %3460
      %3462 = vmax.xlane.f32.xlu0 %v3445
      %v3463 = vpop.xlane.xlu0 %3462
      %3464 = vmax.xlane.f32.xlu0 %v3446
      %v3465 = vpop.xlane.xlu0 %3464
      %3466 = vmax.xlane.f32.xlu0 %v3447
      %v3467 = vpop.xlane.xlu0 %3466
      %3468 = vmax.xlane.f32.xlu0 %v3448
      %v3469 = vpop.xlane.xlu0 %3468
      %3470 = vmax.xlane.f32.xlu0 %v3449
      %v3471 = vpop.xlane.xlu0 %3470
      %3472 = vmax.xlane.f32.xlu0 %v3450
      %v3473 = vpop.xlane.xlu0 %3472
      %3474 = vmax.xlane.f32.xlu0 %v3451
      %v3475 = vpop.xlane.xlu0 %3474
      %3476 = vmax.xlane.f32.xlu0 %v3452
      %v3477 = vpop.xlane.xlu0 %3476
      %3478 = vmax.xlane.f32.xlu0 %v3453
      %v3479 = vpop.xlane.xlu0 %3478
      %3480 = vmax.xlane.f32.xlu0 %v3454
      %v3481 = vpop.xlane.xlu0 %3480
      %3482 = vmax.xlane.f32.xlu0 %v3455
      %v3483 = vpop.xlane.xlu0 %3482
      %3484 = vmax.xlane.f32.xlu0 %v3456
      %v3485 = vpop.xlane.xlu0 %3484
      %3486 = vmax.xlane.f32.xlu0 %v3457
      %v3487 = vpop.xlane.xlu0 %3486
      %3488 = vmax.xlane.f32.xlu0 %v3458
      %v3489 = vpop.xlane.xlu0 %3488
      %3490 = vmax.xlane.f32.xlu0 %v3459
      %v3491 = vpop.xlane.xlu0 %3490
      %v3492 = vsub.f32 %v3444, %v3461
      %v3493 = vsub.f32 %v3445, %v3463
      %v3494 = vsub.f32 %v3446, %v3465
      %v3495 = vsub.f32 %v3447, %v3467
      %v3496 = vsub.f32 %v3448, %v3469
      %v3497 = vsub.f32 %v3449, %v3471
      %v3498 = vsub.f32 %v3450, %v3473
      %v3499 = vsub.f32 %v3451, %v3475
      %v3500 = vsub.f32 %v3452, %v3477
      %v3501 = vsub.f32 %v3453, %v3479
      %v3502 = vsub.f32 %v3454, %v3481
      %v3503 = vsub.f32 %v3455, %v3483
      %v3504 = vsub.f32 %v3456, %v3485
      %v3505 = vsub.f32 %v3457, %v3487
      %v3506 = vsub.f32 %v3458, %v3489
      %v3507 = vsub.f32 %v3459, %v3491
      %v3508 = vmul.f32 %v3492, 1.442695
      %v3509 = vpow.pop %v3508
      %v3510 = vmul.f32 %v3493, 1.442695
      %v3511 = vpow.pop %v3510
      %v3512 = vmul.f32 %v3494, 1.442695
      %v3513 = vpow.pop %v3512
      %v3514 = vmul.f32 %v3495, 1.442695
      %v3515 = vpow.pop %v3514
      %v3516 = vmul.f32 %v3496, 1.442695
      %v3517 = vpow.pop %v3516
      %v3518 = vmul.f32 %v3497, 1.442695
      %v3519 = vpow.pop %v3518
      %v3520 = vmul.f32 %v3498, 1.442695
      %v3521 = vpow.pop %v3520
      %v3522 = vmul.f32 %v3499, 1.442695
      %v3523 = vpow.pop %v3522
      %v3524 = vmul.f32 %v3500, 1.442695
      %v3525 = vpow.pop %v3524
      %v3526 = vmul.f32 %v3501, 1.442695
      %v3527 = vpow.pop %v3526
      %v3528 = vmul.f32 %v3502, 1.442695
      %v3529 = vpow.pop %v3528
      %v3530 = vmul.f32 %v3503, 1.442695
      %v3531 = vpow.pop %v3530
      %v3532 = vmul.f32 %v3504, 1.442695
      %v3533 = vpow.pop %v3532
      %v3534 = vmul.f32 %v3505, 1.442695
      %v3535 = vpow.pop %v3534
      %v3536 = vmul.f32 %v3506, 1.442695
      %v3537 = vpow.pop %v3536
      %v3538 = vmul.f32 %v3507, 1.442695
      %v3539 = vpow.pop %v3538
      %3540 = vadd.xlane.f32.xlu0 %v3509
      %v3541 = vpop.xlane.xlu0 %3540
      %3542 = vadd.xlane.f32.xlu0 %v3511
      %v3543 = vpop.xlane.xlu0 %3542
      %3544 = vadd.xlane.f32.xlu0 %v3513
      %v3545 = vpop.xlane.xlu0 %3544
      %3546 = vadd.xlane.f32.xlu0 %v3515
      %v3547 = vpop.xlane.xlu0 %3546
      %3548 = vadd.xlane.f32.xlu0 %v3517
      %v3549 = vpop.xlane.xlu0 %3548
      %3550 = vadd.xlane.f32.xlu0 %v3519
      %v3551 = vpop.xlane.xlu0 %3550
      %3552 = vadd.xlane.f32.xlu0 %v3521
      %v3553 = vpop.xlane.xlu0 %3552
      %3554 = vadd.xlane.f32.xlu0 %v3523
      %v3555 = vpop.xlane.xlu0 %3554
      %3556 = vadd.xlane.f32.xlu0 %v3525
      %v3557 = vpop.xlane.xlu0 %3556
      %3558 = vadd.xlane.f32.xlu0 %v3527
      %v3559 = vpop.xlane.xlu0 %3558
      %3560 = vadd.xlane.f32.xlu0 %v3529
      %v3561 = vpop.xlane.xlu0 %3560
      %3562 = vadd.xlane.f32.xlu0 %v3531
      %v3563 = vpop.xlane.xlu0 %3562
      %3564 = vadd.xlane.f32.xlu0 %v3533
      %v3565 = vpop.xlane.xlu0 %3564
      %3566 = vadd.xlane.f32.xlu0 %v3535
      %v3567 = vpop.xlane.xlu0 %3566
      %3568 = vadd.xlane.f32.xlu0 %v3537
      %v3569 = vpop.xlane.xlu0 %3568
      %3570 = vadd.xlane.f32.xlu0 %v3539
      %v3571 = vpop.xlane.xlu0 %3570
      %v3572 = vrcp.pop %v3541
      %v3573 = vrcp.pop %v3543
      %v3574 = vrcp.pop %v3545
      %v3575 = vrcp.pop %v3547
      %v3576 = vrcp.pop %v3549
      %v3577 = vrcp.pop %v3551
      %v3578 = vrcp.pop %v3553
      %v3579 = vrcp.pop %v3555
      %v3580 = vrcp.pop %v3557
      %v3581 = vrcp.pop %v3559
      %v3582 = vrcp.pop %v3561
      %v3583 = vrcp.pop %v3563
      %v3584 = vrcp.pop %v3565
      %v3585 = vrcp.pop %v3567
      %v3586 = vrcp.pop %v3569
      %v3587 = vrcp.pop %v3571
      %v3588 = vmul.f32 %v3509, %v3572
      %v3589 = vmul.f32 %v3511, %v3573
      %v3590 = vmul.f32 %v3513, %v3574
      %v3591 = vmul.f32 %v3515, %v3575
      %v3592 = vmul.f32 %v3517, %v3576
      %v3593 = vmul.f32 %v3519, %v3577
      %v3594 = vmul.f32 %v3521, %v3578
      %v3595 = vmul.f32 %v3523, %v3579
      %v3596 = vmul.f32 %v3525, %v3580
      %v3597 = vmul.f32 %v3527, %v3581
      %v3598 = vmul.f32 %v3529, %v3582
      %v3599 = vmul.f32 %v3531, %v3583
      %v3600 = vmul.f32 %v3533, %v3584
      %v3601 = vmul.f32 %v3535, %v3585
      %v3602 = vmul.f32 %v3537, %v3586
      %v3603 = vmul.f32 %v3539, %v3587
      %v3604 = vpack.c.bf16 %v3589, %v3588
      %v3605 = vpack.c.bf16 %v3591, %v3590
      %v3606 = vpack.c.bf16 %v3593, %v3592
      %v3607 = vpack.c.bf16 %v3595, %v3594
      %v3608 = vpack.c.bf16 %v3597, %v3596
      %v3609 = vpack.c.bf16 %v3599, %v3598
      %v3610 = vpack.c.bf16 %v3601, %v3600
      %v3611 = vpack.c.bf16 %v3603, %v3602
      %v3612 = vlaneseq
      %v3613 = vshrl.u32 %v3612, 7
      %v3614 = vsub.s32 2, %v3613
      %v3615 = vrot.slane %v375, %v3614
      %3616 = vmatprep.subr.bf16.mxu0 0
      %3617 = vmatpush1.bf16.msra.mxu0 %v3232
      %3618 = vmatprep.subr.bf16.mxu0 0
      %3619 = vmatpush1.bf16.msra.mxu0 %v3233
      %3620 = vmatprep.subr.bf16.mxu0 0
      %3621 = vmatpush1.bf16.msra.mxu0 %v3234
      %3622 = vmatprep.subr.bf16.mxu0 0
      %3623 = vmatpush1.bf16.msra.mxu0 %v3235
      %3624 = vmatprep.subr.bf16.mxu0 0
      %3625 = vmatpush1.bf16.msra.mxu0 %v3236
      %3626 = vmatprep.subr.bf16.mxu0 0
      %3627 = vmatpush1.bf16.msra.mxu0 %v3237
      %3628 = vmatprep.subr.bf16.mxu0 0
      %3629 = vmatpush1.bf16.msra.mxu0 %v3238
      %3630 = vmatprep.subr.bf16.mxu0 0
      %3631 = vmatpush1.bf16.msra.mxu0 %v3239
      %3632 = vmatprep.subr.bf16.mxu0 0
      %3633 = vmatpush1.bf16.msra.mxu0 0
      %3634 = vmatprep.subr.bf16.mxu0 0
      %3635 = vmatpush1.bf16.msra.mxu0 0
      %3636 = vmatprep.subr.bf16.mxu0 0
      %3637 = vmatpush1.bf16.msra.mxu0 0
      %3638 = vmatprep.subr.bf16.mxu0 0
      %3639 = vmatpush1.bf16.msra.mxu0 0
      %3640 = vmatprep.subr.bf16.mxu0 0
      %3641 = vmatpush1.bf16.msra.mxu0 0
      %3642 = vmatprep.subr.bf16.mxu0 0
      %3643 = vmatpush1.bf16.msra.mxu0 0
      %3644 = vmatprep.subr.bf16.mxu0 0
      %3645 = vmatpush1.bf16.msra.mxu0 0
      %3646 = vmatprep.subr.bf16.mxu0 0
      %3647 = vmatpush1.bf16.msra.mxu0 0
      %3648 = vmatprep.mubr.bf16.mxu0 0
      %3649 = vmatmul.mubr.bf16.gmra.mrb[0].mxu0 %v3604
      %v3650 = vpop.f32.mrb[0].mxu0
      %v3651 = vadd.f32 %v3615, %v3650
      %v3652 = vpop.f32.mrb[0].mxu0
      %v3653 = vpop.f32.mrb[0].mxu0
      %v3654 = vadd.f32 %v3615, %v3653
      %v3655 = vpop.f32.mrb[0].mxu0
      %3656 = vmatprep.mubr.bf16.mxu0 0
      %3657 = vmatmul.mubr.bf16.gmra.mrb[0].mxu0 %v3605
      %v3658 = vpop.f32.mrb[0].mxu0
      %v3659 = vadd.f32 %v3615, %v3658
      %v3660 = vpop.f32.mrb[0].mxu0
      %v3661 = vpop.f32.mrb[0].mxu0
      %v3662 = vadd.f32 %v3615, %v3661
      %v3663 = vpop.f32.mrb[0].mxu0
      %3664 = vmatprep.mubr.bf16.mxu0 0
      %3665 = vmatmul.mubr.bf16.gmra.mrb[0].mxu0 %v3606
      %v3666 = vpop.f32.mrb[0].mxu0
      %v3667 = vadd.f32 %v3615, %v3666
      %v3668 = vpop.f32.mrb[0].mxu0
      %v3669 = vpop.f32.mrb[0].mxu0
      %v3670 = vadd.f32 %v3615, %v3669
      %v3671 = vpop.f32.mrb[0].mxu0
      %3672 = vmatprep.mubr.bf16.mxu0 0
      %3673 = vmatmul.mubr.bf16.gmra.mrb[0].mxu0 %v3607
      %v3674 = vpop.f32.mrb[0].mxu0
      %v3675 = vadd.f32 %v3615, %v3674
      %v3676 = vpop.f32.mrb[0].mxu0
      %v3677 = vpop.f32.mrb[0].mxu0
      %v3678 = vadd.f32 %v3615, %v3677
      %v3679 = vpop.f32.mrb[0].mxu0
      %3680 = vmatprep.mubr.bf16.mxu0 0
      %3681 = vmatmul.mubr.bf16.gmra.mrb[0].mxu0 %v3608
      %v3682 = vpop.f32.mrb[0].mxu0
      %v3683 = vadd.f32 %v3615, %v3682
      %v3684 = vpop.f32.mrb[0].mxu0
      %v3685 = vpop.f32.mrb[0].mxu0
      %v3686 = vadd.f32 %v3615, %v3685
      %v3687 = vpop.f32.mrb[0].mxu0
      %3688 = vmatprep.mubr.bf16.mxu0 0
      %3689 = vmatmul.mubr.bf16.gmra.mrb[0].mxu0 %v3609
      %v3690 = vpop.f32.mrb[0].mxu0
      %v3691 = vadd.f32 %v3615, %v3690
      %v3692 = vpop.f32.mrb[0].mxu0
      %v3693 = vpop.f32.mrb[0].mxu0
      %v3694 = vadd.f32 %v3615, %v3693
      %v3695 = vpop.f32.mrb[0].mxu0
      %3696 = vmatprep.mubr.bf16.mxu0 0
      %3697 = vmatmul.mubr.bf16.gmra.mrb[0].mxu0 %v3610
      %v3698 = vpop.f32.mrb[0].mxu0
      %v3699 = vadd.f32 %v3615, %v3698
      %v3700 = vpop.f32.mrb[0].mxu0
      %v3701 = vpop.f32.mrb[0].mxu0
      %v3702 = vadd.f32 %v3615, %v3701
      %v3703 = vpop.f32.mrb[0].mxu0
      %3704 = vmatprep.mubr.bf16.mxu0 0
      %3705 = vmatmul.mubr.bf16.gmra.mrb[0].mxu0 %v3611
      %v3706 = vpop.f32.mrb[0].mxu0
      %v3707 = vadd.f32 %v3615, %v3706
      %v3708 = vpop.f32.mrb[0].mxu0
      %v3709 = vpop.f32.mrb[0].mxu0
      %v3710 = vadd.f32 %v3615, %v3709
      %v3711 = vpop.f32.mrb[0].mxu0
      %3712 = vdwg.mxu0
      %v3713 = vmax.f32 %v3651, 0.0
      %v3714 = vmax.f32 %v3654, 0.0
      %v3715 = vmax.f32 %v3659, 0.0
      %v3716 = vmax.f32 %v3662, 0.0
      %v3717 = vmax.f32 %v3667, 0.0
      %v3718 = vmax.f32 %v3670, 0.0
      %v3719 = vmax.f32 %v3675, 0.0
      %v3720 = vmax.f32 %v3678, 0.0
      %v3721 = vmax.f32 %v3683, 0.0
      %v3722 = vmax.f32 %v3686, 0.0
      %v3723 = vmax.f32 %v3691, 0.0
      %v3724 = vmax.f32 %v3694, 0.0
      %v3725 = vmax.f32 %v3699, 0.0
      %v3726 = vmax.f32 %v3702, 0.0
      %v3727 = vmax.f32 %v3707, 0.0
      %v3728 = vmax.f32 %v3710, 0.0
      %v3729 = vlaneseq
      %v3730 = vshrl.u32 %v3729, 7
      %v3731 = vsub.s32 0, %v3730
      %v3732 = vrot.slane %v380, %v3731
      %v3734 = vsel %vm844, %v3713, 0
      %v3737 = vsel %vm844, %v3714, 0
      %v3740 = vsel %vm844, %v3715, 0
      %v3743 = vsel %vm844, %v3716, 0
      %v3746 = vsel %vm844, %v3717, 0
      %v3749 = vsel %vm844, %v3718, 0
      %v3752 = vsel %vm844, %v3719, 0
      %v3755 = vsel %vm844, %v3720, 0
      %v3758 = vsel %vm844, %v3721, 0
      %v3761 = vsel %vm844, %v3722, 0
      %v3764 = vsel %vm844, %v3723, 0
      %v3767 = vsel %vm844, %v3724, 0
      %v3770 = vsel %vm844, %v3725, 0
      %v3773 = vsel %vm844, %v3726, 0
      %v3776 = vsel %vm844, %v3727, 0
      %v3779 = vsel %vm844, %v3728, 0
      %3781 = vmatprep.subr.mxu0 0.0
      %3782 = vmatpush1.msra.mxu0 %v376
      %3783 = vmatprep.subr.mxu0 0.0
      %3784 = vmatpush1.msra.mxu0 %v377
      %3785 = vmatprep.subr.mxu0 0.0
      %3786 = vmatpush1.msra.mxu0 %v378
      %3787 = vmatprep.subr.mxu0 0.0
      %3788 = vmatpush1.msra.mxu0 %v379
      %3789 = vmatprep.subr.mxu0 0.0
      %3790 = vmatpush1.msra.mxu0 0.0
      %3791 = vmatprep.subr.mxu0 0.0
      %3792 = vmatpush1.msra.mxu0 0.0
      %3793 = vmatprep.subr.mxu0 0.0
      %3794 = vmatpush1.msra.mxu0 0.0
      %3795 = vmatprep.subr.mxu0 0.0
      %3796 = vmatpush1.msra.mxu0 0.0
      %3797 = vmatprep.subr.mxu0 0.0
      %3798 = vmatpush1.msra.mxu0 0.0
      %3799 = vmatprep.subr.mxu0 0.0
      %3800 = vmatpush1.msra.mxu0 0.0
      %3801 = vmatprep.subr.mxu0 0.0
      %3802 = vmatpush1.msra.mxu0 0.0
      %3803 = vmatprep.subr.mxu0 0.0
      %3804 = vmatpush1.msra.mxu0 0.0
      %3805 = vmatprep.subr.mxu0 0.0
      %3806 = vmatpush1.msra.mxu0 0.0
      %3807 = vmatprep.subr.mxu0 0.0
      %3808 = vmatpush1.msra.mxu0 0.0
      %3809 = vmatprep.subr.mxu0 0.0
      %3810 = vmatpush1.msra.mxu0 0.0
      %3811 = vmatprep.subr.mxu0 0.0
      %3812 = vmatpush1.msra.mxu0 0.0
      %3813 = vmatprep.subr.mxu0 0.0
      %3814 = vmatpush1.msra.mxu0 0.0
      %3815 = vmatprep.subr.mxu0 0.0
      %3816 = vmatpush1.msra.mxu0 0.0
      %3817 = vmatprep.subr.mxu0 0.0
      %3818 = vmatpush1.msra.mxu0 0.0
      %3819 = vmatprep.subr.mxu0 0.0
      %3820 = vmatpush1.msra.mxu0 0.0
      %3821 = vmatprep.subr.mxu0 0.0
      %3822 = vmatpush1.msra.mxu0 0.0
      %3823 = vmatprep.subr.mxu0 0.0
      %3824 = vmatpush1.msra.mxu0 0.0
      %3825 = vmatprep.subr.mxu0 0.0
      %3826 = vmatpush1.msra.mxu0 0.0
      %3827 = vmatprep.subr.mxu0 0.0
      %3828 = vmatpush1.msra.mxu0 0.0
      %3829 = vmatprep.subr.mxu0 0.0
      %3830 = vmatpush1.msra.mxu0 0.0
      %3831 = vmatprep.subr.mxu0 0.0
      %3832 = vmatpush1.msra.mxu0 0.0
      %3833 = vmatprep.subr.mxu0 0.0
      %3834 = vmatpush1.msra.mxu0 0.0
      %3835 = vmatprep.subr.mxu0 0.0
      %3836 = vmatpush1.msra.mxu0 0.0
      %3837 = vmatprep.subr.mxu0 0.0
      %3838 = vmatpush1.msra.mxu0 0.0
      %3839 = vmatprep.subr.mxu0 0.0
      %3840 = vmatpush1.msra.mxu0 0.0
      %3841 = vmatprep.subr.mxu0 0.0
      %3842 = vmatpush1.msra.mxu0 0.0
      %3843 = vmatprep.subr.mxu0 0.0
      %3844 = vmatpush1.msra.mxu0 0.0
      %3845 = vmatprep.mubr.f32.mxu0 0.0
      %3846 = vmatmul.mubr.f32.gmra.mrb[0].mxu0 %v3734
      %v3847 = vpop.f32.mrb[0].mxu0
      %v3848 = vadd.f32 %v3732, %v3847
      %v3849 = vpop.f32.mrb[0].mxu0
      %3850 = vmatprep.mubr.f32.mxu0 0.0
      %3851 = vmatmul.mubr.f32.gmra.mrb[0].mxu0 %v3737
      %v3852 = vpop.f32.mrb[0].mxu0
      %v3853 = vadd.f32 %v3732, %v3852
      %v3854 = vpop.f32.mrb[0].mxu0
      %3855 = vmatprep.mubr.f32.mxu0 0.0
      %3856 = vmatmul.mubr.f32.gmra.mrb[0].mxu0 %v3740
      %v3857 = vpop.f32.mrb[0].mxu0
      %v3858 = vadd.f32 %v3732, %v3857
      %v3859 = vpop.f32.mrb[0].mxu0
      %3860 = vmatprep.mubr.f32.mxu0 0.0
      %3861 = vmatmul.mubr.f32.gmra.mrb[0].mxu0 %v3743
      %v3862 = vpop.f32.mrb[0].mxu0
      %v3863 = vadd.f32 %v3732, %v3862
      %v3864 = vpop.f32.mrb[0].mxu0
      %3865 = vmatprep.mubr.f32.mxu0 0.0
      %3866 = vmatmul.mubr.f32.gmra.mrb[0].mxu0 %v3746
      %v3867 = vpop.f32.mrb[0].mxu0
      %v3868 = vadd.f32 %v3732, %v3867
      %v3869 = vpop.f32.mrb[0].mxu0
      %3870 = vmatprep.mubr.f32.mxu0 0.0
      %3871 = vmatmul.mubr.f32.gmra.mrb[0].mxu0 %v3749
      %v3872 = vpop.f32.mrb[0].mxu0
      %v3873 = vadd.f32 %v3732, %v3872
      %v3874 = vpop.f32.mrb[0].mxu0
      %3875 = vmatprep.mubr.f32.mxu0 0.0
      %3876 = vmatmul.mubr.f32.gmra.mrb[0].mxu0 %v3752
      %v3877 = vpop.f32.mrb[0].mxu0
      %v3878 = vadd.f32 %v3732, %v3877
      %v3879 = vpop.f32.mrb[0].mxu0
      %3880 = vmatprep.mubr.f32.mxu0 0.0
      %3881 = vmatmul.mubr.f32.gmra.mrb[0].mxu0 %v3755
      %v3882 = vpop.f32.mrb[0].mxu0
      %v3883 = vadd.f32 %v3732, %v3882
      %v3884 = vpop.f32.mrb[0].mxu0
      %3885 = vmatprep.mubr.f32.mxu0 0.0
      %3886 = vmatmul.mubr.f32.gmra.mrb[0].mxu0 %v3758
      %v3887 = vpop.f32.mrb[0].mxu0
      %v3888 = vadd.f32 %v3732, %v3887
      %v3889 = vpop.f32.mrb[0].mxu0
      %3890 = vmatprep.mubr.f32.mxu0 0.0
      %3891 = vmatmul.mubr.f32.gmra.mrb[0].mxu0 %v3761
      %v3892 = vpop.f32.mrb[0].mxu0
      %v3893 = vadd.f32 %v3732, %v3892
      %v3894 = vpop.f32.mrb[0].mxu0
      %3895 = vmatprep.mubr.f32.mxu0 0.0
      %3896 = vmatmul.mubr.f32.gmra.mrb[0].mxu0 %v3764
      %v3897 = vpop.f32.mrb[0].mxu0
      %v3898 = vadd.f32 %v3732, %v3897
      %v3899 = vpop.f32.mrb[0].mxu0
      %3900 = vmatprep.mubr.f32.mxu0 0.0
      %3901 = vmatmul.mubr.f32.gmra.mrb[0].mxu0 %v3767
      %v3902 = vpop.f32.mrb[0].mxu0
      %v3903 = vadd.f32 %v3732, %v3902
      %v3904 = vpop.f32.mrb[0].mxu0
      %3905 = vmatprep.mubr.f32.mxu0 0.0
      %3906 = vmatmul.mubr.f32.gmra.mrb[0].mxu0 %v3770
      %v3907 = vpop.f32.mrb[0].mxu0
      %v3908 = vadd.f32 %v3732, %v3907
      %v3909 = vpop.f32.mrb[0].mxu0
      %3910 = vmatprep.mubr.f32.mxu0 0.0
      %3911 = vmatmul.mubr.f32.gmra.mrb[0].mxu0 %v3773
      %v3912 = vpop.f32.mrb[0].mxu0
      %v3913 = vadd.f32 %v3732, %v3912
      %v3914 = vpop.f32.mrb[0].mxu0
      %3915 = vmatprep.mubr.f32.mxu0 0.0
      %3916 = vmatmul.mubr.f32.gmra.mrb[0].mxu0 %v3776
      %v3917 = vpop.f32.mrb[0].mxu0
      %v3918 = vadd.f32 %v3732, %v3917
      %v3919 = vpop.f32.mrb[0].mxu0
      %3920 = vmatprep.mubr.f32.mxu0 0.0
      %3921 = vmatmul.mubr.f32.gmra.mrb[0].mxu0 %v3779
      %v3922 = vpop.f32.mrb[0].mxu0
      %v3923 = vadd.f32 %v3732, %v3922
      %v3924 = vpop.f32.mrb[0].mxu0
      %3925 = vdwg.mxu0
      %3926 = vst [vmem:[%s352] sm:$0xff] %v3848
      %3927 = vst [vmem:[%s352 + $0x8] sm:$0xff] %v3853
      %3928 = vst [vmem:[%s352 + $0x10] sm:$0xff] %v3858
      %3929 = vst [vmem:[%s352 + $0x18] sm:$0xff] %v3863
      %3930 = vst [vmem:[%s352 + $0x20] sm:$0xff] %v3868
      %3931 = vst [vmem:[%s352 + $0x28] sm:$0xff] %v3873
      %3932 = vst [vmem:[%s352 + $0x30] sm:$0xff] %v3878
      %3933 = vst [vmem:[%s352 + $0x38] sm:$0xff] %v3883
      %3934 = vst [vmem:[%s352 + $0x40] sm:$0xff] %v3888
      %3935 = vst [vmem:[%s352 + $0x48] sm:$0xff] %v3893
      %3936 = vst [vmem:[%s352 + $0x50] sm:$0xff] %v3898
      %3937 = vst [vmem:[%s352 + $0x58] sm:$0xff] %v3903
      %3938 = vst [vmem:[%s352 + $0x60] sm:$0xff] %v3908
      %3939 = vst [vmem:[%s352 + $0x68] sm:$0xff] %v3913
      %3940 = vst [vmem:[%s352 + $0x70] sm:$0xff] %v3918
      %3941 = vst [vmem:[%s352 + $0x78] sm:$0xff] %v3923
      %v3942 = vld [vmem:[%s3] sm:$0xff]
      %3943 = vmatprep.subr.mxu0 0.0
      %3944 = vmatpush1.msra.mxu0 %v3713
      %3945 = vmatprep.subr.mxu0 0.0
      %3946 = vmatpush1.msra.mxu0 %v3714
      %3947 = vmatprep.subr.mxu0 0.0
      %3948 = vmatpush1.msra.mxu0 %v3715
      %3949 = vmatprep.subr.mxu0 0.0
      %3950 = vmatpush1.msra.mxu0 %v3716
      %3951 = vmatprep.subr.mxu0 0.0
      %3952 = vmatpush1.msra.mxu0 %v3717
      %3953 = vmatprep.subr.mxu0 0.0
      %3954 = vmatpush1.msra.mxu0 %v3718
      %3955 = vmatprep.subr.mxu0 0.0
      %3956 = vmatpush1.msra.mxu0 %v3719
      %3957 = vmatprep.subr.mxu0 0.0
      %3958 = vmatpush1.msra.mxu0 %v3720
      %3959 = vmatprep.subr.mxu0 0.0
      %3960 = vmatpush1.msra.mxu0 %v3721
      %3961 = vmatprep.subr.mxu0 0.0
      %3962 = vmatpush1.msra.mxu0 %v3722
      %3963 = vmatprep.subr.mxu0 0.0
      %3964 = vmatpush1.msra.mxu0 %v3723
      %3965 = vmatprep.subr.mxu0 0.0
      %3966 = vmatpush1.msra.mxu0 %v3724
      %3967 = vmatprep.subr.mxu0 0.0
      %3968 = vmatpush1.msra.mxu0 %v3725
      %3969 = vmatprep.subr.mxu0 0.0
      %3970 = vmatpush1.msra.mxu0 %v3726
      %3971 = vmatprep.subr.mxu0 0.0
      %3972 = vmatpush1.msra.mxu0 %v3727
      %3973 = vmatprep.subr.mxu0 0.0
      %3974 = vmatpush1.msra.mxu0 %v3728
      %3975 = vmatprep.subr.mxu0 0.0
      %3976 = vmatpush1.msra.mxu0 0.0
      %3977 = vmatprep.subr.mxu0 0.0
      %3978 = vmatpush1.msra.mxu0 0.0
      %3979 = vmatprep.subr.mxu0 0.0
      %3980 = vmatpush1.msra.mxu0 0.0
      %3981 = vmatprep.subr.mxu0 0.0
      %3982 = vmatpush1.msra.mxu0 0.0
      %3983 = vmatprep.subr.mxu0 0.0
      %3984 = vmatpush1.msra.mxu0 0.0
      %3985 = vmatprep.subr.mxu0 0.0
      %3986 = vmatpush1.msra.mxu0 0.0
      %3987 = vmatprep.subr.mxu0 0.0
      %3988 = vmatpush1.msra.mxu0 0.0
      %3989 = vmatprep.subr.mxu0 0.0
      %3990 = vmatpush1.msra.mxu0 0.0
      %3991 = vmatprep.subr.mxu0 0.0
      %3992 = vmatpush1.msra.mxu0 0.0
      %3993 = vmatprep.subr.mxu0 0.0
      %3994 = vmatpush1.msra.mxu0 0.0
      %3995 = vmatprep.subr.mxu0 0.0
      %3996 = vmatpush1.msra.mxu0 0.0
      %3997 = vmatprep.subr.mxu0 0.0
      %3998 = vmatpush1.msra.mxu0 0.0
      %3999 = vmatprep.subr.mxu0 0.0
      %4000 = vmatpush1.msra.mxu0 0.0
      %4001 = vmatprep.subr.mxu0 0.0
      %4002 = vmatpush1.msra.mxu0 0.0
      %4003 = vmatprep.subr.mxu0 0.0
      %4004 = vmatpush1.msra.mxu0 0.0
      %4005 = vmatprep.subr.mxu0 0.0
      %4006 = vmatpush1.msra.mxu0 0.0
      %4007 = vmatprep.mubr.f32.mxu0 0.0
      %4008 = vmatmul.mubr.f32.gmra.mrb[0].mxu0 %v3942
      %v4009 = vpop.f32.mrb[0].mxu0
      %v4010 = vadd.f32 0.0, %v4009
      %v4011 = vpop.f32.mrb[0].mxu0
      %4012 = vdwg.mxu0
      %v4013 = vlaneseq
      %v4014 = vshrl.u32 %v4013, 7
      %v4015 = vsub.s32 0, %v4014
      %v4016 = vrot.slane %v385, %v4015
      %v4018 = vsel %vm844, %v4010, 0
      %4020 = vmatprep.subr.mxu0 0.0
      %4021 = vmatpush1.msra.mxu0 %v381
      %4022 = vmatprep.subr.mxu0 0.0
      %4023 = vmatpush1.msra.mxu0 %v382
      %4024 = vmatprep.subr.mxu0 0.0
      %4025 = vmatpush1.msra.mxu0 %v383
      %4026 = vmatprep.subr.mxu0 0.0
      %4027 = vmatpush1.msra.mxu0 %v384
      %4028 = vmatprep.subr.mxu0 0.0
      %4029 = vmatpush1.msra.mxu0 0.0
      %4030 = vmatprep.subr.mxu0 0.0
      %4031 = vmatpush1.msra.mxu0 0.0
      %4032 = vmatprep.subr.mxu0 0.0
      %4033 = vmatpush1.msra.mxu0 0.0
      %4034 = vmatprep.subr.mxu0 0.0
      %4035 = vmatpush1.msra.mxu0 0.0
      %4036 = vmatprep.subr.mxu0 0.0
      %4037 = vmatpush1.msra.mxu0 0.0
      %4038 = vmatprep.subr.mxu0 0.0
      %4039 = vmatpush1.msra.mxu0 0.0
      %4040 = vmatprep.subr.mxu0 0.0
      %4041 = vmatpush1.msra.mxu0 0.0
      %4042 = vmatprep.subr.mxu0 0.0
      %4043 = vmatpush1.msra.mxu0 0.0
      %4044 = vmatprep.subr.mxu0 0.0
      %4045 = vmatpush1.msra.mxu0 0.0
      %4046 = vmatprep.subr.mxu0 0.0
      %4047 = vmatpush1.msra.mxu0 0.0
      %4048 = vmatprep.subr.mxu0 0.0
      %4049 = vmatpush1.msra.mxu0 0.0
      %4050 = vmatprep.subr.mxu0 0.0
      %4051 = vmatpush1.msra.mxu0 0.0
      %4052 = vmatprep.subr.mxu0 0.0
      %4053 = vmatpush1.msra.mxu0 0.0
      %4054 = vmatprep.subr.mxu0 0.0
      %4055 = vmatpush1.msra.mxu0 0.0
      %4056 = vmatprep.subr.mxu0 0.0
      %4057 = vmatpush1.msra.mxu0 0.0
      %4058 = vmatprep.subr.mxu0 0.0
      %4059 = vmatpush1.msra.mxu0 0.0
      %4060 = vmatprep.subr.mxu0 0.0
      %4061 = vmatpush1.msra.mxu0 0.0
      %4062 = vmatprep.subr.mxu0 0.0
      %4063 = vmatpush1.msra.mxu0 0.0
      %4064 = vmatprep.subr.mxu0 0.0
      %4065 = vmatpush1.msra.mxu0 0.0
      %4066 = vmatprep.subr.mxu0 0.0
      %4067 = vmatpush1.msra.mxu0 0.0
      %4068 = vmatprep.subr.mxu0 0.0
      %4069 = vmatpush1.msra.mxu0 0.0
      %4070 = vmatprep.subr.mxu0 0.0
      %4071 = vmatpush1.msra.mxu0 0.0
      %4072 = vmatprep.subr.mxu0 0.0
      %4073 = vmatpush1.msra.mxu0 0.0
      %4074 = vmatprep.subr.mxu0 0.0
      %4075 = vmatpush1.msra.mxu0 0.0
      %4076 = vmatprep.subr.mxu0 0.0
      %4077 = vmatpush1.msra.mxu0 0.0
      %4078 = vmatprep.subr.mxu0 0.0
      %4079 = vmatpush1.msra.mxu0 0.0
      %4080 = vmatprep.subr.mxu0 0.0
      %4081 = vmatpush1.msra.mxu0 0.0
      %4082 = vmatprep.subr.mxu0 0.0
      %4083 = vmatpush1.msra.mxu0 0.0
      %4084 = vmatprep.mubr.f32.mxu0 0.0
      %4085 = vmatmul.mubr.f32.gmra.mrb[0].mxu0 %v4018
      %v4086 = vpop.f32.mrb[0].mxu0
      %v4087 = vadd.f32 %v4016, %v4086
      %v4088 = vpop.f32.mrb[0].mxu0
      %4089 = vdwg.mxu0
      %v4090 = vmax.f32 %v4087, 0.0
      %v4091 = vlaneseq
      %v4092 = vshrl.u32 %v4091, 7
      %v4093 = vsub.s32 0, %v4092
      %v4094 = vrot.slane %v388, %v4093
      %vm4095 = vcmask 130048
      %v4097 = vsel %vm4095, %v4090, 0
      %4099 = vmatprep.subr.mxu0 0.0
      %4100 = vmatpush1.msra.mxu0 %v386
      %4101 = vmatprep.subr.mxu0 0.0
      %4102 = vmatpush1.msra.mxu0 %v387
      %4103 = vmatprep.subr.mxu0 0.0
      %4104 = vmatpush1.msra.mxu0 0.0
      %4105 = vmatprep.subr.mxu0 0.0
      %4106 = vmatpush1.msra.mxu0 0.0
      %4107 = vmatprep.subr.mxu0 0.0
      %4108 = vmatpush1.msra.mxu0 0.0
      %4109 = vmatprep.subr.mxu0 0.0
      %4110 = vmatpush1.msra.mxu0 0.0
      %4111 = vmatprep.subr.mxu0 0.0
      %4112 = vmatpush1.msra.mxu0 0.0
      %4113 = vmatprep.subr.mxu0 0.0
      %4114 = vmatpush1.msra.mxu0 0.0
      %4115 = vmatprep.subr.mxu0 0.0
      %4116 = vmatpush1.msra.mxu0 0.0
      %4117 = vmatprep.subr.mxu0 0.0
      %4118 = vmatpush1.msra.mxu0 0.0
      %4119 = vmatprep.subr.mxu0 0.0
      %4120 = vmatpush1.msra.mxu0 0.0
      %4121 = vmatprep.subr.mxu0 0.0
      %4122 = vmatpush1.msra.mxu0 0.0
      %4123 = vmatprep.subr.mxu0 0.0
      %4124 = vmatpush1.msra.mxu0 0.0
      %4125 = vmatprep.subr.mxu0 0.0
      %4126 = vmatpush1.msra.mxu0 0.0
      %4127 = vmatprep.subr.mxu0 0.0
      %4128 = vmatpush1.msra.mxu0 0.0
      %4129 = vmatprep.subr.mxu0 0.0
      %4130 = vmatpush1.msra.mxu0 0.0
      %4131 = vmatprep.subr.mxu0 0.0
      %4132 = vmatpush1.msra.mxu0 0.0
      %4133 = vmatprep.subr.mxu0 0.0
      %4134 = vmatpush1.msra.mxu0 0.0
      %4135 = vmatprep.subr.mxu0 0.0
      %4136 = vmatpush1.msra.mxu0 0.0
      %4137 = vmatprep.subr.mxu0 0.0
      %4138 = vmatpush1.msra.mxu0 0.0
      %4139 = vmatprep.subr.mxu0 0.0
      %4140 = vmatpush1.msra.mxu0 0.0
      %4141 = vmatprep.subr.mxu0 0.0
      %4142 = vmatpush1.msra.mxu0 0.0
      %4143 = vmatprep.subr.mxu0 0.0
      %4144 = vmatpush1.msra.mxu0 0.0
      %4145 = vmatprep.subr.mxu0 0.0
      %4146 = vmatpush1.msra.mxu0 0.0
      %4147 = vmatprep.subr.mxu0 0.0
      %4148 = vmatpush1.msra.mxu0 0.0
      %4149 = vmatprep.subr.mxu0 0.0
      %4150 = vmatpush1.msra.mxu0 0.0
      %4151 = vmatprep.subr.mxu0 0.0
      %4152 = vmatpush1.msra.mxu0 0.0
      %4153 = vmatprep.subr.mxu0 0.0
      %4154 = vmatpush1.msra.mxu0 0.0
      %4155 = vmatprep.subr.mxu0 0.0
      %4156 = vmatpush1.msra.mxu0 0.0
      %4157 = vmatprep.subr.mxu0 0.0
      %4158 = vmatpush1.msra.mxu0 0.0
      %4159 = vmatprep.subr.mxu0 0.0
      %4160 = vmatpush1.msra.mxu0 0.0
      %4161 = vmatprep.subr.mxu0 0.0
      %4162 = vmatpush1.msra.mxu0 0.0
      %4163 = vmatprep.mubr.f32.mxu0 0.0
      %4164 = vmatmul.mubr.f32.gmra.mrb[0].mxu0 %v4097
      %v4165 = vpop.f32.mrb[0].mxu0
      %v4166 = vadd.f32 %v4094, %v4165
      %v4167 = vpop.f32.mrb[0].mxu0
      %4168 = vdwg.mxu0
      %4169 = vst [vmem:[%s356] sm:$0xff] %v4166
      %p4170 = scmp.lt.s32.totalorder %s20, 1
      %s4171 = scalar_select %p4170, %s20, 1
      %s4172 = smul.addr %s4171, 16
      %s4173 = smul.addr %s4172, 8
      %s4174 = scalar_lea.vmem %s7, %s4173
      %p4175 = scmp.lt.s32.totalorder %s20, 1
      %s4176 = scalar_select %p4175, %s20, 1
      %s4177 = smul.addr %s4176, 8
      %s4178 = scalar_lea.vmem %s8, %s4177
      // Predicated region
      $region49: #{process_gnn_forward.1} parent=47 // pred_check
        %p4179 = pneg %p200
      $region50: #{process_gnn_forward.1} parent=47 // pred_check_branch
        %4181 = sbr.rel (%p4179) target = $region52
      $region51: #{process_gnn_forward.1} parent=47 // pred_region
        _
      $region52: #{process_gnn_forward.1} parent=47 // pred_fallthru
        _
      // Predicated region
      $region53: #{process_gnn_forward.1} parent=47 // pred_check
        %p4182 = pneg %p226
      $region54: #{process_gnn_forward.1} parent=47 // pred_check_branch
        %4184 = sbr.rel (%p4182) target = $region56
      $region55: #{process_gnn_forward.1} parent=47 // pred_region
        _
      $region56: #{process_gnn_forward.1} parent=47 // pred_fallthru
        _
    $region48: #{process_gnn_forward.1} parent=5 // pred_fallthru
      _
    %p4185 = scmp.le.s32.totalorder 2, %s15
    // Predicated region
    $region57: #{process_gnn_forward.1} parent=5 // pred_check
      %p4186 = pneg %p4185
    $region58: #{process_gnn_forward.1} parent=5 // pred_check_branch
      %4188 = sbr.rel (%p4186) target = $region60
    $region59: #{process_gnn_forward.1} parent=5 // pred_region
      %s4189 = ssub.s32 %s15, 2
      // Predicated region
      $region61: #{process_gnn_forward.1} parent=59 // pred_check
        %p4190 = pneg %p206
      $region62: #{process_gnn_forward.1} parent=59 // pred_check_branch
        %4192 = sbr.rel (%p4190) target = $region64
      $region63: #{process_gnn_forward.1} parent=59 // pred_region
        %p4193 = scmp.lt.s32.totalorder %s21, 1
        %s4194 = scalar_select %p4193, %s21, 1
        %s4195 = smul.addr %s4194, 16
        %s4196 = smul.addr %s4195, 8
        %s4197 = scalar_lea.vmem %s7, %s4196
      $region64: #{process_gnn_forward.1} parent=59 // pred_fallthru
        _
      // Predicated region
      $region65: #{process_gnn_forward.1} parent=59 // pred_check
        %p4198 = pneg %p232
      $region66: #{process_gnn_forward.1} parent=59 // pred_check_branch
        %4200 = sbr.rel (%p4198) target = $region68
      $region67: #{process_gnn_forward.1} parent=59 // pred_region
        %p4201 = scmp.lt.s32.totalorder %s21, 1
        %s4202 = scalar_select %p4201, %s21, 1
        %s4203 = smul.addr %s4202, 8
        %s4204 = scalar_lea.vmem %s8, %s4203
      $region68: #{process_gnn_forward.1} parent=59 // pred_fallthru
        _
    $region60: #{process_gnn_forward.1} parent=5 // pred_fallthru
      _
  $region6: #{process_gnn_forward.1} parent=0 // loop_footer
    %s19 = sadd.s32 1, %s15
  $region7: #{process_gnn_forward.1} parent=0 // loop_footer_branch
    %14 = sbr.rel target = $region3
  $region8: #{process_gnn_forward.1} parent=0 // loop_exit
    _

</llo_original>
